<compile_context>
chip_gen: v5e
topology: v5e:2x2
jax: 0.10.0
libtpu: 0.0.40
codegen_flags: <defaults>
</compile_context>

<pallas_src>
import jax
import jax.numpy as jnp
from jax import lax
from jax.experimental import pallas as pl
from jax.experimental.pallas import tpu as pltpu


def _round_up(x, m):
    return ((x + m - 1) // m) * m


def _canonical_geometry(H, W, pad=1):
    Hp, Wp = H + 2 * pad, W + 2 * pad
    BODY = Hp * Wp                      # flattened padded plane
    LEAD = pad * (Wp + 1)               # lead zeros so all tap lane-offsets are >= 0
    S_lane = _round_up(BODY + 2 * LEAD, 128)
    return Hp, Wp, BODY, LEAD, S_lane


def _choose_d_tile(D, C_max, S_lane, itemsize, budget_bytes=8 * 1024 * 1024):
    """Largest depth tile (<= 8) whose double-buffered in/out blocks fit the VMEM budget."""
    dt = 1
    for cand in range(1, min(D, 8) + 1):
        per_step = 2 * 2 * cand * C_max * S_lane * itemsize  # (in + out) x double buffer
        if per_step <= budget_bytes:
            dt = cand
    return dt


def _make_conv_kernel(K, D_tile, D_real, Wp, BODY, LEAD, S_lane, CHUNK):
    """Fused Conv3d(k=K, stride=1, pad=K//2) + folded BN + ReLU, canonical layout in/out."""
    TAIL = S_lane - LEAD - BODY

    def kernel(main_ref, lo_ref, hi_ref, w_ref, scale_ref, shift_ref, mask_ref, out_ref):
        d = pl.program_id(1)
        is_first = d == 0
        is_last = d == pl.num_programs(1) - 1

        w_flat = w_ref[...]                  # (Cout, K^3*Cin), activation dtype
        scale = scale_ref[...]               # (Cout, 1) f32: gamma / sqrt(var + eps)
        shift = shift_ref[...]               # (Cout, 1) f32: (bias - mean) * scale + beta

        def tap(i, kd, a, b):
            # Depth row (i + kd - 1) within [lo | main[0..D_tile) | hi]; the clamped halo
            # rows stand in for the conceptual zero depth-pad and are zeroed when needed.
            r = i + kd - 1
            if r < 0:
                v = lo_ref[0, 0, :, a:b]
                return jnp.where(is_first, jnp.zeros_like(v), v)
            if r >= D_tile:
                v = hi_ref[0, 0, :, a:b]
                return jnp.where(is_last, jnp.zeros_like(v), v)
            return main_ref[0, r, :, a:b]

        for i in range(D_tile):
            # Rows at real depth >= D_real are the next layer's depth padding -> force 0.
            valid = ((d * D_tile + i) < D_real).astype(jnp.float32)
            pieces = []
            for c0 in range(0, BODY, CHUNK):
                clen = min(CHUNK, BODY - c0)
                # im2col patch: (kd, kh, kw) outer, cin inner -> matches w_flat layout.
                cols = [tap(i, kd, kh * Wp + kw + c0, kh * Wp + kw + c0 + clen)
                        for kd in range(K) for kh in range(K) for kw in range(K)]
                patch = jnp.concatenate(cols, axis=0)              # (K^3*Cin, clen)
                z = jnp.dot(w_flat, patch, preferred_element_type=jnp.float32)
                y = jnp.maximum(z * scale + shift, 0.0)            # folded bias+BN, ReLU
                pieces.append(y * (mask_ref[:, c0:c0 + clen] * valid))
            y_row = pieces[0] if len(pieces) == 1 else jnp.concatenate(pieces, axis=1)
            # Re-emit the canonical padded layout (lead/tail zeros) -> lane-dense store.
            out_ref[0, i] = jnp.pad(y_row, ((0, 0), (LEAD, TAIL))).astype(out_ref.dtype)

    return kernel


def _conv_bn_relu_layer(x_lay, params, *, D_real, H, W, d_tile, eps=1e-5, chunk=512):
    """One Conv3d(k=3,s=1,p=1) + BatchNorm3d(eval) + ReLU on canonical-layout activations.

    x_lay: (B, D_pd, Cin, S_lane) canonical layout. Returns same layout with Cout channels.
    """
    w, b, gamma, beta, mean, var = params
    B, D_pd, Cin, S_lane = x_lay.shape
    Cout, Cin_w, K = w.shape[0], w.shape[1], w.shape[2]
    assert Cin_w == Cin and K == 3 and w.shape[3] == K and w.shape[4] == K
    assert D_pd % d_tile == 0
    pad = K // 2
    Hp, Wp, BODY, LEAD, S_lane_chk = _canonical_geometry(H, W, pad)
    assert S_lane_chk == S_lane
    nD = D_pd // d_tile
    K3C = K * K * K * Cin

    # Per-tap weights flattened to one (Cout, K^3*Cin) matrix, kept in activation dtype.
    w_flat = jnp.transpose(w, (0, 2, 3, 4, 1)).reshape(Cout, K3C).astype(x_lay.dtype)

    # Fold conv bias + BatchNorm (inference) into per-channel scale & shift (f32).
    inv_std = lax.rsqrt(var.astype(jnp.float32) + eps)
    scale_v = gamma.astype(jnp.float32) * inv_std
    shift_v = (b.astype(jnp.float32) - mean.astype(jnp.float32)) * scale_v + beta.astype(jnp.float32)
    scale = scale_v.reshape(Cout, 1)
    shift = shift_v.reshape(Cout, 1)

    # Interior mask over the padded plane (1 at valid (h, w), 0 at spatial padding).
    q = jnp.arange(BODY)
    hh, ww = q // Wp, q % Wp
    mask = (((hh >= pad) & (hh < H + pad) & (ww >= pad) & (ww < W + pad))
            .astype(jnp.float32).reshape(1, BODY))

    kernel = _make_conv_kernel(K, d_tile, D_real, Wp, BODY, LEAD, S_lane, chunk)

    in_specs = [
        # main block: D_tile consecutive depth rows
        pl.BlockSpec((1, d_tile, Cin, S_lane), lambda bi, di: (bi, di, 0, 0)),
        # lo / hi single-row depth halos (clamped; kernel zeroes them at the boundaries)
        pl.BlockSpec((1, 1, Cin, S_lane),
                     lambda bi, di: (bi, jnp.maximum(di * d_tile - 1, 0), 0, 0)),
        pl.BlockSpec((1, 1, Cin, S_lane),
                     lambda bi, di: (bi, jnp.minimum((di + 1) * d_tile, D_pd - 1), 0, 0)),
        # VMEM-resident across all steps (constant index maps)
        pl.BlockSpec((Cout, K3C), lambda bi, di: (0, 0)),
        pl.BlockSpec((Cout, 1), lambda bi, di: (0, 0)),
        pl.BlockSpec((Cout, 1), lambda bi, di: (0, 0)),
        pl.BlockSpec((1, BODY), lambda bi, di: (0, 0)),
    ]

    return pl.pallas_call(
        kernel,
        out_shape=jax.ShapeDtypeStruct((B, D_pd, Cout, S_lane), x_lay.dtype),
        grid=(B, nD),
        in_specs=in_specs,
        out_specs=pl.BlockSpec((1, d_tile, Cout, S_lane), lambda bi, di: (bi, di, 0, 0)),
        compiler_params=pltpu.CompilerParams(
            dimension_semantics=("parallel", "parallel")),
    )(x_lay, x_lay, x_lay, w_flat, scale, shift, mask)


def _to_canonical(x, D_pd, Hp, Wp, LEAD, S_lane):
    """NCDHW -> (B, D_pd, C, S_lane) canonical padded-plane layout (zeros elsewhere)."""
    B, C, D, H, W = x.shape
    pad = (Hp - H) // 2
    x_cl = jnp.transpose(x, (0, 2, 1, 3, 4))                                   # (B,D,C,H,W)
    x_pl = jnp.pad(x_cl, ((0, 0), (0, D_pd - D), (0, 0), (pad, pad), (pad, pad)))
    x_fl = x_pl.reshape(B, D_pd, C, Hp * Wp)
    return jnp.pad(x_fl, ((0, 0), (0, 0), (0, 0), (LEAD, S_lane - LEAD - Hp * Wp)))


def _from_canonical(y, D, H, W, Hp, Wp, LEAD):
    """(B, D_pd, C, S_lane) canonical -> NCDHW, cropping depth and plane padding."""
    B, D_pd, C, _ = y.shape
    pad = (Hp - H) // 2
    y = y[:, :D, :, LEAD:LEAD + Hp * Wp].reshape(B, D, C, Hp, Wp)
    y = y[:, :, :, pad:pad + H, pad:pad + W]
    return jnp.transpose(y, (0, 2, 1, 3, 4))


def double_conv_forward(x, params1, params2, *, eps=1e-5, d_tile=None, chunk=512):
    """DoubleConv forward: Conv3d->BN->ReLU twice. x: (B, Cin, D, H, W) NCDHW."""
    B, Cin, D, H, W = x.shape
    Cout1 = params1[0].shape[0]
    Cout2 = params2[0].shape[0]
    Hp, Wp, BODY, LEAD, S_lane = _canonical_geometry(H, W)
    if d_tile is None:
        d_tile = _choose_d_tile(D, max(Cin, Cout1, Cout2), S_lane, x.dtype.itemsize)
    D_pd = _round_up(D, d_tile)

    x_lay = _to_canonical(x, D_pd, Hp, Wp, LEAD, S_lane)
    y1 = _conv_bn_relu_layer(x_lay, params1, D_real=D, H=H, W=W,
                             d_tile=d_tile, eps=eps, chunk=chunk)
    y2 = _conv_bn_relu_layer(y1, params2, D_real=D, H=H, W=W,
                             d_tile=d_tile, eps=eps, chunk=chunk)
    return _from_canonical(y2, D, H, W, Hp, Wp, LEAD)


def double_conv_reference(x, params1, params2, *, eps=1e-5):
    """Pure-JAX reference: Conv3d -> BN(eval) -> ReLU, twice (matches PyTorch forward)."""

    def layer(x, w, b, gamma, beta, mean, var):
        pad = w.shape[2] // 2
        dn = lax.conv_dimension_numbers(x.shape, w.shape, ("NCDHW", "OIDHW", "NCDHW"))
        y = lax.conv_general_dilated(
            x.astype(jnp.float32), w.astype(jnp.float32),
            window_strides=(1, 1, 1), padding=[(pad, pad)] * 3,
            dimension_numbers=dn, precision=lax.Precision.HIGHEST)
        y = y + b.reshape(1, -1, 1, 1, 1)
        y = (y - mean.reshape(1, -1, 1, 1, 1)) * lax.rsqrt(var.reshape(1, -1, 1, 1, 1) + eps)
        y = y * gamma.reshape(1, -1, 1, 1, 1) + beta.reshape(1, -1, 1, 1, 1)
        return jnp.maximum(y, 0.0)

    return layer(layer(x, *params1), *params2)


if __name__ == "__main__":
    key = jax.random.PRNGKey(0)
    K = 3

    def make_layer(k, cin, cout):
        k1, k2, k3, k4, k5, k6 = jax.random.split(k, 6)
        lim = 1.0 / jnp.sqrt(jnp.float32(cin * K ** 3))     # nn.Conv3d default init range
        w = jax.random.uniform(k1, (cout, cin, K, K, K), minval=-lim, maxval=lim, dtype=jnp.float32)
        b = jax.random.uniform(k2, (cout,), minval=-lim, maxval=lim, dtype=jnp.float32)
        gamma = jax.random.uniform(k3, (cout,), minval=0.5, maxval=1.5, dtype=jnp.float32)
        beta = 0.1 * jax.random.normal(k4, (cout,), dtype=jnp.float32)
        mean = 0.1 * jax.random.normal(k5, (cout,), dtype=jnp.float32)
        var = jax.random.uniform(k6, (cout,), minval=0.5, maxval=1.5, dtype=jnp.float32)
        return (w, b, gamma, beta, mean, var)

    keys = jax.random.split(key, 6)

    # Case 1: DoubleConv(in_ch=4, out_ch=8) on a (2, 4, 8, 8, 8) volume.
    x1 = jax.random.normal(keys[0], (2, 4, 8, 8, 8), dtype=jnp.float32)
    p1a = make_layer(keys[1], 4, 8)
    p1b = make_layer(keys[2], 8, 8)
    out1 = jax.block_until_ready(double_conv_forward(x1, p1a, p1b))
    ref1 = double_conv_reference(x1, p1a, p1b)
    assert out1.shape == (2, 8, 8, 8, 8)
    assert jnp.allclose(out1, ref1, atol=1e-3, rtol=1e-3), "case 1 mismatch vs reference"

    # Case 2: odd sizes exercising D % d_tile != 0 (depth padding + validity mask),
    # multi-block depth grid, clamped halos and the inner lane-chunk loop.
    x2 = jax.random.normal(keys[3], (1, 3, 5, 19, 23), dtype=jnp.float32)
    p2a = make_layer(keys[4], 3, 16)
    p2b = make_layer(keys[5], 16, 16)
    out2 = jax.block_until_ready(double_conv_forward(x2, p2a, p2b, d_tile=2, chunk=256))
    ref2 = double_conv_reference(x2, p2a, p2b)
    assert out2.shape == (1, 16, 5, 19, 23)
    assert jnp.allclose(out2, ref2, atol=1e-3, rtol=1e-3), "case 2 mismatch vs reference"

    print("KERNEL_OK")
</pallas_src>

<mosaic_0001>
module attributes {stable_mosaic.version = 11 : i64} {
  func.func @kernel(%arg0: i32, %arg1: i32, %arg2: memref<1x8x4x128xf32, #tpu.memory_space<vmem>>, %arg3: memref<1x1x4x128xf32, #tpu.memory_space<vmem>>, %arg4: memref<1x1x4x128xf32, #tpu.memory_space<vmem>>, %arg5: memref<8x108xf32, #tpu.memory_space<vmem>>, %arg6: memref<8x1xf32, #tpu.memory_space<vmem>>, %arg7: memref<8x1xf32, #tpu.memory_space<vmem>>, %arg8: memref<1x100xf32, #tpu.memory_space<vmem>>, %arg9: memref<1x8x8x128xf32, #tpu.memory_space<vmem>>) attributes {dimension_semantics = [#tpu.dimension_semantics<parallel>, #tpu.dimension_semantics<parallel>], iteration_bounds = array<i64: 2, 1>, scalar_prefetch = 0 : i64, scratch_operands = 0 : i64, tpu.core_type = #tpu.core_type<tc>, window_params = [{transform_indices = @transform_0, window_bounds = array<i64: 1, 8, 4, 128>}, {transform_indices = @transform_1, window_bounds = array<i64: 1, 1, 4, 128>}, {transform_indices = @transform_2, window_bounds = array<i64: 1, 1, 4, 128>}, {pipeline_mode = #tpu.pipeline_mode<synchronous>, transform_indices = @transform_3, window_bounds = array<i64: 8, 108>}, {pipeline_mode = #tpu.pipeline_mode<synchronous>, transform_indices = @transform_4, window_bounds = array<i64: 8, 1>}, {pipeline_mode = #tpu.pipeline_mode<synchronous>, transform_indices = @transform_5, window_bounds = array<i64: 8, 1>}, {pipeline_mode = #tpu.pipeline_mode<synchronous>, transform_indices = @transform_6, window_bounds = array<i64: 1, 100>}, {transform_indices = @transform_7, window_bounds = array<i64: 1, 8, 8, 128>}]} {
    %c0_i32 = arith.constant 0 : i32
    %0 = arith.cmpi eq, %arg1, %c0_i32 : i32
    %c0_i32_0 = arith.constant 0 : i32
    %1 = arith.cmpi eq, %arg1, %c0_i32_0 : i32
    %c0 = arith.constant 0 : index
    %c0_1 = arith.constant 0 : index
    %2 = vector.load %arg5[%c0, %c0_1] : memref<8x108xf32, #tpu.memory_space<vmem>>, vector<8x108xf32>
    %c0_2 = arith.constant 0 : index
    %c0_3 = arith.constant 0 : index
    %3 = vector.load %arg6[%c0_2, %c0_3] : memref<8x1xf32, #tpu.memory_space<vmem>>, vector<8x1xf32>
    %c0_4 = arith.constant 0 : index
    %c0_5 = arith.constant 0 : index
    %4 = vector.load %arg7[%c0_4, %c0_5] : memref<8x1xf32, #tpu.memory_space<vmem>>, vector<8x1xf32>
    %c8_i32 = arith.constant 8 : i32
    %5 = arith.muli %arg1, %c8_i32 : i32
    %c0_i32_6 = arith.constant 0 : i32
    %6 = arith.addi %5, %c0_i32_6 : i32
    %c8_i32_7 = arith.constant 8 : i32
    %7 = arith.cmpi slt, %6, %c8_i32_7 : i32
    %8 = arith.extui %7 : i1 to i32
    %9 = arith.sitofp %8 : i32 to f32
    %c0_8 = arith.constant 0 : index
    %c0_9 = arith.constant 0 : index
    %c0_10 = arith.constant 0 : index
    %c0_11 = arith.constant 0 : index
    %10 = vector.load %arg3[%c0_8, %c0_9, %c0_10, %c0_11] : memref<1x1x4x128xf32, #tpu.memory_space<vmem>>, vector<1x1x4x100xf32>
    %11 = vector.shape_cast %10 : vector<1x1x4x100xf32> to vector<4x100xf32>
    %cst = arith.constant 0.000000e+00 : f32
    %12 = vector.broadcast %cst : f32 to vector<4x100xf32>
    %13 = arith.select %0, %12, %11 : vector<4x100xf32>
    %c0_12 = arith.constant 0 : index
    %c0_13 = arith.constant 0 : index
    %c0_14 = arith.constant 0 : index
    %c1 = arith.constant 1 : index
    %14 = vector.load %arg3[%c0_12, %c0_13, %c0_14, %c1] : memref<1x1x4x128xf32, #tpu.memory_space<vmem>>, vector<1x1x4x100xf32>
    %15 = vector.shape_cast %14 : vector<1x1x4x100xf32> to vector<4x100xf32>
    %cst_15 = arith.constant 0.000000e+00 : f32
    %16 = vector.broadcast %cst_15 : f32 to vector<4x100xf32>
    %17 = arith.select %0, %16, %15 : vector<4x100xf32>
    %c0_16 = arith.constant 0 : index
    %c0_17 = arith.constant 0 : index
    %c0_18 = arith.constant 0 : index
    %c2 = arith.constant 2 : index
    %18 = vector.load %arg3[%c0_16, %c0_17, %c0_18, %c2] : memref<1x1x4x128xf32, #tpu.memory_space<vmem>>, vector<1x1x4x100xf32>
    %19 = vector.shape_cast %18 : vector<1x1x4x100xf32> to vector<4x100xf32>
    %cst_19 = arith.constant 0.000000e+00 : f32
    %20 = vector.broadcast %cst_19 : f32 to vector<4x100xf32>
    %21 = arith.select %0, %20, %19 : vector<4x100xf32>
    %c0_20 = arith.constant 0 : index
    %c0_21 = arith.constant 0 : index
    %c0_22 = arith.constant 0 : index
    %c10 = arith.constant 10 : index
    %22 = vector.load %arg3[%c0_20, %c0_21, %c0_22, %c10] : memref<1x1x4x128xf32, #tpu.memory_space<vmem>>, vector<1x1x4x100xf32>
    %23 = vector.shape_cast %22 : vector<1x1x4x100xf32> to vector<4x100xf32>
    %cst_23 = arith.constant 0.000000e+00 : f32
    %24 = vector.broadcast %cst_23 : f32 to vector<4x100xf32>
    %25 = arith.select %0, %24, %23 : vector<4x100xf32>
    %c0_24 = arith.constant 0 : index
    %c0_25 = arith.constant 0 : index
    %c0_26 = arith.constant 0 : index
    %c11 = arith.constant 11 : index
    %26 = vector.load %arg3[%c0_24, %c0_25, %c0_26, %c11] : memref<1x1x4x128xf32, #tpu.memory_space<vmem>>, vector<1x1x4x100xf32>
    %27 = vector.shape_cast %26 : vector<1x1x4x100xf32> to vector<4x100xf32>
    %cst_27 = arith.constant 0.000000e+00 : f32
    %28 = vector.broadcast %cst_27 : f32 to vector<4x100xf32>
    %29 = arith.select %0, %28, %27 : vector<4x100xf32>
    %c0_28 = arith.constant 0 : index
    %c0_29 = arith.constant 0 : index
    %c0_30 = arith.constant 0 : index
    %c12 = arith.constant 12 : index
    %30 = vector.load %arg3[%c0_28, %c0_29, %c0_30, %c12] : memref<1x1x4x128xf32, #tpu.memory_space<vmem>>, vector<1x1x4x100xf32>
    %31 = vector.shape_cast %30 : vector<1x1x4x100xf32> to vector<4x100xf32>
    %cst_31 = arith.constant 0.000000e+00 : f32
    %32 = vector.broadcast %cst_31 : f32 to vector<4x100xf32>
    %33 = arith.select %0, %32, %31 : vector<4x100xf32>
    %c0_32 = arith.constant 0 : index
    %c0_33 = arith.constant 0 : index
    %c0_34 = arith.constant 0 : index
    %c20 = arith.constant 20 : index
    %34 = vector.load %arg3[%c0_32, %c0_33, %c0_34, %c20] : memref<1x1x4x128xf32, #tpu.memory_space<vmem>>, vector<1x1x4x100xf32>
    %35 = vector.shape_cast %34 : vector<1x1x4x100xf32> to vector<4x100xf32>
    %cst_35 = arith.constant 0.000000e+00 : f32
    %36 = vector.broadcast %cst_35 : f32 to vector<4x100xf32>
    %37 = arith.select %0, %36, %35 : vector<4x100xf32>
    %c0_36 = arith.constant 0 : index
    %c0_37 = arith.constant 0 : index
    %c0_38 = arith.constant 0 : index
    %c21 = arith.constant 21 : index
    %38 = vector.load %arg3[%c0_36, %c0_37, %c0_38, %c21] : memref<1x1x4x128xf32, #tpu.memory_space<vmem>>, vector<1x1x4x100xf32>
    %39 = vector.shape_cast %38 : vector<1x1x4x100xf32> to vector<4x100xf32>
    %cst_39 = arith.constant 0.000000e+00 : f32
    %40 = vector.broadcast %cst_39 : f32 to vector<4x100xf32>
    %41 = arith.select %0, %40, %39 : vector<4x100xf32>
    %c0_40 = arith.constant 0 : index
    %c0_41 = arith.constant 0 : index
    %c0_42 = arith.constant 0 : index
    %c22 = arith.constant 22 : index
    %42 = vector.load %arg3[%c0_40, %c0_41, %c0_42, %c22] : memref<1x1x4x128xf32, #tpu.memory_space<vmem>>, vector<1x1x4x100xf32>
    %43 = vector.shape_cast %42 : vector<1x1x4x100xf32> to vector<4x100xf32>
    %cst_43 = arith.constant 0.000000e+00 : f32
    %44 = vector.broadcast %cst_43 : f32 to vector<4x100xf32>
    %45 = arith.select %0, %44, %43 : vector<4x100xf32>
    %c0_44 = arith.constant 0 : index
    %c0_45 = arith.constant 0 : index
    %c0_46 = arith.constant 0 : index
    %c0_47 = arith.constant 0 : index
    %46 = vector.load %arg2[%c0_44, %c0_45, %c0_46, %c0_47] : memref<1x8x4x128xf32, #tpu.memory_space<vmem>>, vector<1x1x4x100xf32>
    %47 = vector.shape_cast %46 : vector<1x1x4x100xf32> to vector<4x100xf32>
    %c0_48 = arith.constant 0 : index
    %c0_49 = arith.constant 0 : index
    %c0_50 = arith.constant 0 : index
    %c1_51 = arith.constant 1 : index
    %48 = vector.load %arg2[%c0_48, %c0_49, %c0_50, %c1_51] : memref<1x8x4x128xf32, #tpu.memory_space<vmem>>, vector<1x1x4x100xf32>
    %49 = vector.shape_cast %48 : vector<1x1x4x100xf32> to vector<4x100xf32>
    %c0_52 = arith.constant 0 : index
    %c0_53 = arith.constant 0 : index
    %c0_54 = arith.constant 0 : index
    %c2_55 = arith.constant 2 : index
    %50 = vector.load %arg2[%c0_52, %c0_53, %c0_54, %c2_55] : memref<1x8x4x128xf32, #tpu.memory_space<vmem>>, vector<1x1x4x100xf32>
    %51 = vector.shape_cast %50 : vector<1x1x4x100xf32> to vector<4x100xf32>
    %c0_56 = arith.constant 0 : index
    %c0_57 = arith.constant 0 : index
    %c0_58 = arith.constant 0 : index
    %c10_59 = arith.constant 10 : index
    %52 = vector.load %arg2[%c0_56, %c0_57, %c0_58, %c10_59] : memref<1x8x4x128xf32, #tpu.memory_space<vmem>>, vector<1x1x4x100xf32>
    %53 = vector.shape_cast %52 : vector<1x1x4x100xf32> to vector<4x100xf32>
    %c0_60 = arith.constant 0 : index
    %c0_61 = arith.constant 0 : index
    %c0_62 = arith.constant 0 : index
    %c11_63 = arith.constant 11 : index
    %54 = vector.load %arg2[%c0_60, %c0_61, %c0_62, %c11_63] : memref<1x8x4x128xf32, #tpu.memory_space<vmem>>, vector<1x1x4x100xf32>
    %55 = vector.shape_cast %54 : vector<1x1x4x100xf32> to vector<4x100xf32>
    %c0_64 = arith.constant 0 : index
    %c0_65 = arith.constant 0 : index
    %c0_66 = arith.constant 0 : index
    %c12_67 = arith.constant 12 : index
    %56 = vector.load %arg2[%c0_64, %c0_65, %c0_66, %c12_67] : memref<1x8x4x128xf32, #tpu.memory_space<vmem>>, vector<1x1x4x100xf32>
    %57 = vector.shape_cast %56 : vector<1x1x4x100xf32> to vector<4x100xf32>
    %c0_68 = arith.constant 0 : index
    %c0_69 = arith.constant 0 : index
    %c0_70 = arith.constant 0 : index
    %c20_71 = arith.constant 20 : index
    %58 = vector.load %arg2[%c0_68, %c0_69, %c0_70, %c20_71] : memref<1x8x4x128xf32, #tpu.memory_space<vmem>>, vector<1x1x4x100xf32>
    %59 = vector.shape_cast %58 : vector<1x1x4x100xf32> to vector<4x100xf32>
    %c0_72 = arith.constant 0 : index
    %c0_73 = arith.constant 0 : index
    %c0_74 = arith.constant 0 : index
    %c21_75 = arith.constant 21 : index
    %60 = vector.load %arg2[%c0_72, %c0_73, %c0_74, %c21_75] : memref<1x8x4x128xf32, #tpu.memory_space<vmem>>, vector<1x1x4x100xf32>
    %61 = vector.shape_cast %60 : vector<1x1x4x100xf32> to vector<4x100xf32>
    %c0_76 = arith.constant 0 : index
    %c0_77 = arith.constant 0 : index
    %c0_78 = arith.constant 0 : index
    %c22_79 = arith.constant 22 : index
    %62 = vector.load %arg2[%c0_76, %c0_77, %c0_78, %c22_79] : memref<1x8x4x128xf32, #tpu.memory_space<vmem>>, vector<1x1x4x100xf32>
    %63 = vector.shape_cast %62 : vector<1x1x4x100xf32> to vector<4x100xf32>
    %c0_80 = arith.constant 0 : index
    %c1_81 = arith.constant 1 : index
    %c0_82 = arith.constant 0 : index
    %c0_83 = arith.constant 0 : index
    %64 = vector.load %arg2[%c0_80, %c1_81, %c0_82, %c0_83] : memref<1x8x4x128xf32, #tpu.memory_space<vmem>>, vector<1x1x4x100xf32>
    %65 = vector.shape_cast %64 : vector<1x1x4x100xf32> to vector<4x100xf32>
    %c0_84 = arith.constant 0 : index
    %c1_85 = arith.constant 1 : index
    %c0_86 = arith.constant 0 : index
    %c1_87 = arith.constant 1 : index
    %66 = vector.load %arg2[%c0_84, %c1_85, %c0_86, %c1_87] : memref<1x8x4x128xf32, #tpu.memory_space<vmem>>, vector<1x1x4x100xf32>
    %67 = vector.shape_cast %66 : vector<1x1x4x100xf32> to vector<4x100xf32>
    %c0_88 = arith.constant 0 : index
    %c1_89 = arith.constant 1 : index
    %c0_90 = arith.constant 0 : index
    %c2_91 = arith.constant 2 : index
    %68 = vector.load %arg2[%c0_88, %c1_89, %c0_90, %c2_91] : memref<1x8x4x128xf32, #tpu.memory_space<vmem>>, vector<1x1x4x100xf32>
    %69 = vector.shape_cast %68 : vector<1x1x4x100xf32> to vector<4x100xf32>
    %c0_92 = arith.constant 0 : index
    %c1_93 = arith.constant 1 : index
    %c0_94 = arith.constant 0 : index
    %c10_95 = arith.constant 10 : index
    %70 = vector.load %arg2[%c0_92, %c1_93, %c0_94, %c10_95] : memref<1x8x4x128xf32, #tpu.memory_space<vmem>>, vector<1x1x4x100xf32>
    %71 = vector.shape_cast %70 : vector<1x1x4x100xf32> to vector<4x100xf32>
    %c0_96 = arith.constant 0 : index
    %c1_97 = arith.constant 1 : index
    %c0_98 = arith.constant 0 : index
    %c11_99 = arith.constant 11 : index
    %72 = vector.load %arg2[%c0_96, %c1_97, %c0_98, %c11_99] : memref<1x8x4x128xf32, #tpu.memory_space<vmem>>, vector<1x1x4x100xf32>
    %73 = vector.shape_cast %72 : vector<1x1x4x100xf32> to vector<4x100xf32>
    %c0_100 = arith.constant 0 : index
    %c1_101 = arith.constant 1 : index
    %c0_102 = arith.constant 0 : index
    %c12_103 = arith.constant 12 : index
    %74 = vector.load %arg2[%c0_100, %c1_101, %c0_102, %c12_103] : memref<1x8x4x128xf32, #tpu.memory_space<vmem>>, vector<1x1x4x100xf32>
    %75 = vector.shape_cast %74 : vector<1x1x4x100xf32> to vector<4x100xf32>
    %c0_104 = arith.constant 0 : index
    %c1_105 = arith.constant 1 : index
    %c0_106 = arith.constant 0 : index
    %c20_107 = arith.constant 20 : index
    %76 = vector.load %arg2[%c0_104, %c1_105, %c0_106, %c20_107] : memref<1x8x4x128xf32, #tpu.memory_space<vmem>>, vector<1x1x4x100xf32>
    %77 = vector.shape_cast %76 : vector<1x1x4x100xf32> to vector<4x100xf32>
    %c0_108 = arith.constant 0 : index
    %c1_109 = arith.constant 1 : index
    %c0_110 = arith.constant 0 : index
    %c21_111 = arith.constant 21 : index
    %78 = vector.load %arg2[%c0_108, %c1_109, %c0_110, %c21_111] : memref<1x8x4x128xf32, #tpu.memory_space<vmem>>, vector<1x1x4x100xf32>
    %79 = vector.shape_cast %78 : vector<1x1x4x100xf32> to vector<4x100xf32>
    %c0_112 = arith.constant 0 : index
    %c1_113 = arith.constant 1 : index
    %c0_114 = arith.constant 0 : index
    %c22_115 = arith.constant 22 : index
    %80 = vector.load %arg2[%c0_112, %c1_113, %c0_114, %c22_115] : memref<1x8x4x128xf32, #tpu.memory_space<vmem>>, vector<1x1x4x100xf32>
    %81 = vector.shape_cast %80 : vector<1x1x4x100xf32> to vector<4x100xf32>
    %82 = tpu.concatenate %13, %17, %21, %25, %29, %33, %37, %41, %45, %47, %49, %51, %53, %55, %57, %59 in 0 : vector<4x100xf32>, vector<4x100xf32>, vector<4x100xf32>, vector<4x100xf32>, vector<4x100xf32>, vector<4x100xf32>, vector<4x100xf32>, vector<4x100xf32>, vector<4x100xf32>, vector<4x100xf32>, vector<4x100xf32>, vector<4x100xf32>, vector<4x100xf32>, vector<4x100xf32>, vector<4x100xf32>, vector<4x100xf32> -> vector<64x100xf32>
    %83 = tpu.concatenate %61, %63, %65, %67, %69, %71, %73, %75, %77, %79, %81 in 0 : vector<4x100xf32>, vector<4x100xf32>, vector<4x100xf32>, vector<4x100xf32>, vector<4x100xf32>, vector<4x100xf32>, vector<4x100xf32>, vector<4x100xf32>, vector<4x100xf32>, vector<4x100xf32>, vector<4x100xf32> -> vector<44x100xf32>
    %84 = tpu.concatenate %82, %83 in 0 : vector<64x100xf32>, vector<44x100xf32> -> vector<108x100xf32>
    %cst_116 = arith.constant dense<0.000000e+00> : vector<8x100xf32>
    %85 = tpu.matmul %2, %84, %cst_116 {dimension_numbers = #tpu.dot_dimension_numbers<[1], [0], [0], [1], [0, 0, 1, 1], [], []>} : vector<8x108xf32>, vector<108x100xf32>, vector<8x100xf32> -> vector<8x100xf32>
    %86 = vector.broadcast %3 : vector<8x1xf32> to vector<8x100xf32>
    %87 = arith.mulf %85, %86 : vector<8x100xf32>
    %88 = vector.broadcast %4 : vector<8x1xf32> to vector<8x100xf32>
    %89 = arith.addf %87, %88 : vector<8x100xf32>
    %cst_117 = arith.constant 0.000000e+00 : f32
    %90 = vector.broadcast %cst_117 : f32 to vector<8x100xf32>
    %91 = arith.maximumf %89, %90 : vector<8x100xf32>
    %c0_118 = arith.constant 0 : index
    %c0_119 = arith.constant 0 : index
    %92 = vector.load %arg8[%c0_118, %c0_119] : memref<1x100xf32, #tpu.memory_space<vmem>>, vector<1x100xf32>
    %93 = vector.broadcast %9 : f32 to vector<1x100xf32>
    %94 = arith.mulf %92, %93 : vector<1x100xf32>
    %95 = vector.broadcast %94 : vector<1x100xf32> to vector<8x100xf32>
    %96 = arith.mulf %91, %95 : vector<8x100xf32>
    %c0_i32_120 = arith.constant 0 : i32
    %97 = arith.sitofp %c0_i32_120 : i32 to f32
    %98 = vector.broadcast %97 : f32 to vector<8x11xf32>
    %99 = tpu.concatenate %98, %96 in 1 : vector<8x11xf32>, vector<8x100xf32> -> vector<8x111xf32>
    %100 = vector.broadcast %97 : f32 to vector<8x17xf32>
    %101 = tpu.concatenate %99, %100 in 1 : vector<8x111xf32>, vector<8x17xf32> -> vector<8x128xf32>
    %c0_121 = arith.constant 0 : index
    %c0_122 = arith.constant 0 : index
    %c0_123 = arith.constant 0 : index
    %c0_124 = arith.constant 0 : index
    %102 = vector.load %arg9[%c0_121, %c0_122, %c0_123, %c0_124] : memref<1x8x8x128xf32, #tpu.memory_space<vmem>>, vector<1x1x8x128xf32>
    %103 = vector.shape_cast %102 : vector<1x1x8x128xf32> to vector<8x128xf32>
    %104 = vector.shape_cast %101 : vector<8x128xf32> to vector<1x1x8x128xf32>
    tpu.vector_store %arg9[%c0_121, %c0_122, %c0_123, %c0_124], %104 {strides = array<i32>} : memref<1x8x8x128xf32, #tpu.memory_space<vmem>>, vector<1x1x8x128xf32>,
    %c8_i32_125 = arith.constant 8 : i32
    %105 = arith.muli %arg1, %c8_i32_125 : i32
    %c1_i32 = arith.constant 1 : i32
    %106 = arith.addi %105, %c1_i32 : i32
    %c8_i32_126 = arith.constant 8 : i32
    %107 = arith.cmpi slt, %106, %c8_i32_126 : i32
    %108 = arith.extui %107 : i1 to i32
    %109 = arith.sitofp %108 : i32 to f32
    %c0_127 = arith.constant 0 : index
    %c0_128 = arith.constant 0 : index
    %c0_129 = arith.constant 0 : index
    %c0_130 = arith.constant 0 : index
    %110 = vector.load %arg2[%c0_127, %c0_128, %c0_129, %c0_130] : memref<1x8x4x128xf32, #tpu.memory_space<vmem>>, vector<1x1x4x100xf32>
    %111 = vector.shape_cast %110 : vector<1x1x4x100xf32> to vector<4x100xf32>
    %c0_131 = arith.constant 0 : index
    %c0_132 = arith.constant 0 : index
    %c0_133 = arith.constant 0 : index
    %c1_134 = arith.constant 1 : index
    %112 = vector.load %arg2[%c0_131, %c0_132, %c0_133, %c1_134] : memref<1x8x4x128xf32, #tpu.memory_space<vmem>>, vector<1x1x4x100xf32>
    %113 = vector.shape_cast %112 : vector<1x1x4x100xf32> to vector<4x100xf32>
    %c0_135 = arith.constant 0 : index
    %c0_136 = arith.constant 0 : index
    %c0_137 = arith.constant 0 : index
    %c2_138 = arith.constant 2 : index
    %114 = vector.load %arg2[%c0_135, %c0_136, %c0_137, %c2_138] : memref<1x8x4x128xf32, #tpu.memory_space<vmem>>, vector<1x1x4x100xf32>
    %115 = vector.shape_cast %114 : vector<1x1x4x100xf32> to vector<4x100xf32>
    %c0_139 = arith.constant 0 : index
    %c0_140 = arith.constant 0 : index
    %c0_141 = arith.constant 0 : index
    %c10_142 = arith.constant 10 : index
    %116 = vector.load %arg2[%c0_139, %c0_140, %c0_141, %c10_142] : memref<1x8x4x128xf32, #tpu.memory_space<vmem>>, vector<1x1x4x100xf32>
    %117 = vector.shape_cast %116 : vector<1x1x4x100xf32> to vector<4x100xf32>
    %c0_143 = arith.constant 0 : index
    %c0_144 = arith.constant 0 : index
    %c0_145 = arith.constant 0 : index
    %c11_146 = arith.constant 11 : index
    %118 = vector.load %arg2[%c0_143, %c0_144, %c0_145, %c11_146] : memref<1x8x4x128xf32, #tpu.memory_space<vmem>>, vector<1x1x4x100xf32>
    %119 = vector.shape_cast %118 : vector<1x1x4x100xf32> to vector<4x100xf32>
    %c0_147 = arith.constant 0 : index
    %c0_148 = arith.constant 0 : index
    %c0_149 = arith.constant 0 : index
    %c12_150 = arith.constant 12 : index
    %120 = vector.load %arg2[%c0_147, %c0_148, %c0_149, %c12_150] : memref<1x8x4x128xf32, #tpu.memory_space<vmem>>, vector<1x1x4x100xf32>
    %121 = vector.shape_cast %120 : vector<1x1x4x100xf32> to vector<4x100xf32>
    %c0_151 = arith.constant 0 : index
    %c0_152 = arith.constant 0 : index
    %c0_153 = arith.constant 0 : index
    %c20_154 = arith.constant 20 : index
    %122 = vector.load %arg2[%c0_151, %c0_152, %c0_153, %c20_154] : memref<1x8x4x128xf32, #tpu.memory_space<vmem>>, vector<1x1x4x100xf32>
    %123 = vector.shape_cast %122 : vector<1x1x4x100xf32> to vector<4x100xf32>
    %c0_155 = arith.constant 0 : index
    %c0_156 = arith.constant 0 : index
    %c0_157 = arith.constant 0 : index
    %c21_158 = arith.constant 21 : index
    %124 = vector.load %arg2[%c0_155, %c0_156, %c0_157, %c21_158] : memref<1x8x4x128xf32, #tpu.memory_space<vmem>>, vector<1x1x4x100xf32>
    %125 = vector.shape_cast %124 : vector<1x1x4x100xf32> to vector<4x100xf32>
    %c0_159 = arith.constant 0 : index
    %c0_160 = arith.constant 0 : index
    %c0_161 = arith.constant 0 : index
    %c22_162 = arith.constant 22 : index
    %126 = vector.load %arg2[%c0_159, %c0_160, %c0_161, %c22_162] : memref<1x8x4x128xf32, #tpu.memory_space<vmem>>, vector<1x1x4x100xf32>
    %127 = vector.shape_cast %126 : vector<1x1x4x100xf32> to vector<4x100xf32>
    %c0_163 = arith.constant 0 : index
    %c1_164 = arith.constant 1 : index
    %c0_165 = arith.constant 0 : index
    %c0_166 = arith.constant 0 : index
    %128 = vector.load %arg2[%c0_163, %c1_164, %c0_165, %c0_166] : memref<1x8x4x128xf32, #tpu.memory_space<vmem>>, vector<1x1x4x100xf32>
    %129 = vector.shape_cast %128 : vector<1x1x4x100xf32> to vector<4x100xf32>
    %c0_167 = arith.constant 0 : index
    %c1_168 = arith.constant 1 : index
    %c0_169 = arith.constant 0 : index
    %c1_170 = arith.constant 1 : index
    %130 = vector.load %arg2[%c0_167, %c1_168, %c0_169, %c1_170] : memref<1x8x4x128xf32, #tpu.memory_space<vmem>>, vector<1x1x4x100xf32>
    %131 = vector.shape_cast %130 : vector<1x1x4x100xf32> to vector<4x100xf32>
    %c0_171 = arith.constant 0 : index
    %c1_172 = arith.constant 1 : index
    %c0_173 = arith.constant 0 : index
    %c2_174 = arith.constant 2 : index
    %132 = vector.load %arg2[%c0_171, %c1_172, %c0_173, %c2_174] : memref<1x8x4x128xf32, #tpu.memory_space<vmem>>, vector<1x1x4x100xf32>
    %133 = vector.shape_cast %132 : vector<1x1x4x100xf32> to vector<4x100xf32>
    %c0_175 = arith.constant 0 : index
    %c1_176 = arith.constant 1 : index
    %c0_177 = arith.constant 0 : index
    %c10_178 = arith.constant 10 : index
    %134 = vector.load %arg2[%c0_175, %c1_176, %c0_177, %c10_178] : memref<1x8x4x128xf32, #tpu.memory_space<vmem>>, vector<1x1x4x100xf32>
    %135 = vector.shape_cast %134 : vector<1x1x4x100xf32> to vector<4x100xf32>
    %c0_179 = arith.constant 0 : index
    %c1_180 = arith.constant 1 : index
    %c0_181 = arith.constant 0 : index
    %c11_182 = arith.constant 11 : index
    %136 = vector.load %arg2[%c0_179, %c1_180, %c0_181, %c11_182] : memref<1x8x4x128xf32, #tpu.memory_space<vmem>>, vector<1x1x4x100xf32>
    %137 = vector.shape_cast %136 : vector<1x1x4x100xf32> to vector<4x100xf32>
    %c0_183 = arith.constant 0 : index
    %c1_184 = arith.constant 1 : index
    %c0_185 = arith.constant 0 : index
    %c12_186 = arith.constant 12 : index
    %138 = vector.load %arg2[%c0_183, %c1_184, %c0_185, %c12_186] : memref<1x8x4x128xf32, #tpu.memory_space<vmem>>, vector<1x1x4x100xf32>
    %139 = vector.shape_cast %138 : vector<1x1x4x100xf32> to vector<4x100xf32>
    %c0_187 = arith.constant 0 : index
    %c1_188 = arith.constant 1 : index
    %c0_189 = arith.constant 0 : index
    %c20_190 = arith.constant 20 : index
    %140 = vector.load %arg2[%c0_187, %c1_188, %c0_189, %c20_190] : memref<1x8x4x128xf32, #tpu.memory_space<vmem>>, vector<1x1x4x100xf32>
    %141 = vector.shape_cast %140 : vector<1x1x4x100xf32> to vector<4x100xf32>
    %c0_191 = arith.constant 0 : index
    %c1_192 = arith.constant 1 : index
    %c0_193 = arith.constant 0 : index
    %c21_194 = arith.constant 21 : index
    %142 = vector.load %arg2[%c0_191, %c1_192, %c0_193, %c21_194] : memref<1x8x4x128xf32, #tpu.memory_space<vmem>>, vector<1x1x4x100xf32>
    %143 = vector.shape_cast %142 : vector<1x1x4x100xf32> to vector<4x100xf32>
    %c0_195 = arith.constant 0 : index
    %c1_196 = arith.constant 1 : index
    %c0_197 = arith.constant 0 : index
    %c22_198 = arith.constant 22 : index
    %144 = vector.load %arg2[%c0_195, %c1_196, %c0_197, %c22_198] : memref<1x8x4x128xf32, #tpu.memory_space<vmem>>, vector<1x1x4x100xf32>
    %145 = vector.shape_cast %144 : vector<1x1x4x100xf32> to vector<4x100xf32>
    %c0_199 = arith.constant 0 : index
    %c2_200 = arith.constant 2 : index
    %c0_201 = arith.constant 0 : index
    %c0_202 = arith.constant 0 : index
    %146 = vector.load %arg2[%c0_199, %c2_200, %c0_201, %c0_202] : memref<1x8x4x128xf32, #tpu.memory_space<vmem>>, vector<1x1x4x100xf32>
    %147 = vector.shape_cast %146 : vector<1x1x4x100xf32> to vector<4x100xf32>
    %c0_203 = arith.constant 0 : index
    %c2_204 = arith.constant 2 : index
    %c0_205 = arith.constant 0 : index
    %c1_206 = arith.constant 1 : index
    %148 = vector.load %arg2[%c0_203, %c2_204, %c0_205, %c1_206] : memref<1x8x4x128xf32, #tpu.memory_space<vmem>>, vector<1x1x4x100xf32>
    %149 = vector.shape_cast %148 : vector<1x1x4x100xf32> to vector<4x100xf32>
    %c0_207 = arith.constant 0 : index
    %c2_208 = arith.constant 2 : index
    %c0_209 = arith.constant 0 : index
    %c2_210 = arith.constant 2 : index
    %150 = vector.load %arg2[%c0_207, %c2_208, %c0_209, %c2_210] : memref<1x8x4x128xf32, #tpu.memory_space<vmem>>, vector<1x1x4x100xf32>
    %151 = vector.shape_cast %150 : vector<1x1x4x100xf32> to vector<4x100xf32>
    %c0_211 = arith.constant 0 : index
    %c2_212 = arith.constant 2 : index
    %c0_213 = arith.constant 0 : index
    %c10_214 = arith.constant 10 : index
    %152 = vector.load %arg2[%c0_211, %c2_212, %c0_213, %c10_214] : memref<1x8x4x128xf32, #tpu.memory_space<vmem>>, vector<1x1x4x100xf32>
    %153 = vector.shape_cast %152 : vector<1x1x4x100xf32> to vector<4x100xf32>
    %c0_215 = arith.constant 0 : index
    %c2_216 = arith.constant 2 : index
    %c0_217 = arith.constant 0 : index
    %c11_218 = arith.constant 11 : index
    %154 = vector.load %arg2[%c0_215, %c2_216, %c0_217, %c11_218] : memref<1x8x4x128xf32, #tpu.memory_space<vmem>>, vector<1x1x4x100xf32>
    %155 = vector.shape_cast %154 : vector<1x1x4x100xf32> to vector<4x100xf32>
    %c0_219 = arith.constant 0 : index
    %c2_220 = arith.constant 2 : index
    %c0_221 = arith.constant 0 : index
    %c12_222 = arith.constant 12 : index
    %156 = vector.load %arg2[%c0_219, %c2_220, %c0_221, %c12_222] : memref<1x8x4x128xf32, #tpu.memory_space<vmem>>, vector<1x1x4x100xf32>
    %157 = vector.shape_cast %156 : vector<1x1x4x100xf32> to vector<4x100xf32>
    %c0_223 = arith.constant 0 : index
    %c2_224 = arith.constant 2 : index
    %c0_225 = arith.constant 0 : index
    %c20_226 = arith.constant 20 : index
    %158 = vector.load %arg2[%c0_223, %c2_224, %c0_225, %c20_226] : memref<1x8x4x128xf32, #tpu.memory_space<vmem>>, vector<1x1x4x100xf32>
    %159 = vector.shape_cast %158 : vector<1x1x4x100xf32> to vector<4x100xf32>
    %c0_227 = arith.constant 0 : index
    %c2_228 = arith.constant 2 : index
    %c0_229 = arith.constant 0 : index
    %c21_230 = arith.constant 21 : index
    %160 = vector.load %arg2[%c0_227, %c2_228, %c0_229, %c21_230] : memref<1x8x4x128xf32, #tpu.memory_space<vmem>>, vector<1x1x4x100xf32>
    %161 = vector.shape_cast %160 : vector<1x1x4x100xf32> to vector<4x100xf32>
    %c0_231 = arith.constant 0 : index
    %c2_232 = arith.constant 2 : index
    %c0_233 = arith.constant 0 : index
    %c22_234 = arith.constant 22 : index
    %162 = vector.load %arg2[%c0_231, %c2_232, %c0_233, %c22_234] : memref<1x8x4x128xf32, #tpu.memory_space<vmem>>, vector<1x1x4x100xf32>
    %163 = vector.shape_cast %162 : vector<1x1x4x100xf32> to vector<4x100xf32>
    %164 = tpu.concatenate %111, %113, %115, %117, %119, %121, %123, %125, %127, %129, %131, %133, %135, %137, %139, %141 in 0 : vector<4x100xf32>, vector<4x100xf32>, vector<4x100xf32>, vector<4x100xf32>, vector<4x100xf32>, vector<4x100xf32>, vector<4x100xf32>, vector<4x100xf32>, vector<4x100xf32>, vector<4x100xf32>, vector<4x100xf32>, vector<4x100xf32>, vector<4x100xf32>, vector<4x100xf32>, vector<4x100xf32>, vector<4x100xf32> -> vector<64x100xf32>
    %165 = tpu.concatenate %143, %145, %147, %149, %151, %153, %155, %157, %159, %161, %163 in 0 : vector<4x100xf32>, vector<4x100xf32>, vector<4x100xf32>, vector<4x100xf32>, vector<4x100xf32>, vector<4x100xf32>, vector<4x100xf32>, vector<4x100xf32>, vector<4x100xf32>, vector<4x100xf32>, vector<4x100xf32> -> vector<44x100xf32>
    %166 = tpu.concatenate %164, %165 in 0 : vector<64x100xf32>, vector<44x100xf32> -> vector<108x100xf32>
    %cst_235 = arith.constant dense<0.000000e+00> : vector<8x100xf32>
    %167 = tpu.matmul %2, %166, %cst_235 {dimension_numbers = #tpu.dot_dimension_numbers<[1], [0], [0], [1], [0, 0, 1, 1], [], []>} : vector<8x108xf32>, vector<108x100xf32>, vector<8x100xf32> -> vector<8x100xf32>
    %168 = vector.broadcast %3 : vector<8x1xf32> to vector<8x100xf32>
    %169 = arith.mulf %167, %168 : vector<8x100xf32>
    %170 = vector.broadcast %4 : vector<8x1xf32> to vector<8x100xf32>
    %171 = arith.addf %169, %170 : vector<8x100xf32>
    %cst_236 = arith.constant 0.000000e+00 : f32
    %172 = vector.broadcast %cst_236 : f32 to vector<8x100xf32>
    %173 = arith.maximumf %171, %172 : vector<8x100xf32>
    %c0_237 = arith.constant 0 : index
    %c0_238 = arith.constant 0 : index
    %174 = vector.load %arg8[%c0_237, %c0_238] : memref<1x100xf32, #tpu.memory_space<vmem>>, vector<1x100xf32>
    %175 = vector.broadcast %109 : f32 to vector<1x100xf32>
    %176 = arith.mulf %174, %175 : vector<1x100xf32>
    %177 = vector.broadcast %176 : vector<1x100xf32> to vector<8x100xf32>
    %178 = arith.mulf %173, %177 : vector<8x100xf32>
    %c0_i32_239 = arith.constant 0 : i32
    %179 = arith.sitofp %c0_i32_239 : i32 to f32
    %180 = vector.broadcast %179 : f32 to vector<8x11xf32>
    %181 = tpu.concatenate %180, %178 in 1 : vector<8x11xf32>, vector<8x100xf32> -> vector<8x111xf32>
    %182 = vector.broadcast %179 : f32 to vector<8x17xf32>
    %183 = tpu.concatenate %181, %182 in 1 : vector<8x111xf32>, vector<8x17xf32> -> vector<8x128xf32>
    %c0_240 = arith.constant 0 : index
    %c1_241 = arith.constant 1 : index
    %c0_242 = arith.constant 0 : index
    %c0_243 = arith.constant 0 : index
    %184 = vector.load %arg9[%c0_240, %c1_241, %c0_242, %c0_243] : memref<1x8x8x128xf32, #tpu.memory_space<vmem>>, vector<1x1x8x128xf32>
    %185 = vector.shape_cast %184 : vector<1x1x8x128xf32> to vector<8x128xf32>
    %186 = vector.shape_cast %183 : vector<8x128xf32> to vector<1x1x8x128xf32>
    tpu.vector_store %arg9[%c0_240, %c1_241, %c0_242, %c0_243], %186 {strides = array<i32>} : memref<1x8x8x128xf32, #tpu.memory_space<vmem>>, vector<1x1x8x128xf32>,
    %c8_i32_244 = arith.constant 8 : i32
    %187 = arith.muli %arg1, %c8_i32_244 : i32
    %c2_i32 = arith.constant 2 : i32
    %188 = arith.addi %187, %c2_i32 : i32
    %c8_i32_245 = arith.constant 8 : i32
    %189 = arith.cmpi slt, %188, %c8_i32_245 : i32
    %190 = arith.extui %189 : i1 to i32
    %191 = arith.sitofp %190 : i32 to f32
    %c0_246 = arith.constant 0 : index
    %c1_247 = arith.constant 1 : index
    %c0_248 = arith.constant 0 : index
    %c0_249 = arith.constant 0 : index
    %192 = vector.load %arg2[%c0_246, %c1_247, %c0_248, %c0_249] : memref<1x8x4x128xf32, #tpu.memory_space<vmem>>, vector<1x1x4x100xf32>
    %193 = vector.shape_cast %192 : vector<1x1x4x100xf32> to vector<4x100xf32>
    %c0_250 = arith.constant 0 : index
    %c1_251 = arith.constant 1 : index
    %c0_252 = arith.constant 0 : index
    %c1_253 = arith.constant 1 : index
    %194 = vector.load %arg2[%c0_250, %c1_251, %c0_252, %c1_253] : memref<1x8x4x128xf32, #tpu.memory_space<vmem>>, vector<1x1x4x100xf32>
    %195 = vector.shape_cast %194 : vector<1x1x4x100xf32> to vector<4x100xf32>
    %c0_254 = arith.constant 0 : index
    %c1_255 = arith.constant 1 : index
    %c0_256 = arith.constant 0 : index
    %c2_257 = arith.constant 2 : index
    %196 = vector.load %arg2[%c0_254, %c1_255, %c0_256, %c2_257] : memref<1x8x4x128xf32, #tpu.memory_space<vmem>>, vector<1x1x4x100xf32>
    %197 = vector.shape_cast %196 : vector<1x1x4x100xf32> to vector<4x100xf32>
    %c0_258 = arith.constant 0 : index
    %c1_259 = arith.constant 1 : index
    %c0_260 = arith.constant 0 : index
    %c10_261 = arith.constant 10 : index
    %198 = vector.load %arg2[%c0_258, %c1_259, %c0_260, %c10_261] : memref<1x8x4x128xf32, #tpu.memory_space<vmem>>, vector<1x1x4x100xf32>
    %199 = vector.shape_cast %198 : vector<1x1x4x100xf32> to vector<4x100xf32>
    %c0_262 = arith.constant 0 : index
    %c1_263 = arith.constant 1 : index
    %c0_264 = arith.constant 0 : index
    %c11_265 = arith.constant 11 : index
    %200 = vector.load %arg2[%c0_262, %c1_263, %c0_264, %c11_265] : memref<1x8x4x128xf32, #tpu.memory_space<vmem>>, vector<1x1x4x100xf32>
    %201 = vector.shape_cast %200 : vector<1x1x4x100xf32> to vector<4x100xf32>
    %c0_266 = arith.constant 0 : index
    %c1_267 = arith.constant 1 : index
    %c0_268 = arith.constant 0 : index
    %c12_269 = arith.constant 12 : index
    %202 = vector.load %arg2[%c0_266, %c1_267, %c0_268, %c12_269] : memref<1x8x4x128xf32, #tpu.memory_space<vmem>>, vector<1x1x4x100xf32>
    %203 = vector.shape_cast %202 : vector<1x1x4x100xf32> to vector<4x100xf32>
    %c0_270 = arith.constant 0 : index
    %c1_271 = arith.constant 1 : index
    %c0_272 = arith.constant 0 : index
    %c20_273 = arith.constant 20 : index
    %204 = vector.load %arg2[%c0_270, %c1_271, %c0_272, %c20_273] : memref<1x8x4x128xf32, #tpu.memory_space<vmem>>, vector<1x1x4x100xf32>
    %205 = vector.shape_cast %204 : vector<1x1x4x100xf32> to vector<4x100xf32>
    %c0_274 = arith.constant 0 : index
    %c1_275 = arith.constant 1 : index
    %c0_276 = arith.constant 0 : index
    %c21_277 = arith.constant 21 : index
    %206 = vector.load %arg2[%c0_274, %c1_275, %c0_276, %c21_277] : memref<1x8x4x128xf32, #tpu.memory_space<vmem>>, vector<1x1x4x100xf32>
    %207 = vector.shape_cast %206 : vector<1x1x4x100xf32> to vector<4x100xf32>
    %c0_278 = arith.constant 0 : index
    %c1_279 = arith.constant 1 : index
    %c0_280 = arith.constant 0 : index
    %c22_281 = arith.constant 22 : index
    %208 = vector.load %arg2[%c0_278, %c1_279, %c0_280, %c22_281] : memref<1x8x4x128xf32, #tpu.memory_space<vmem>>, vector<1x1x4x100xf32>
    %209 = vector.shape_cast %208 : vector<1x1x4x100xf32> to vector<4x100xf32>
    %c0_282 = arith.constant 0 : index
    %c2_283 = arith.constant 2 : index
    %c0_284 = arith.constant 0 : index
    %c0_285 = arith.constant 0 : index
    %210 = vector.load %arg2[%c0_282, %c2_283, %c0_284, %c0_285] : memref<1x8x4x128xf32, #tpu.memory_space<vmem>>, vector<1x1x4x100xf32>
    %211 = vector.shape_cast %210 : vector<1x1x4x100xf32> to vector<4x100xf32>
    %c0_286 = arith.constant 0 : index
    %c2_287 = arith.constant 2 : index
    %c0_288 = arith.constant 0 : index
    %c1_289 = arith.constant 1 : index
    %212 = vector.load %arg2[%c0_286, %c2_287, %c0_288, %c1_289] : memref<1x8x4x128xf32, #tpu.memory_space<vmem>>, vector<1x1x4x100xf32>
    %213 = vector.shape_cast %212 : vector<1x1x4x100xf32> to vector<4x100xf32>
    %c0_290 = arith.constant 0 : index
    %c2_291 = arith.constant 2 : index
    %c0_292 = arith.constant 0 : index
    %c2_293 = arith.constant 2 : index
    %214 = vector.load %arg2[%c0_290, %c2_291, %c0_292, %c2_293] : memref<1x8x4x128xf32, #tpu.memory_space<vmem>>, vector<1x1x4x100xf32>
    %215 = vector.shape_cast %214 : vector<1x1x4x100xf32> to vector<4x100xf32>
    %c0_294 = arith.constant 0 : index
    %c2_295 = arith.constant 2 : index
    %c0_296 = arith.constant 0 : index
    %c10_297 = arith.constant 10 : index
    %216 = vector.load %arg2[%c0_294, %c2_295, %c0_296, %c10_297] : memref<1x8x4x128xf32, #tpu.memory_space<vmem>>, vector<1x1x4x100xf32>
    %217 = vector.shape_cast %216 : vector<1x1x4x100xf32> to vector<4x100xf32>
    %c0_298 = arith.constant 0 : index
    %c2_299 = arith.constant 2 : index
    %c0_300 = arith.constant 0 : index
    %c11_301 = arith.constant 11 : index
    %218 = vector.load %arg2[%c0_298, %c2_299, %c0_300, %c11_301] : memref<1x8x4x128xf32, #tpu.memory_space<vmem>>, vector<1x1x4x100xf32>
    %219 = vector.shape_cast %218 : vector<1x1x4x100xf32> to vector<4x100xf32>
    %c0_302 = arith.constant 0 : index
    %c2_303 = arith.constant 2 : index
    %c0_304 = arith.constant 0 : index
    %c12_305 = arith.constant 12 : index
    %220 = vector.load %arg2[%c0_302, %c2_303, %c0_304, %c12_305] : memref<1x8x4x128xf32, #tpu.memory_space<vmem>>, vector<1x1x4x100xf32>
    %221 = vector.shape_cast %220 : vector<1x1x4x100xf32> to vector<4x100xf32>
    %c0_306 = arith.constant 0 : index
    %c2_307 = arith.constant 2 : index
    %c0_308 = arith.constant 0 : index
    %c20_309 = arith.constant 20 : index
    %222 = vector.load %arg2[%c0_306, %c2_307, %c0_308, %c20_309] : memref<1x8x4x128xf32, #tpu.memory_space<vmem>>, vector<1x1x4x100xf32>
    %223 = vector.shape_cast %222 : vector<1x1x4x100xf32> to vector<4x100xf32>
    %c0_310 = arith.constant 0 : index
    %c2_311 = arith.constant 2 : index
    %c0_312 = arith.constant 0 : index
    %c21_313 = arith.constant 21 : index
    %224 = vector.load %arg2[%c0_310, %c2_311, %c0_312, %c21_313] : memref<1x8x4x128xf32, #tpu.memory_space<vmem>>, vector<1x1x4x100xf32>
    %225 = vector.shape_cast %224 : vector<1x1x4x100xf32> to vector<4x100xf32>
    %c0_314 = arith.constant 0 : index
    %c2_315 = arith.constant 2 : index
    %c0_316 = arith.constant 0 : index
    %c22_317 = arith.constant 22 : index
    %226 = vector.load %arg2[%c0_314, %c2_315, %c0_316, %c22_317] : memref<1x8x4x128xf32, #tpu.memory_space<vmem>>, vector<1x1x4x100xf32>
    %227 = vector.shape_cast %226 : vector<1x1x4x100xf32> to vector<4x100xf32>
    %c0_318 = arith.constant 0 : index
    %c3 = arith.constant 3 : index
    %c0_319 = arith.constant 0 : index
    %c0_320 = arith.constant 0 : index
    %228 = vector.load %arg2[%c0_318, %c3, %c0_319, %c0_320] : memref<1x8x4x128xf32, #tpu.memory_space<vmem>>, vector<1x1x4x100xf32>
    %229 = vector.shape_cast %228 : vector<1x1x4x100xf32> to vector<4x100xf32>
    %c0_321 = arith.constant 0 : index
    %c3_322 = arith.constant 3 : index
    %c0_323 = arith.constant 0 : index
    %c1_324 = arith.constant 1 : index
    %230 = vector.load %arg2[%c0_321, %c3_322, %c0_323, %c1_324] : memref<1x8x4x128xf32, #tpu.memory_space<vmem>>, vector<1x1x4x100xf32>
    %231 = vector.shape_cast %230 : vector<1x1x4x100xf32> to vector<4x100xf32>
    %c0_325 = arith.constant 0 : index
    %c3_326 = arith.constant 3 : index
    %c0_327 = arith.constant 0 : index
    %c2_328 = arith.constant 2 : index
    %232 = vector.load %arg2[%c0_325, %c3_326, %c0_327, %c2_328] : memref<1x8x4x128xf32, #tpu.memory_space<vmem>>, vector<1x1x4x100xf32>
    %233 = vector.shape_cast %232 : vector<1x1x4x100xf32> to vector<4x100xf32>
    %c0_329 = arith.constant 0 : index
    %c3_330 = arith.constant 3 : index
    %c0_331 = arith.constant 0 : index
    %c10_332 = arith.constant 10 : index
    %234 = vector.load %arg2[%c0_329, %c3_330, %c0_331, %c10_332] : memref<1x8x4x128xf32, #tpu.memory_space<vmem>>, vector<1x1x4x100xf32>
    %235 = vector.shape_cast %234 : vector<1x1x4x100xf32> to vector<4x100xf32>
    %c0_333 = arith.constant 0 : index
    %c3_334 = arith.constant 3 : index
    %c0_335 = arith.constant 0 : index
    %c11_336 = arith.constant 11 : index
    %236 = vector.load %arg2[%c0_333, %c3_334, %c0_335, %c11_336] : memref<1x8x4x128xf32, #tpu.memory_space<vmem>>, vector<1x1x4x100xf32>
    %237 = vector.shape_cast %236 : vector<1x1x4x100xf32> to vector<4x100xf32>
    %c0_337 = arith.constant 0 : index
    %c3_338 = arith.constant 3 : index
    %c0_339 = arith.constant 0 : index
    %c12_340 = arith.constant 12 : index
    %238 = vector.load %arg2[%c0_337, %c3_338, %c0_339, %c12_340] : memref<1x8x4x128xf32, #tpu.memory_space<vmem>>, vector<1x1x4x100xf32>
    %239 = vector.shape_cast %238 : vector<1x1x4x100xf32> to vector<4x100xf32>
    %c0_341 = arith.constant 0 : index
    %c3_342 = arith.constant 3 : index
    %c0_343 = arith.constant 0 : index
    %c20_344 = arith.constant 20 : index
    %240 = vector.load %arg2[%c0_341, %c3_342, %c0_343, %c20_344] : memref<1x8x4x128xf32, #tpu.memory_space<vmem>>, vector<1x1x4x100xf32>
    %241 = vector.shape_cast %240 : vector<1x1x4x100xf32> to vector<4x100xf32>
    %c0_345 = arith.constant 0 : index
    %c3_346 = arith.constant 3 : index
    %c0_347 = arith.constant 0 : index
    %c21_348 = arith.constant 21 : index
    %242 = vector.load %arg2[%c0_345, %c3_346, %c0_347, %c21_348] : memref<1x8x4x128xf32, #tpu.memory_space<vmem>>, vector<1x1x4x100xf32>
    %243 = vector.shape_cast %242 : vector<1x1x4x100xf32> to vector<4x100xf32>
    %c0_349 = arith.constant 0 : index
    %c3_350 = arith.constant 3 : index
    %c0_351 = arith.constant 0 : index
    %c22_352 = arith.constant 22 : index
    %244 = vector.load %arg2[%c0_349, %c3_350, %c0_351, %c22_352] : memref<1x8x4x128xf32, #tpu.memory_space<vmem>>, vector<1x1x4x100xf32>
    %245 = vector.shape_cast %244 : vector<1x1x4x100xf32> to vector<4x100xf32>
    %246 = tpu.concatenate %193, %195, %197, %199, %201, %203, %205, %207, %209, %211, %213, %215, %217, %219, %221, %223 in 0 : vector<4x100xf32>, vector<4x100xf32>, vector<4x100xf32>, vector<4x100xf32>, vector<4x100xf32>, vector<4x100xf32>, vector<4x100xf32>, vector<4x100xf32>, vector<4x100xf32>, vector<4x100xf32>, vector<4x100xf32>, vector<4x100xf32>, vector<4x100xf32>, vector<4x100xf32>, vector<4x100xf32>, vector<4x100xf32> -> vector<64x100xf32>
    %247 = tpu.concatenate %225, %227, %229, %231, %233, %235, %237, %239, %241, %243, %245 in 0 : vector<4x100xf32>, vector<4x100xf32>, vector<4x100xf32>, vector<4x100xf32>, vector<4x100xf32>, vector<4x100xf32>, vector<4x100xf32>, vector<4x100xf32>, vector<4x100xf32>, vector<4x100xf32>, vector<4x100xf32> -> vector<44x100xf32>
    %248 = tpu.concatenate %246, %247 in 0 : vector<64x100xf32>, vector<44x100xf32> -> vector<108x100xf32>
    %cst_353 = arith.constant dense<0.000000e+00> : vector<8x100xf32>
    %249 = tpu.matmul %2, %248, %cst_353 {dimension_numbers = #tpu.dot_dimension_numbers<[1], [0], [0], [1], [0, 0, 1, 1], [], []>} : vector<8x108xf32>, vector<108x100xf32>, vector<8x100xf32> -> vector<8x100xf32>
    %250 = vector.broadcast %3 : vector<8x1xf32> to vector<8x100xf32>
    %251 = arith.mulf %249, %250 : vector<8x100xf32>
    %252 = vector.broadcast %4 : vector<8x1xf32> to vector<8x100xf32>
    %253 = arith.addf %251, %252 : vector<8x100xf32>
    %cst_354 = arith.constant 0.000000e+00 : f32
    %254 = vector.broadcast %cst_354 : f32 to vector<8x100xf32>
    %255 = arith.maximumf %253, %254 : vector<8x100xf32>
    %c0_355 = arith.constant 0 : index
    %c0_356 = arith.constant 0 : index
    %256 = vector.load %arg8[%c0_355, %c0_356] : memref<1x100xf32, #tpu.memory_space<vmem>>, vector<1x100xf32>
    %257 = vector.broadcast %191 : f32 to vector<1x100xf32>
    %258 = arith.mulf %256, %257 : vector<1x100xf32>
    %259 = vector.broadcast %258 : vector<1x100xf32> to vector<8x100xf32>
    %260 = arith.mulf %255, %259 : vector<8x100xf32>
    %c0_i32_357 = arith.constant 0 : i32
    %261 = arith.sitofp %c0_i32_357 : i32 to f32
    %262 = vector.broadcast %261 : f32 to vector<8x11xf32>
    %263 = tpu.concatenate %262, %260 in 1 : vector<8x11xf32>, vector<8x100xf32> -> vector<8x111xf32>
    %264 = vector.broadcast %261 : f32 to vector<8x17xf32>
    %265 = tpu.concatenate %263, %264 in 1 : vector<8x111xf32>, vector<8x17xf32> -> vector<8x128xf32>
    %c0_358 = arith.constant 0 : index
    %c2_359 = arith.constant 2 : index
    %c0_360 = arith.constant 0 : index
    %c0_361 = arith.constant 0 : index
    %266 = vector.load %arg9[%c0_358, %c2_359, %c0_360, %c0_361] : memref<1x8x8x128xf32, #tpu.memory_space<vmem>>, vector<1x1x8x128xf32>
    %267 = vector.shape_cast %266 : vector<1x1x8x128xf32> to vector<8x128xf32>
    %268 = vector.shape_cast %265 : vector<8x128xf32> to vector<1x1x8x128xf32>
    tpu.vector_store %arg9[%c0_358, %c2_359, %c0_360, %c0_361], %268 {strides = array<i32>} : memref<1x8x8x128xf32, #tpu.memory_space<vmem>>, vector<1x1x8x128xf32>,
    %c8_i32_362 = arith.constant 8 : i32
    %269 = arith.muli %arg1, %c8_i32_362 : i32
    %c3_i32 = arith.constant 3 : i32
    %270 = arith.addi %269, %c3_i32 : i32
    %c8_i32_363 = arith.constant 8 : i32
    %271 = arith.cmpi slt, %270, %c8_i32_363 : i32
    %272 = arith.extui %271 : i1 to i32
    %273 = arith.sitofp %272 : i32 to f32
    %c0_364 = arith.constant 0 : index
    %c2_365 = arith.constant 2 : index
    %c0_366 = arith.constant 0 : index
    %c0_367 = arith.constant 0 : index
    %274 = vector.load %arg2[%c0_364, %c2_365, %c0_366, %c0_367] : memref<1x8x4x128xf32, #tpu.memory_space<vmem>>, vector<1x1x4x100xf32>
    %275 = vector.shape_cast %274 : vector<1x1x4x100xf32> to vector<4x100xf32>
    %c0_368 = arith.constant 0 : index
    %c2_369 = arith.constant 2 : index
    %c0_370 = arith.constant 0 : index
    %c1_371 = arith.constant 1 : index
    %276 = vector.load %arg2[%c0_368, %c2_369, %c0_370, %c1_371] : memref<1x8x4x128xf32, #tpu.memory_space<vmem>>, vector<1x1x4x100xf32>
    %277 = vector.shape_cast %276 : vector<1x1x4x100xf32> to vector<4x100xf32>
    %c0_372 = arith.constant 0 : index
    %c2_373 = arith.constant 2 : index
    %c0_374 = arith.constant 0 : index
    %c2_375 = arith.constant 2 : index
    %278 = vector.load %arg2[%c0_372, %c2_373, %c0_374, %c2_375] : memref<1x8x4x128xf32, #tpu.memory_space<vmem>>, vector<1x1x4x100xf32>
    %279 = vector.shape_cast %278 : vector<1x1x4x100xf32> to vector<4x100xf32>
    %c0_376 = arith.constant 0 : index
    %c2_377 = arith.constant 2 : index
    %c0_378 = arith.constant 0 : index
    %c10_379 = arith.constant 10 : index
    %280 = vector.load %arg2[%c0_376, %c2_377, %c0_378, %c10_379] : memref<1x8x4x128xf32, #tpu.memory_space<vmem>>, vector<1x1x4x100xf32>
    %281 = vector.shape_cast %280 : vector<1x1x4x100xf32> to vector<4x100xf32>
    %c0_380 = arith.constant 0 : index
    %c2_381 = arith.constant 2 : index
    %c0_382 = arith.constant 0 : index
    %c11_383 = arith.constant 11 : index
    %282 = vector.load %arg2[%c0_380, %c2_381, %c0_382, %c11_383] : memref<1x8x4x128xf32, #tpu.memory_space<vmem>>, vector<1x1x4x100xf32>
    %283 = vector.shape_cast %282 : vector<1x1x4x100xf32> to vector<4x100xf32>
    %c0_384 = arith.constant 0 : index
    %c2_385 = arith.constant 2 : index
    %c0_386 = arith.constant 0 : index
    %c12_387 = arith.constant 12 : index
    %284 = vector.load %arg2[%c0_384, %c2_385, %c0_386, %c12_387] : memref<1x8x4x128xf32, #tpu.memory_space<vmem>>, vector<1x1x4x100xf32>
    %285 = vector.shape_cast %284 : vector<1x1x4x100xf32> to vector<4x100xf32>
    %c0_388 = arith.constant 0 : index
    %c2_389 = arith.constant 2 : index
    %c0_390 = arith.constant 0 : index
    %c20_391 = arith.constant 20 : index
    %286 = vector.load %arg2[%c0_388, %c2_389, %c0_390, %c20_391] : memref<1x8x4x128xf32, #tpu.memory_space<vmem>>, vector<1x1x4x100xf32>
    %287 = vector.shape_cast %286 : vector<1x1x4x100xf32> to vector<4x100xf32>
    %c0_392 = arith.constant 0 : index
    %c2_393 = arith.constant 2 : index
    %c0_394 = arith.constant 0 : index
    %c21_395 = arith.constant 21 : index
    %288 = vector.load %arg2[%c0_392, %c2_393, %c0_394, %c21_395] : memref<1x8x4x128xf32, #tpu.memory_space<vmem>>, vector<1x1x4x100xf32>
    %289 = vector.shape_cast %288 : vector<1x1x4x100xf32> to vector<4x100xf32>
    %c0_396 = arith.constant 0 : index
    %c2_397 = arith.constant 2 : index
    %c0_398 = arith.constant 0 : index
    %c22_399 = arith.constant 22 : index
    %290 = vector.load %arg2[%c0_396, %c2_397, %c0_398, %c22_399] : memref<1x8x4x128xf32, #tpu.memory_space<vmem>>, vector<1x1x4x100xf32>
    %291 = vector.shape_cast %290 : vector<1x1x4x100xf32> to vector<4x100xf32>
    %c0_400 = arith.constant 0 : index
    %c3_401 = arith.constant 3 : index
    %c0_402 = arith.constant 0 : index
    %c0_403 = arith.constant 0 : index
    %292 = vector.load %arg2[%c0_400, %c3_401, %c0_402, %c0_403] : memref<1x8x4x128xf32, #tpu.memory_space<vmem>>, vector<1x1x4x100xf32>
    %293 = vector.shape_cast %292 : vector<1x1x4x100xf32> to vector<4x100xf32>
    %c0_404 = arith.constant 0 : index
    %c3_405 = arith.constant 3 : index
    %c0_406 = arith.constant 0 : index
    %c1_407 = arith.constant 1 : index
    %294 = vector.load %arg2[%c0_404, %c3_405, %c0_406, %c1_407] : memref<1x8x4x128xf32, #tpu.memory_space<vmem>>, vector<1x1x4x100xf32>
    %295 = vector.shape_cast %294 : vector<1x1x4x100xf32> to vector<4x100xf32>
    %c0_408 = arith.constant 0 : index
    %c3_409 = arith.constant 3 : index
    %c0_410 = arith.constant 0 : index
    %c2_411 = arith.constant 2 : index
    %296 = vector.load %arg2[%c0_408, %c3_409, %c0_410, %c2_411] : memref<1x8x4x128xf32, #tpu.memory_space<vmem>>, vector<1x1x4x100xf32>
    %297 = vector.shape_cast %296 : vector<1x1x4x100xf32> to vector<4x100xf32>
    %c0_412 = arith.constant 0 : index
    %c3_413 = arith.constant 3 : index
    %c0_414 = arith.constant 0 : index
    %c10_415 = arith.constant 10 : index
    %298 = vector.load %arg2[%c0_412, %c3_413, %c0_414, %c10_415] : memref<1x8x4x128xf32, #tpu.memory_space<vmem>>, vector<1x1x4x100xf32>
    %299 = vector.shape_cast %298 : vector<1x1x4x100xf32> to vector<4x100xf32>
    %c0_416 = arith.constant 0 : index
    %c3_417 = arith.constant 3 : index
    %c0_418 = arith.constant 0 : index
    %c11_419 = arith.constant 11 : index
    %300 = vector.load %arg2[%c0_416, %c3_417, %c0_418, %c11_419] : memref<1x8x4x128xf32, #tpu.memory_space<vmem>>, vector<1x1x4x100xf32>
    %301 = vector.shape_cast %300 : vector<1x1x4x100xf32> to vector<4x100xf32>
    %c0_420 = arith.constant 0 : index
    %c3_421 = arith.constant 3 : index
    %c0_422 = arith.constant 0 : index
    %c12_423 = arith.constant 12 : index
    %302 = vector.load %arg2[%c0_420, %c3_421, %c0_422, %c12_423] : memref<1x8x4x128xf32, #tpu.memory_space<vmem>>, vector<1x1x4x100xf32>
    %303 = vector.shape_cast %302 : vector<1x1x4x100xf32> to vector<4x100xf32>
    %c0_424 = arith.constant 0 : index
    %c3_425 = arith.constant 3 : index
    %c0_426 = arith.constant 0 : index
    %c20_427 = arith.constant 20 : index
    %304 = vector.load %arg2[%c0_424, %c3_425, %c0_426, %c20_427] : memref<1x8x4x128xf32, #tpu.memory_space<vmem>>, vector<1x1x4x100xf32>
    %305 = vector.shape_cast %304 : vector<1x1x4x100xf32> to vector<4x100xf32>
    %c0_428 = arith.constant 0 : index
    %c3_429 = arith.constant 3 : index
    %c0_430 = arith.constant 0 : index
    %c21_431 = arith.constant 21 : index
    %306 = vector.load %arg2[%c0_428, %c3_429, %c0_430, %c21_431] : memref<1x8x4x128xf32, #tpu.memory_space<vmem>>, vector<1x1x4x100xf32>
    %307 = vector.shape_cast %306 : vector<1x1x4x100xf32> to vector<4x100xf32>
    %c0_432 = arith.constant 0 : index
    %c3_433 = arith.constant 3 : index
    %c0_434 = arith.constant 0 : index
    %c22_435 = arith.constant 22 : index
    %308 = vector.load %arg2[%c0_432, %c3_433, %c0_434, %c22_435] : memref<1x8x4x128xf32, #tpu.memory_space<vmem>>, vector<1x1x4x100xf32>
    %309 = vector.shape_cast %308 : vector<1x1x4x100xf32> to vector<4x100xf32>
    %c0_436 = arith.constant 0 : index
    %c4 = arith.constant 4 : index
    %c0_437 = arith.constant 0 : index
    %c0_438 = arith.constant 0 : index
    %310 = vector.load %arg2[%c0_436, %c4, %c0_437, %c0_438] : memref<1x8x4x128xf32, #tpu.memory_space<vmem>>, vector<1x1x4x100xf32>
    %311 = vector.shape_cast %310 : vector<1x1x4x100xf32> to vector<4x100xf32>
    %c0_439 = arith.constant 0 : index
    %c4_440 = arith.constant 4 : index
    %c0_441 = arith.constant 0 : index
    %c1_442 = arith.constant 1 : index
    %312 = vector.load %arg2[%c0_439, %c4_440, %c0_441, %c1_442] : memref<1x8x4x128xf32, #tpu.memory_space<vmem>>, vector<1x1x4x100xf32>
    %313 = vector.shape_cast %312 : vector<1x1x4x100xf32> to vector<4x100xf32>
    %c0_443 = arith.constant 0 : index
    %c4_444 = arith.constant 4 : index
    %c0_445 = arith.constant 0 : index
    %c2_446 = arith.constant 2 : index
    %314 = vector.load %arg2[%c0_443, %c4_444, %c0_445, %c2_446] : memref<1x8x4x128xf32, #tpu.memory_space<vmem>>, vector<1x1x4x100xf32>
    %315 = vector.shape_cast %314 : vector<1x1x4x100xf32> to vector<4x100xf32>
    %c0_447 = arith.constant 0 : index
    %c4_448 = arith.constant 4 : index
    %c0_449 = arith.constant 0 : index
    %c10_450 = arith.constant 10 : index
    %316 = vector.load %arg2[%c0_447, %c4_448, %c0_449, %c10_450] : memref<1x8x4x128xf32, #tpu.memory_space<vmem>>, vector<1x1x4x100xf32>
    %317 = vector.shape_cast %316 : vector<1x1x4x100xf32> to vector<4x100xf32>
    %c0_451 = arith.constant 0 : index
    %c4_452 = arith.constant 4 : index
    %c0_453 = arith.constant 0 : index
    %c11_454 = arith.constant 11 : index
    %318 = vector.load %arg2[%c0_451, %c4_452, %c0_453, %c11_454] : memref<1x8x4x128xf32, #tpu.memory_space<vmem>>, vector<1x1x4x100xf32>
    %319 = vector.shape_cast %318 : vector<1x1x4x100xf32> to vector<4x100xf32>
    %c0_455 = arith.constant 0 : index
    %c4_456 = arith.constant 4 : index
    %c0_457 = arith.constant 0 : index
    %c12_458 = arith.constant 12 : index
    %320 = vector.load %arg2[%c0_455, %c4_456, %c0_457, %c12_458] : memref<1x8x4x128xf32, #tpu.memory_space<vmem>>, vector<1x1x4x100xf32>
    %321 = vector.shape_cast %320 : vector<1x1x4x100xf32> to vector<4x100xf32>
    %c0_459 = arith.constant 0 : index
    %c4_460 = arith.constant 4 : index
    %c0_461 = arith.constant 0 : index
    %c20_462 = arith.constant 20 : index
    %322 = vector.load %arg2[%c0_459, %c4_460, %c0_461, %c20_462] : memref<1x8x4x128xf32, #tpu.memory_space<vmem>>, vector<1x1x4x100xf32>
    %323 = vector.shape_cast %322 : vector<1x1x4x100xf32> to vector<4x100xf32>
    %c0_463 = arith.constant 0 : index
    %c4_464 = arith.constant 4 : index
    %c0_465 = arith.constant 0 : index
    %c21_466 = arith.constant 21 : index
    %324 = vector.load %arg2[%c0_463, %c4_464, %c0_465, %c21_466] : memref<1x8x4x128xf32, #tpu.memory_space<vmem>>, vector<1x1x4x100xf32>
    %325 = vector.shape_cast %324 : vector<1x1x4x100xf32> to vector<4x100xf32>
    %c0_467 = arith.constant 0 : index
    %c4_468 = arith.constant 4 : index
    %c0_469 = arith.constant 0 : index
    %c22_470 = arith.constant 22 : index
    %326 = vector.load %arg2[%c0_467, %c4_468, %c0_469, %c22_470] : memref<1x8x4x128xf32, #tpu.memory_space<vmem>>, vector<1x1x4x100xf32>
    %327 = vector.shape_cast %326 : vector<1x1x4x100xf32> to vector<4x100xf32>
    %328 = tpu.concatenate %275, %277, %279, %281, %283, %285, %287, %289, %291, %293, %295, %297, %299, %301, %303, %305 in 0 : vector<4x100xf32>, vector<4x100xf32>, vector<4x100xf32>, vector<4x100xf32>, vector<4x100xf32>, vector<4x100xf32>, vector<4x100xf32>, vector<4x100xf32>, vector<4x100xf32>, vector<4x100xf32>, vector<4x100xf32>, vector<4x100xf32>, vector<4x100xf32>, vector<4x100xf32>, vector<4x100xf32>, vector<4x100xf32> -> vector<64x100xf32>
    %329 = tpu.concatenate %307, %309, %311, %313, %315, %317, %319, %321, %323, %325, %327 in 0 : vector<4x100xf32>, vector<4x100xf32>, vector<4x100xf32>, vector<4x100xf32>, vector<4x100xf32>, vector<4x100xf32>, vector<4x100xf32>, vector<4x100xf32>, vector<4x100xf32>, vector<4x100xf32>, vector<4x100xf32> -> vector<44x100xf32>
    %330 = tpu.concatenate %328, %329 in 0 : vector<64x100xf32>, vector<44x100xf32> -> vector<108x100xf32>
    %cst_471 = arith.constant dense<0.000000e+00> : vector<8x100xf32>
    %331 = tpu.matmul %2, %330, %cst_471 {dimension_numbers = #tpu.dot_dimension_numbers<[1], [0], [0], [1], [0, 0, 1, 1], [], []>} : vector<8x108xf32>, vector<108x100xf32>, vector<8x100xf32> -> vector<8x100xf32>
    %332 = vector.broadcast %3 : vector<8x1xf32> to vector<8x100xf32>
    %333 = arith.mulf %331, %332 : vector<8x100xf32>
    %334 = vector.broadcast %4 : vector<8x1xf32> to vector<8x100xf32>
    %335 = arith.addf %333, %334 : vector<8x100xf32>
    %cst_472 = arith.constant 0.000000e+00 : f32
    %336 = vector.broadcast %cst_472 : f32 to vector<8x100xf32>
    %337 = arith.maximumf %335, %336 : vector<8x100xf32>
    %c0_473 = arith.constant 0 : index
    %c0_474 = arith.constant 0 : index
    %338 = vector.load %arg8[%c0_473, %c0_474] : memref<1x100xf32, #tpu.memory_space<vmem>>, vector<1x100xf32>
    %339 = vector.broadcast %273 : f32 to vector<1x100xf32>
    %340 = arith.mulf %338, %339 : vector<1x100xf32>
    %341 = vector.broadcast %340 : vector<1x100xf32> to vector<8x100xf32>
    %342 = arith.mulf %337, %341 : vector<8x100xf32>
    %c0_i32_475 = arith.constant 0 : i32
    %343 = arith.sitofp %c0_i32_475 : i32 to f32
    %344 = vector.broadcast %343 : f32 to vector<8x11xf32>
    %345 = tpu.concatenate %344, %342 in 1 : vector<8x11xf32>, vector<8x100xf32> -> vector<8x111xf32>
    %346 = vector.broadcast %343 : f32 to vector<8x17xf32>
    %347 = tpu.concatenate %345, %346 in 1 : vector<8x111xf32>, vector<8x17xf32> -> vector<8x128xf32>
    %c0_476 = arith.constant 0 : index
    %c3_477 = arith.constant 3 : index
    %c0_478 = arith.constant 0 : index
    %c0_479 = arith.constant 0 : index
    %348 = vector.load %arg9[%c0_476, %c3_477, %c0_478, %c0_479] : memref<1x8x8x128xf32, #tpu.memory_space<vmem>>, vector<1x1x8x128xf32>
    %349 = vector.shape_cast %348 : vector<1x1x8x128xf32> to vector<8x128xf32>
    %350 = vector.shape_cast %347 : vector<8x128xf32> to vector<1x1x8x128xf32>
    tpu.vector_store %arg9[%c0_476, %c3_477, %c0_478, %c0_479], %350 {strides = array<i32>} : memref<1x8x8x128xf32, #tpu.memory_space<vmem>>, vector<1x1x8x128xf32>,
    %c8_i32_480 = arith.constant 8 : i32
    %351 = arith.muli %arg1, %c8_i32_480 : i32
    %c4_i32 = arith.constant 4 : i32
    %352 = arith.addi %351, %c4_i32 : i32
    %c8_i32_481 = arith.constant 8 : i32
    %353 = arith.cmpi slt, %352, %c8_i32_481 : i32
    %354 = arith.extui %353 : i1 to i32
    %355 = arith.sitofp %354 : i32 to f32
    %c0_482 = arith.constant 0 : index
    %c3_483 = arith.constant 3 : index
    %c0_484 = arith.constant 0 : index
    %c0_485 = arith.constant 0 : index
    %356 = vector.load %arg2[%c0_482, %c3_483, %c0_484, %c0_485] : memref<1x8x4x128xf32, #tpu.memory_space<vmem>>, vector<1x1x4x100xf32>
    %357 = vector.shape_cast %356 : vector<1x1x4x100xf32> to vector<4x100xf32>
    %c0_486 = arith.constant 0 : index
    %c3_487 = arith.constant 3 : index
    %c0_488 = arith.constant 0 : index
    %c1_489 = arith.constant 1 : index
    %358 = vector.load %arg2[%c0_486, %c3_487, %c0_488, %c1_489] : memref<1x8x4x128xf32, #tpu.memory_space<vmem>>, vector<1x1x4x100xf32>
    %359 = vector.shape_cast %358 : vector<1x1x4x100xf32> to vector<4x100xf32>
    %c0_490 = arith.constant 0 : index
    %c3_491 = arith.constant 3 : index
    %c0_492 = arith.constant 0 : index
    %c2_493 = arith.constant 2 : index
    %360 = vector.load %arg2[%c0_490, %c3_491, %c0_492, %c2_493] : memref<1x8x4x128xf32, #tpu.memory_space<vmem>>, vector<1x1x4x100xf32>
    %361 = vector.shape_cast %360 : vector<1x1x4x100xf32> to vector<4x100xf32>
    %c0_494 = arith.constant 0 : index
    %c3_495 = arith.constant 3 : index
    %c0_496 = arith.constant 0 : index
    %c10_497 = arith.constant 10 : index
    %362 = vector.load %arg2[%c0_494, %c3_495, %c0_496, %c10_497] : memref<1x8x4x128xf32, #tpu.memory_space<vmem>>, vector<1x1x4x100xf32>
    %363 = vector.shape_cast %362 : vector<1x1x4x100xf32> to vector<4x100xf32>
    %c0_498 = arith.constant 0 : index
    %c3_499 = arith.constant 3 : index
    %c0_500 = arith.constant 0 : index
    %c11_501 = arith.constant 11 : index
    %364 = vector.load %arg2[%c0_498, %c3_499, %c0_500, %c11_501] : memref<1x8x4x128xf32, #tpu.memory_space<vmem>>, vector<1x1x4x100xf32>
    %365 = vector.shape_cast %364 : vector<1x1x4x100xf32> to vector<4x100xf32>
    %c0_502 = arith.constant 0 : index
    %c3_503 = arith.constant 3 : index
    %c0_504 = arith.constant 0 : index
    %c12_505 = arith.constant 12 : index
    %366 = vector.load %arg2[%c0_502, %c3_503, %c0_504, %c12_505] : memref<1x8x4x128xf32, #tpu.memory_space<vmem>>, vector<1x1x4x100xf32>
    %367 = vector.shape_cast %366 : vector<1x1x4x100xf32> to vector<4x100xf32>
    %c0_506 = arith.constant 0 : index
    %c3_507 = arith.constant 3 : index
    %c0_508 = arith.constant 0 : index
    %c20_509 = arith.constant 20 : index
    %368 = vector.load %arg2[%c0_506, %c3_507, %c0_508, %c20_509] : memref<1x8x4x128xf32, #tpu.memory_space<vmem>>, vector<1x1x4x100xf32>
    %369 = vector.shape_cast %368 : vector<1x1x4x100xf32> to vector<4x100xf32>
    %c0_510 = arith.constant 0 : index
    %c3_511 = arith.constant 3 : index
    %c0_512 = arith.constant 0 : index
    %c21_513 = arith.constant 21 : index
    %370 = vector.load %arg2[%c0_510, %c3_511, %c0_512, %c21_513] : memref<1x8x4x128xf32, #tpu.memory_space<vmem>>, vector<1x1x4x100xf32>
    %371 = vector.shape_cast %370 : vector<1x1x4x100xf32> to vector<4x100xf32>
    %c0_514 = arith.constant 0 : index
    %c3_515 = arith.constant 3 : index
    %c0_516 = arith.constant 0 : index
    %c22_517 = arith.constant 22 : index
    %372 = vector.load %arg2[%c0_514, %c3_515, %c0_516, %c22_517] : memref<1x8x4x128xf32, #tpu.memory_space<vmem>>, vector<1x1x4x100xf32>
    %373 = vector.shape_cast %372 : vector<1x1x4x100xf32> to vector<4x100xf32>
    %c0_518 = arith.constant 0 : index
    %c4_519 = arith.constant 4 : index
    %c0_520 = arith.constant 0 : index
    %c0_521 = arith.constant 0 : index
    %374 = vector.load %arg2[%c0_518, %c4_519, %c0_520, %c0_521] : memref<1x8x4x128xf32, #tpu.memory_space<vmem>>, vector<1x1x4x100xf32>
    %375 = vector.shape_cast %374 : vector<1x1x4x100xf32> to vector<4x100xf32>
    %c0_522 = arith.constant 0 : index
    %c4_523 = arith.constant 4 : index
    %c0_524 = arith.constant 0 : index
    %c1_525 = arith.constant 1 : index
    %376 = vector.load %arg2[%c0_522, %c4_523, %c0_524, %c1_525] : memref<1x8x4x128xf32, #tpu.memory_space<vmem>>, vector<1x1x4x100xf32>
    %377 = vector.shape_cast %376 : vector<1x1x4x100xf32> to vector<4x100xf32>
    %c0_526 = arith.constant 0 : index
    %c4_527 = arith.constant 4 : index
    %c0_528 = arith.constant 0 : index
    %c2_529 = arith.constant 2 : index
    %378 = vector.load %arg2[%c0_526, %c4_527, %c0_528, %c2_529] : memref<1x8x4x128xf32, #tpu.memory_space<vmem>>, vector<1x1x4x100xf32>
    %379 = vector.shape_cast %378 : vector<1x1x4x100xf32> to vector<4x100xf32>
    %c0_530 = arith.constant 0 : index
    %c4_531 = arith.constant 4 : index
    %c0_532 = arith.constant 0 : index
    %c10_533 = arith.constant 10 : index
    %380 = vector.load %arg2[%c0_530, %c4_531, %c0_532, %c10_533] : memref<1x8x4x128xf32, #tpu.memory_space<vmem>>, vector<1x1x4x100xf32>
    %381 = vector.shape_cast %380 : vector<1x1x4x100xf32> to vector<4x100xf32>
    %c0_534 = arith.constant 0 : index
    %c4_535 = arith.constant 4 : index
    %c0_536 = arith.constant 0 : index
    %c11_537 = arith.constant 11 : index
    %382 = vector.load %arg2[%c0_534, %c4_535, %c0_536, %c11_537] : memref<1x8x4x128xf32, #tpu.memory_space<vmem>>, vector<1x1x4x100xf32>
    %383 = vector.shape_cast %382 : vector<1x1x4x100xf32> to vector<4x100xf32>
    %c0_538 = arith.constant 0 : index
    %c4_539 = arith.constant 4 : index
    %c0_540 = arith.constant 0 : index
    %c12_541 = arith.constant 12 : index
    %384 = vector.load %arg2[%c0_538, %c4_539, %c0_540, %c12_541] : memref<1x8x4x128xf32, #tpu.memory_space<vmem>>, vector<1x1x4x100xf32>
    %385 = vector.shape_cast %384 : vector<1x1x4x100xf32> to vector<4x100xf32>
    %c0_542 = arith.constant 0 : index
    %c4_543 = arith.constant 4 : index
    %c0_544 = arith.constant 0 : index
    %c20_545 = arith.constant 20 : index
    %386 = vector.load %arg2[%c0_542, %c4_543, %c0_544, %c20_545] : memref<1x8x4x128xf32, #tpu.memory_space<vmem>>, vector<1x1x4x100xf32>
    %387 = vector.shape_cast %386 : vector<1x1x4x100xf32> to vector<4x100xf32>
    %c0_546 = arith.constant 0 : index
    %c4_547 = arith.constant 4 : index
    %c0_548 = arith.constant 0 : index
    %c21_549 = arith.constant 21 : index
    %388 = vector.load %arg2[%c0_546, %c4_547, %c0_548, %c21_549] : memref<1x8x4x128xf32, #tpu.memory_space<vmem>>, vector<1x1x4x100xf32>
    %389 = vector.shape_cast %388 : vector<1x1x4x100xf32> to vector<4x100xf32>
    %c0_550 = arith.constant 0 : index
    %c4_551 = arith.constant 4 : index
    %c0_552 = arith.constant 0 : index
    %c22_553 = arith.constant 22 : index
    %390 = vector.load %arg2[%c0_550, %c4_551, %c0_552, %c22_553] : memref<1x8x4x128xf32, #tpu.memory_space<vmem>>, vector<1x1x4x100xf32>
    %391 = vector.shape_cast %390 : vector<1x1x4x100xf32> to vector<4x100xf32>
    %c0_554 = arith.constant 0 : index
    %c5 = arith.constant 5 : index
    %c0_555 = arith.constant 0 : index
    %c0_556 = arith.constant 0 : index
    %392 = vector.load %arg2[%c0_554, %c5, %c0_555, %c0_556] : memref<1x8x4x128xf32, #tpu.memory_space<vmem>>, vector<1x1x4x100xf32>
    %393 = vector.shape_cast %392 : vector<1x1x4x100xf32> to vector<4x100xf32>
    %c0_557 = arith.constant 0 : index
    %c5_558 = arith.constant 5 : index
    %c0_559 = arith.constant 0 : index
    %c1_560 = arith.constant 1 : index
    %394 = vector.load %arg2[%c0_557, %c5_558, %c0_559, %c1_560] : memref<1x8x4x128xf32, #tpu.memory_space<vmem>>, vector<1x1x4x100xf32>
    %395 = vector.shape_cast %394 : vector<1x1x4x100xf32> to vector<4x100xf32>
    %c0_561 = arith.constant 0 : index
    %c5_562 = arith.constant 5 : index
    %c0_563 = arith.constant 0 : index
    %c2_564 = arith.constant 2 : index
    %396 = vector.load %arg2[%c0_561, %c5_562, %c0_563, %c2_564] : memref<1x8x4x128xf32, #tpu.memory_space<vmem>>, vector<1x1x4x100xf32>
    %397 = vector.shape_cast %396 : vector<1x1x4x100xf32> to vector<4x100xf32>
    %c0_565 = arith.constant 0 : index
    %c5_566 = arith.constant 5 : index
    %c0_567 = arith.constant 0 : index
    %c10_568 = arith.constant 10 : index
    %398 = vector.load %arg2[%c0_565, %c5_566, %c0_567, %c10_568] : memref<1x8x4x128xf32, #tpu.memory_space<vmem>>, vector<1x1x4x100xf32>
    %399 = vector.shape_cast %398 : vector<1x1x4x100xf32> to vector<4x100xf32>
    %c0_569 = arith.constant 0 : index
    %c5_570 = arith.constant 5 : index
    %c0_571 = arith.constant 0 : index
    %c11_572 = arith.constant 11 : index
    %400 = vector.load %arg2[%c0_569, %c5_570, %c0_571, %c11_572] : memref<1x8x4x128xf32, #tpu.memory_space<vmem>>, vector<1x1x4x100xf32>
    %401 = vector.shape_cast %400 : vector<1x1x4x100xf32> to vector<4x100xf32>
    %c0_573 = arith.constant 0 : index
    %c5_574 = arith.constant 5 : index
    %c0_575 = arith.constant 0 : index
    %c12_576 = arith.constant 12 : index
    %402 = vector.load %arg2[%c0_573, %c5_574, %c0_575, %c12_576] : memref<1x8x4x128xf32, #tpu.memory_space<vmem>>, vector<1x1x4x100xf32>
    %403 = vector.shape_cast %402 : vector<1x1x4x100xf32> to vector<4x100xf32>
    %c0_577 = arith.constant 0 : index
    %c5_578 = arith.constant 5 : index
    %c0_579 = arith.constant 0 : index
    %c20_580 = arith.constant 20 : index
    %404 = vector.load %arg2[%c0_577, %c5_578, %c0_579, %c20_580] : memref<1x8x4x128xf32, #tpu.memory_space<vmem>>, vector<1x1x4x100xf32>
    %405 = vector.shape_cast %404 : vector<1x1x4x100xf32> to vector<4x100xf32>
    %c0_581 = arith.constant 0 : index
    %c5_582 = arith.constant 5 : index
    %c0_583 = arith.constant 0 : index
    %c21_584 = arith.constant 21 : index
    %406 = vector.load %arg2[%c0_581, %c5_582, %c0_583, %c21_584] : memref<1x8x4x128xf32, #tpu.memory_space<vmem>>, vector<1x1x4x100xf32>
    %407 = vector.shape_cast %406 : vector<1x1x4x100xf32> to vector<4x100xf32>
    %c0_585 = arith.constant 0 : index
    %c5_586 = arith.constant 5 : index
    %c0_587 = arith.constant 0 : index
    %c22_588 = arith.constant 22 : index
    %408 = vector.load %arg2[%c0_585, %c5_586, %c0_587, %c22_588] : memref<1x8x4x128xf32, #tpu.memory_space<vmem>>, vector<1x1x4x100xf32>
    %409 = vector.shape_cast %408 : vector<1x1x4x100xf32> to vector<4x100xf32>
    %410 = tpu.concatenate %357, %359, %361, %363, %365, %367, %369, %371, %373, %375, %377, %379, %381, %383, %385, %387 in 0 : vector<4x100xf32>, vector<4x100xf32>, vector<4x100xf32>, vector<4x100xf32>, vector<4x100xf32>, vector<4x100xf32>, vector<4x100xf32>, vector<4x100xf32>, vector<4x100xf32>, vector<4x100xf32>, vector<4x100xf32>, vector<4x100xf32>, vector<4x100xf32>, vector<4x100xf32>, vector<4x100xf32>, vector<4x100xf32> -> vector<64x100xf32>
    %411 = tpu.concatenate %389, %391, %393, %395, %397, %399, %401, %403, %405, %407, %409 in 0 : vector<4x100xf32>, vector<4x100xf32>, vector<4x100xf32>, vector<4x100xf32>, vector<4x100xf32>, vector<4x100xf32>, vector<4x100xf32>, vector<4x100xf32>, vector<4x100xf32>, vector<4x100xf32>, vector<4x100xf32> -> vector<44x100xf32>
    %412 = tpu.concatenate %410, %411 in 0 : vector<64x100xf32>, vector<44x100xf32> -> vector<108x100xf32>
    %cst_589 = arith.constant dense<0.000000e+00> : vector<8x100xf32>
    %413 = tpu.matmul %2, %412, %cst_589 {dimension_numbers = #tpu.dot_dimension_numbers<[1], [0], [0], [1], [0, 0, 1, 1], [], []>} : vector<8x108xf32>, vector<108x100xf32>, vector<8x100xf32> -> vector<8x100xf32>
    %414 = vector.broadcast %3 : vector<8x1xf32> to vector<8x100xf32>
    %415 = arith.mulf %413, %414 : vector<8x100xf32>
    %416 = vector.broadcast %4 : vector<8x1xf32> to vector<8x100xf32>
    %417 = arith.addf %415, %416 : vector<8x100xf32>
    %cst_590 = arith.constant 0.000000e+00 : f32
    %418 = vector.broadcast %cst_590 : f32 to vector<8x100xf32>
    %419 = arith.maximumf %417, %418 : vector<8x100xf32>
    %c0_591 = arith.constant 0 : index
    %c0_592 = arith.constant 0 : index
    %420 = vector.load %arg8[%c0_591, %c0_592] : memref<1x100xf32, #tpu.memory_space<vmem>>, vector<1x100xf32>
    %421 = vector.broadcast %355 : f32 to vector<1x100xf32>
    %422 = arith.mulf %420, %421 : vector<1x100xf32>
    %423 = vector.broadcast %422 : vector<1x100xf32> to vector<8x100xf32>
    %424 = arith.mulf %419, %423 : vector<8x100xf32>
    %c0_i32_593 = arith.constant 0 : i32
    %425 = arith.sitofp %c0_i32_593 : i32 to f32
    %426 = vector.broadcast %425 : f32 to vector<8x11xf32>
    %427 = tpu.concatenate %426, %424 in 1 : vector<8x11xf32>, vector<8x100xf32> -> vector<8x111xf32>
    %428 = vector.broadcast %425 : f32 to vector<8x17xf32>
    %429 = tpu.concatenate %427, %428 in 1 : vector<8x111xf32>, vector<8x17xf32> -> vector<8x128xf32>
    %c0_594 = arith.constant 0 : index
    %c4_595 = arith.constant 4 : index
    %c0_596 = arith.constant 0 : index
    %c0_597 = arith.constant 0 : index
    %430 = vector.load %arg9[%c0_594, %c4_595, %c0_596, %c0_597] : memref<1x8x8x128xf32, #tpu.memory_space<vmem>>, vector<1x1x8x128xf32>
    %431 = vector.shape_cast %430 : vector<1x1x8x128xf32> to vector<8x128xf32>
    %432 = vector.shape_cast %429 : vector<8x128xf32> to vector<1x1x8x128xf32>
    tpu.vector_store %arg9[%c0_594, %c4_595, %c0_596, %c0_597], %432 {strides = array<i32>} : memref<1x8x8x128xf32, #tpu.memory_space<vmem>>, vector<1x1x8x128xf32>,
    %c8_i32_598 = arith.constant 8 : i32
    %433 = arith.muli %arg1, %c8_i32_598 : i32
    %c5_i32 = arith.constant 5 : i32
    %434 = arith.addi %433, %c5_i32 : i32
    %c8_i32_599 = arith.constant 8 : i32
    %435 = arith.cmpi slt, %434, %c8_i32_599 : i32
    %436 = arith.extui %435 : i1 to i32
    %437 = arith.sitofp %436 : i32 to f32
    %c0_600 = arith.constant 0 : index
    %c4_601 = arith.constant 4 : index
    %c0_602 = arith.constant 0 : index
    %c0_603 = arith.constant 0 : index
    %438 = vector.load %arg2[%c0_600, %c4_601, %c0_602, %c0_603] : memref<1x8x4x128xf32, #tpu.memory_space<vmem>>, vector<1x1x4x100xf32>
    %439 = vector.shape_cast %438 : vector<1x1x4x100xf32> to vector<4x100xf32>
    %c0_604 = arith.constant 0 : index
    %c4_605 = arith.constant 4 : index
    %c0_606 = arith.constant 0 : index
    %c1_607 = arith.constant 1 : index
    %440 = vector.load %arg2[%c0_604, %c4_605, %c0_606, %c1_607] : memref<1x8x4x128xf32, #tpu.memory_space<vmem>>, vector<1x1x4x100xf32>
    %441 = vector.shape_cast %440 : vector<1x1x4x100xf32> to vector<4x100xf32>
    %c0_608 = arith.constant 0 : index
    %c4_609 = arith.constant 4 : index
    %c0_610 = arith.constant 0 : index
    %c2_611 = arith.constant 2 : index
    %442 = vector.load %arg2[%c0_608, %c4_609, %c0_610, %c2_611] : memref<1x8x4x128xf32, #tpu.memory_space<vmem>>, vector<1x1x4x100xf32>
    %443 = vector.shape_cast %442 : vector<1x1x4x100xf32> to vector<4x100xf32>
    %c0_612 = arith.constant 0 : index
    %c4_613 = arith.constant 4 : index
    %c0_614 = arith.constant 0 : index
    %c10_615 = arith.constant 10 : index
    %444 = vector.load %arg2[%c0_612, %c4_613, %c0_614, %c10_615] : memref<1x8x4x128xf32, #tpu.memory_space<vmem>>, vector<1x1x4x100xf32>
    %445 = vector.shape_cast %444 : vector<1x1x4x100xf32> to vector<4x100xf32>
    %c0_616 = arith.constant 0 : index
    %c4_617 = arith.constant 4 : index
    %c0_618 = arith.constant 0 : index
    %c11_619 = arith.constant 11 : index
    %446 = vector.load %arg2[%c0_616, %c4_617, %c0_618, %c11_619] : memref<1x8x4x128xf32, #tpu.memory_space<vmem>>, vector<1x1x4x100xf32>
    %447 = vector.shape_cast %446 : vector<1x1x4x100xf32> to vector<4x100xf32>
    %c0_620 = arith.constant 0 : index
    %c4_621 = arith.constant 4 : index
    %c0_622 = arith.constant 0 : index
    %c12_623 = arith.constant 12 : index
    %448 = vector.load %arg2[%c0_620, %c4_621, %c0_622, %c12_623] : memref<1x8x4x128xf32, #tpu.memory_space<vmem>>, vector<1x1x4x100xf32>
    %449 = vector.shape_cast %448 : vector<1x1x4x100xf32> to vector<4x100xf32>
    %c0_624 = arith.constant 0 : index
    %c4_625 = arith.constant 4 : index
    %c0_626 = arith.constant 0 : index
    %c20_627 = arith.constant 20 : index
    %450 = vector.load %arg2[%c0_624, %c4_625, %c0_626, %c20_627] : memref<1x8x4x128xf32, #tpu.memory_space<vmem>>, vector<1x1x4x100xf32>
    %451 = vector.shape_cast %450 : vector<1x1x4x100xf32> to vector<4x100xf32>
    %c0_628 = arith.constant 0 : index
    %c4_629 = arith.constant 4 : index
    %c0_630 = arith.constant 0 : index
    %c21_631 = arith.constant 21 : index
    %452 = vector.load %arg2[%c0_628, %c4_629, %c0_630, %c21_631] : memref<1x8x4x128xf32, #tpu.memory_space<vmem>>, vector<1x1x4x100xf32>
    %453 = vector.shape_cast %452 : vector<1x1x4x100xf32> to vector<4x100xf32>
    %c0_632 = arith.constant 0 : index
    %c4_633 = arith.constant 4 : index
    %c0_634 = arith.constant 0 : index
    %c22_635 = arith.constant 22 : index
    %454 = vector.load %arg2[%c0_632, %c4_633, %c0_634, %c22_635] : memref<1x8x4x128xf32, #tpu.memory_space<vmem>>, vector<1x1x4x100xf32>
    %455 = vector.shape_cast %454 : vector<1x1x4x100xf32> to vector<4x100xf32>
    %c0_636 = arith.constant 0 : index
    %c5_637 = arith.constant 5 : index
    %c0_638 = arith.constant 0 : index
    %c0_639 = arith.constant 0 : index
    %456 = vector.load %arg2[%c0_636, %c5_637, %c0_638, %c0_639] : memref<1x8x4x128xf32, #tpu.memory_space<vmem>>, vector<1x1x4x100xf32>
    %457 = vector.shape_cast %456 : vector<1x1x4x100xf32> to vector<4x100xf32>
    %c0_640 = arith.constant 0 : index
    %c5_641 = arith.constant 5 : index
    %c0_642 = arith.constant 0 : index
    %c1_643 = arith.constant 1 : index
    %458 = vector.load %arg2[%c0_640, %c5_641, %c0_642, %c1_643] : memref<1x8x4x128xf32, #tpu.memory_space<vmem>>, vector<1x1x4x100xf32>
    %459 = vector.shape_cast %458 : vector<1x1x4x100xf32> to vector<4x100xf32>
    %c0_644 = arith.constant 0 : index
    %c5_645 = arith.constant 5 : index
    %c0_646 = arith.constant 0 : index
    %c2_647 = arith.constant 2 : index
    %460 = vector.load %arg2[%c0_644, %c5_645, %c0_646, %c2_647] : memref<1x8x4x128xf32, #tpu.memory_space<vmem>>, vector<1x1x4x100xf32>
    %461 = vector.shape_cast %460 : vector<1x1x4x100xf32> to vector<4x100xf32>
    %c0_648 = arith.constant 0 : index
    %c5_649 = arith.constant 5 : index
    %c0_650 = arith.constant 0 : index
    %c10_651 = arith.constant 10 : index
    %462 = vector.load %arg2[%c0_648, %c5_649, %c0_650, %c10_651] : memref<1x8x4x128xf32, #tpu.memory_space<vmem>>, vector<1x1x4x100xf32>
    %463 = vector.shape_cast %462 : vector<1x1x4x100xf32> to vector<4x100xf32>
    %c0_652 = arith.constant 0 : index
    %c5_653 = arith.constant 5 : index
    %c0_654 = arith.constant 0 : index
    %c11_655 = arith.constant 11 : index
    %464 = vector.load %arg2[%c0_652, %c5_653, %c0_654, %c11_655] : memref<1x8x4x128xf32, #tpu.memory_space<vmem>>, vector<1x1x4x100xf32>
    %465 = vector.shape_cast %464 : vector<1x1x4x100xf32> to vector<4x100xf32>
    %c0_656 = arith.constant 0 : index
    %c5_657 = arith.constant 5 : index
    %c0_658 = arith.constant 0 : index
    %c12_659 = arith.constant 12 : index
    %466 = vector.load %arg2[%c0_656, %c5_657, %c0_658, %c12_659] : memref<1x8x4x128xf32, #tpu.memory_space<vmem>>, vector<1x1x4x100xf32>
    %467 = vector.shape_cast %466 : vector<1x1x4x100xf32> to vector<4x100xf32>
    %c0_660 = arith.constant 0 : index
    %c5_661 = arith.constant 5 : index
    %c0_662 = arith.constant 0 : index
    %c20_663 = arith.constant 20 : index
    %468 = vector.load %arg2[%c0_660, %c5_661, %c0_662, %c20_663] : memref<1x8x4x128xf32, #tpu.memory_space<vmem>>, vector<1x1x4x100xf32>
    %469 = vector.shape_cast %468 : vector<1x1x4x100xf32> to vector<4x100xf32>
    %c0_664 = arith.constant 0 : index
    %c5_665 = arith.constant 5 : index
    %c0_666 = arith.constant 0 : index
    %c21_667 = arith.constant 21 : index
    %470 = vector.load %arg2[%c0_664, %c5_665, %c0_666, %c21_667] : memref<1x8x4x128xf32, #tpu.memory_space<vmem>>, vector<1x1x4x100xf32>
    %471 = vector.shape_cast %470 : vector<1x1x4x100xf32> to vector<4x100xf32>
    %c0_668 = arith.constant 0 : index
    %c5_669 = arith.constant 5 : index
    %c0_670 = arith.constant 0 : index
    %c22_671 = arith.constant 22 : index
    %472 = vector.load %arg2[%c0_668, %c5_669, %c0_670, %c22_671] : memref<1x8x4x128xf32, #tpu.memory_space<vmem>>, vector<1x1x4x100xf32>
    %473 = vector.shape_cast %472 : vector<1x1x4x100xf32> to vector<4x100xf32>
    %c0_672 = arith.constant 0 : index
    %c6 = arith.constant 6 : index
    %c0_673 = arith.constant 0 : index
    %c0_674 = arith.constant 0 : index
    %474 = vector.load %arg2[%c0_672, %c6, %c0_673, %c0_674] : memref<1x8x4x128xf32, #tpu.memory_space<vmem>>, vector<1x1x4x100xf32>
    %475 = vector.shape_cast %474 : vector<1x1x4x100xf32> to vector<4x100xf32>
    %c0_675 = arith.constant 0 : index
    %c6_676 = arith.constant 6 : index
    %c0_677 = arith.constant 0 : index
    %c1_678 = arith.constant 1 : index
    %476 = vector.load %arg2[%c0_675, %c6_676, %c0_677, %c1_678] : memref<1x8x4x128xf32, #tpu.memory_space<vmem>>, vector<1x1x4x100xf32>
    %477 = vector.shape_cast %476 : vector<1x1x4x100xf32> to vector<4x100xf32>
    %c0_679 = arith.constant 0 : index
    %c6_680 = arith.constant 6 : index
    %c0_681 = arith.constant 0 : index
    %c2_682 = arith.constant 2 : index
    %478 = vector.load %arg2[%c0_679, %c6_680, %c0_681, %c2_682] : memref<1x8x4x128xf32, #tpu.memory_space<vmem>>, vector<1x1x4x100xf32>
    %479 = vector.shape_cast %478 : vector<1x1x4x100xf32> to vector<4x100xf32>
    %c0_683 = arith.constant 0 : index
    %c6_684 = arith.constant 6 : index
    %c0_685 = arith.constant 0 : index
    %c10_686 = arith.constant 10 : index
    %480 = vector.load %arg2[%c0_683, %c6_684, %c0_685, %c10_686] : memref<1x8x4x128xf32, #tpu.memory_space<vmem>>, vector<1x1x4x100xf32>
    %481 = vector.shape_cast %480 : vector<1x1x4x100xf32> to vector<4x100xf32>
    %c0_687 = arith.constant 0 : index
    %c6_688 = arith.constant 6 : index
    %c0_689 = arith.constant 0 : index
    %c11_690 = arith.constant 11 : index
    %482 = vector.load %arg2[%c0_687, %c6_688, %c0_689, %c11_690] : memref<1x8x4x128xf32, #tpu.memory_space<vmem>>, vector<1x1x4x100xf32>
    %483 = vector.shape_cast %482 : vector<1x1x4x100xf32> to vector<4x100xf32>
    %c0_691 = arith.constant 0 : index
    %c6_692 = arith.constant 6 : index
    %c0_693 = arith.constant 0 : index
    %c12_694 = arith.constant 12 : index
    %484 = vector.load %arg2[%c0_691, %c6_692, %c0_693, %c12_694] : memref<1x8x4x128xf32, #tpu.memory_space<vmem>>, vector<1x1x4x100xf32>
    %485 = vector.shape_cast %484 : vector<1x1x4x100xf32> to vector<4x100xf32>
    %c0_695 = arith.constant 0 : index
    %c6_696 = arith.constant 6 : index
    %c0_697 = arith.constant 0 : index
    %c20_698 = arith.constant 20 : index
    %486 = vector.load %arg2[%c0_695, %c6_696, %c0_697, %c20_698] : memref<1x8x4x128xf32, #tpu.memory_space<vmem>>, vector<1x1x4x100xf32>
    %487 = vector.shape_cast %486 : vector<1x1x4x100xf32> to vector<4x100xf32>
    %c0_699 = arith.constant 0 : index
    %c6_700 = arith.constant 6 : index
    %c0_701 = arith.constant 0 : index
    %c21_702 = arith.constant 21 : index
    %488 = vector.load %arg2[%c0_699, %c6_700, %c0_701, %c21_702] : memref<1x8x4x128xf32, #tpu.memory_space<vmem>>, vector<1x1x4x100xf32>
    %489 = vector.shape_cast %488 : vector<1x1x4x100xf32> to vector<4x100xf32>
    %c0_703 = arith.constant 0 : index
    %c6_704 = arith.constant 6 : index
    %c0_705 = arith.constant 0 : index
    %c22_706 = arith.constant 22 : index
    %490 = vector.load %arg2[%c0_703, %c6_704, %c0_705, %c22_706] : memref<1x8x4x128xf32, #tpu.memory_space<vmem>>, vector<1x1x4x100xf32>
    %491 = vector.shape_cast %490 : vector<1x1x4x100xf32> to vector<4x100xf32>
    %492 = tpu.concatenate %439, %441, %443, %445, %447, %449, %451, %453, %455, %457, %459, %461, %463, %465, %467, %469 in 0 : vector<4x100xf32>, vector<4x100xf32>, vector<4x100xf32>, vector<4x100xf32>, vector<4x100xf32>, vector<4x100xf32>, vector<4x100xf32>, vector<4x100xf32>, vector<4x100xf32>, vector<4x100xf32>, vector<4x100xf32>, vector<4x100xf32>, vector<4x100xf32>, vector<4x100xf32>, vector<4x100xf32>, vector<4x100xf32> -> vector<64x100xf32>
    %493 = tpu.concatenate %471, %473, %475, %477, %479, %481, %483, %485, %487, %489, %491 in 0 : vector<4x100xf32>, vector<4x100xf32>, vector<4x100xf32>, vector<4x100xf32>, vector<4x100xf32>, vector<4x100xf32>, vector<4x100xf32>, vector<4x100xf32>, vector<4x100xf32>, vector<4x100xf32>, vector<4x100xf32> -> vector<44x100xf32>
    %494 = tpu.concatenate %492, %493 in 0 : vector<64x100xf32>, vector<44x100xf32> -> vector<108x100xf32>
    %cst_707 = arith.constant dense<0.000000e+00> : vector<8x100xf32>
    %495 = tpu.matmul %2, %494, %cst_707 {dimension_numbers = #tpu.dot_dimension_numbers<[1], [0], [0], [1], [0, 0, 1, 1], [], []>} : vector<8x108xf32>, vector<108x100xf32>, vector<8x100xf32> -> vector<8x100xf32>
    %496 = vector.broadcast %3 : vector<8x1xf32> to vector<8x100xf32>
    %497 = arith.mulf %495, %496 : vector<8x100xf32>
    %498 = vector.broadcast %4 : vector<8x1xf32> to vector<8x100xf32>
    %499 = arith.addf %497, %498 : vector<8x100xf32>
    %cst_708 = arith.constant 0.000000e+00 : f32
    %500 = vector.broadcast %cst_708 : f32 to vector<8x100xf32>
    %501 = arith.maximumf %499, %500 : vector<8x100xf32>
    %c0_709 = arith.constant 0 : index
    %c0_710 = arith.constant 0 : index
    %502 = vector.load %arg8[%c0_709, %c0_710] : memref<1x100xf32, #tpu.memory_space<vmem>>, vector<1x100xf32>
    %503 = vector.broadcast %437 : f32 to vector<1x100xf32>
    %504 = arith.mulf %502, %503 : vector<1x100xf32>
    %505 = vector.broadcast %504 : vector<1x100xf32> to vector<8x100xf32>
    %506 = arith.mulf %501, %505 : vector<8x100xf32>
    %c0_i32_711 = arith.constant 0 : i32
    %507 = arith.sitofp %c0_i32_711 : i32 to f32
    %508 = vector.broadcast %507 : f32 to vector<8x11xf32>
    %509 = tpu.concatenate %508, %506 in 1 : vector<8x11xf32>, vector<8x100xf32> -> vector<8x111xf32>
    %510 = vector.broadcast %507 : f32 to vector<8x17xf32>
    %511 = tpu.concatenate %509, %510 in 1 : vector<8x111xf32>, vector<8x17xf32> -> vector<8x128xf32>
    %c0_712 = arith.constant 0 : index
    %c5_713 = arith.constant 5 : index
    %c0_714 = arith.constant 0 : index
    %c0_715 = arith.constant 0 : index
    %512 = vector.load %arg9[%c0_712, %c5_713, %c0_714, %c0_715] : memref<1x8x8x128xf32, #tpu.memory_space<vmem>>, vector<1x1x8x128xf32>
    %513 = vector.shape_cast %512 : vector<1x1x8x128xf32> to vector<8x128xf32>
    %514 = vector.shape_cast %511 : vector<8x128xf32> to vector<1x1x8x128xf32>
    tpu.vector_store %arg9[%c0_712, %c5_713, %c0_714, %c0_715], %514 {strides = array<i32>} : memref<1x8x8x128xf32, #tpu.memory_space<vmem>>, vector<1x1x8x128xf32>,
    %c8_i32_716 = arith.constant 8 : i32
    %515 = arith.muli %arg1, %c8_i32_716 : i32
    %c6_i32 = arith.constant 6 : i32
    %516 = arith.addi %515, %c6_i32 : i32
    %c8_i32_717 = arith.constant 8 : i32
    %517 = arith.cmpi slt, %516, %c8_i32_717 : i32
    %518 = arith.extui %517 : i1 to i32
    %519 = arith.sitofp %518 : i32 to f32
    %c0_718 = arith.constant 0 : index
    %c5_719 = arith.constant 5 : index
    %c0_720 = arith.constant 0 : index
    %c0_721 = arith.constant 0 : index
    %520 = vector.load %arg2[%c0_718, %c5_719, %c0_720, %c0_721] : memref<1x8x4x128xf32, #tpu.memory_space<vmem>>, vector<1x1x4x100xf32>
    %521 = vector.shape_cast %520 : vector<1x1x4x100xf32> to vector<4x100xf32>
    %c0_722 = arith.constant 0 : index
    %c5_723 = arith.constant 5 : index
    %c0_724 = arith.constant 0 : index
    %c1_725 = arith.constant 1 : index
    %522 = vector.load %arg2[%c0_722, %c5_723, %c0_724, %c1_725] : memref<1x8x4x128xf32, #tpu.memory_space<vmem>>, vector<1x1x4x100xf32>
    %523 = vector.shape_cast %522 : vector<1x1x4x100xf32> to vector<4x100xf32>
    %c0_726 = arith.constant 0 : index
    %c5_727 = arith.constant 5 : index
    %c0_728 = arith.constant 0 : index
    %c2_729 = arith.constant 2 : index
    %524 = vector.load %arg2[%c0_726, %c5_727, %c0_728, %c2_729] : memref<1x8x4x128xf32, #tpu.memory_space<vmem>>, vector<1x1x4x100xf32>
    %525 = vector.shape_cast %524 : vector<1x1x4x100xf32> to vector<4x100xf32>
    %c0_730 = arith.constant 0 : index
    %c5_731 = arith.constant 5 : index
    %c0_732 = arith.constant 0 : index
    %c10_733 = arith.constant 10 : index
    %526 = vector.load %arg2[%c0_730, %c5_731, %c0_732, %c10_733] : memref<1x8x4x128xf32, #tpu.memory_space<vmem>>, vector<1x1x4x100xf32>
    %527 = vector.shape_cast %526 : vector<1x1x4x100xf32> to vector<4x100xf32>
    %c0_734 = arith.constant 0 : index
    %c5_735 = arith.constant 5 : index
    %c0_736 = arith.constant 0 : index
    %c11_737 = arith.constant 11 : index
    %528 = vector.load %arg2[%c0_734, %c5_735, %c0_736, %c11_737] : memref<1x8x4x128xf32, #tpu.memory_space<vmem>>, vector<1x1x4x100xf32>
    %529 = vector.shape_cast %528 : vector<1x1x4x100xf32> to vector<4x100xf32>
    %c0_738 = arith.constant 0 : index
    %c5_739 = arith.constant 5 : index
    %c0_740 = arith.constant 0 : index
    %c12_741 = arith.constant 12 : index
    %530 = vector.load %arg2[%c0_738, %c5_739, %c0_740, %c12_741] : memref<1x8x4x128xf32, #tpu.memory_space<vmem>>, vector<1x1x4x100xf32>
    %531 = vector.shape_cast %530 : vector<1x1x4x100xf32> to vector<4x100xf32>
    %c0_742 = arith.constant 0 : index
    %c5_743 = arith.constant 5 : index
    %c0_744 = arith.constant 0 : index
    %c20_745 = arith.constant 20 : index
    %532 = vector.load %arg2[%c0_742, %c5_743, %c0_744, %c20_745] : memref<1x8x4x128xf32, #tpu.memory_space<vmem>>, vector<1x1x4x100xf32>
    %533 = vector.shape_cast %532 : vector<1x1x4x100xf32> to vector<4x100xf32>
    %c0_746 = arith.constant 0 : index
    %c5_747 = arith.constant 5 : index
    %c0_748 = arith.constant 0 : index
    %c21_749 = arith.constant 21 : index
    %534 = vector.load %arg2[%c0_746, %c5_747, %c0_748, %c21_749] : memref<1x8x4x128xf32, #tpu.memory_space<vmem>>, vector<1x1x4x100xf32>
    %535 = vector.shape_cast %534 : vector<1x1x4x100xf32> to vector<4x100xf32>
    %c0_750 = arith.constant 0 : index
    %c5_751 = arith.constant 5 : index
    %c0_752 = arith.constant 0 : index
    %c22_753 = arith.constant 22 : index
    %536 = vector.load %arg2[%c0_750, %c5_751, %c0_752, %c22_753] : memref<1x8x4x128xf32, #tpu.memory_space<vmem>>, vector<1x1x4x100xf32>
    %537 = vector.shape_cast %536 : vector<1x1x4x100xf32> to vector<4x100xf32>
    %c0_754 = arith.constant 0 : index
    %c6_755 = arith.constant 6 : index
    %c0_756 = arith.constant 0 : index
    %c0_757 = arith.constant 0 : index
    %538 = vector.load %arg2[%c0_754, %c6_755, %c0_756, %c0_757] : memref<1x8x4x128xf32, #tpu.memory_space<vmem>>, vector<1x1x4x100xf32>
    %539 = vector.shape_cast %538 : vector<1x1x4x100xf32> to vector<4x100xf32>
    %c0_758 = arith.constant 0 : index
    %c6_759 = arith.constant 6 : index
    %c0_760 = arith.constant 0 : index
    %c1_761 = arith.constant 1 : index
    %540 = vector.load %arg2[%c0_758, %c6_759, %c0_760, %c1_761] : memref<1x8x4x128xf32, #tpu.memory_space<vmem>>, vector<1x1x4x100xf32>
    %541 = vector.shape_cast %540 : vector<1x1x4x100xf32> to vector<4x100xf32>
    %c0_762 = arith.constant 0 : index
    %c6_763 = arith.constant 6 : index
    %c0_764 = arith.constant 0 : index
    %c2_765 = arith.constant 2 : index
    %542 = vector.load %arg2[%c0_762, %c6_763, %c0_764, %c2_765] : memref<1x8x4x128xf32, #tpu.memory_space<vmem>>, vector<1x1x4x100xf32>
    %543 = vector.shape_cast %542 : vector<1x1x4x100xf32> to vector<4x100xf32>
    %c0_766 = arith.constant 0 : index
    %c6_767 = arith.constant 6 : index
    %c0_768 = arith.constant 0 : index
    %c10_769 = arith.constant 10 : index
    %544 = vector.load %arg2[%c0_766, %c6_767, %c0_768, %c10_769] : memref<1x8x4x128xf32, #tpu.memory_space<vmem>>, vector<1x1x4x100xf32>
    %545 = vector.shape_cast %544 : vector<1x1x4x100xf32> to vector<4x100xf32>
    %c0_770 = arith.constant 0 : index
    %c6_771 = arith.constant 6 : index
    %c0_772 = arith.constant 0 : index
    %c11_773 = arith.constant 11 : index
    %546 = vector.load %arg2[%c0_770, %c6_771, %c0_772, %c11_773] : memref<1x8x4x128xf32, #tpu.memory_space<vmem>>, vector<1x1x4x100xf32>
    %547 = vector.shape_cast %546 : vector<1x1x4x100xf32> to vector<4x100xf32>
    %c0_774 = arith.constant 0 : index
    %c6_775 = arith.constant 6 : index
    %c0_776 = arith.constant 0 : index
    %c12_777 = arith.constant 12 : index
    %548 = vector.load %arg2[%c0_774, %c6_775, %c0_776, %c12_777] : memref<1x8x4x128xf32, #tpu.memory_space<vmem>>, vector<1x1x4x100xf32>
    %549 = vector.shape_cast %548 : vector<1x1x4x100xf32> to vector<4x100xf32>
    %c0_778 = arith.constant 0 : index
    %c6_779 = arith.constant 6 : index
    %c0_780 = arith.constant 0 : index
    %c20_781 = arith.constant 20 : index
    %550 = vector.load %arg2[%c0_778, %c6_779, %c0_780, %c20_781] : memref<1x8x4x128xf32, #tpu.memory_space<vmem>>, vector<1x1x4x100xf32>
    %551 = vector.shape_cast %550 : vector<1x1x4x100xf32> to vector<4x100xf32>
    %c0_782 = arith.constant 0 : index
    %c6_783 = arith.constant 6 : index
    %c0_784 = arith.constant 0 : index
    %c21_785 = arith.constant 21 : index
    %552 = vector.load %arg2[%c0_782, %c6_783, %c0_784, %c21_785] : memref<1x8x4x128xf32, #tpu.memory_space<vmem>>, vector<1x1x4x100xf32>
    %553 = vector.shape_cast %552 : vector<1x1x4x100xf32> to vector<4x100xf32>
    %c0_786 = arith.constant 0 : index
    %c6_787 = arith.constant 6 : index
    %c0_788 = arith.constant 0 : index
    %c22_789 = arith.constant 22 : index
    %554 = vector.load %arg2[%c0_786, %c6_787, %c0_788, %c22_789] : memref<1x8x4x128xf32, #tpu.memory_space<vmem>>, vector<1x1x4x100xf32>
    %555 = vector.shape_cast %554 : vector<1x1x4x100xf32> to vector<4x100xf32>
    %c0_790 = arith.constant 0 : index
    %c7 = arith.constant 7 : index
    %c0_791 = arith.constant 0 : index
    %c0_792 = arith.constant 0 : index
    %556 = vector.load %arg2[%c0_790, %c7, %c0_791, %c0_792] : memref<1x8x4x128xf32, #tpu.memory_space<vmem>>, vector<1x1x4x100xf32>
    %557 = vector.shape_cast %556 : vector<1x1x4x100xf32> to vector<4x100xf32>
    %c0_793 = arith.constant 0 : index
    %c7_794 = arith.constant 7 : index
    %c0_795 = arith.constant 0 : index
    %c1_796 = arith.constant 1 : index
    %558 = vector.load %arg2[%c0_793, %c7_794, %c0_795, %c1_796] : memref<1x8x4x128xf32, #tpu.memory_space<vmem>>, vector<1x1x4x100xf32>
    %559 = vector.shape_cast %558 : vector<1x1x4x100xf32> to vector<4x100xf32>
    %c0_797 = arith.constant 0 : index
    %c7_798 = arith.constant 7 : index
    %c0_799 = arith.constant 0 : index
    %c2_800 = arith.constant 2 : index
    %560 = vector.load %arg2[%c0_797, %c7_798, %c0_799, %c2_800] : memref<1x8x4x128xf32, #tpu.memory_space<vmem>>, vector<1x1x4x100xf32>
    %561 = vector.shape_cast %560 : vector<1x1x4x100xf32> to vector<4x100xf32>
    %c0_801 = arith.constant 0 : index
    %c7_802 = arith.constant 7 : index
    %c0_803 = arith.constant 0 : index
    %c10_804 = arith.constant 10 : index
    %562 = vector.load %arg2[%c0_801, %c7_802, %c0_803, %c10_804] : memref<1x8x4x128xf32, #tpu.memory_space<vmem>>, vector<1x1x4x100xf32>
    %563 = vector.shape_cast %562 : vector<1x1x4x100xf32> to vector<4x100xf32>
    %c0_805 = arith.constant 0 : index
    %c7_806 = arith.constant 7 : index
    %c0_807 = arith.constant 0 : index
    %c11_808 = arith.constant 11 : index
    %564 = vector.load %arg2[%c0_805, %c7_806, %c0_807, %c11_808] : memref<1x8x4x128xf32, #tpu.memory_space<vmem>>, vector<1x1x4x100xf32>
    %565 = vector.shape_cast %564 : vector<1x1x4x100xf32> to vector<4x100xf32>
    %c0_809 = arith.constant 0 : index
    %c7_810 = arith.constant 7 : index
    %c0_811 = arith.constant 0 : index
    %c12_812 = arith.constant 12 : index
    %566 = vector.load %arg2[%c0_809, %c7_810, %c0_811, %c12_812] : memref<1x8x4x128xf32, #tpu.memory_space<vmem>>, vector<1x1x4x100xf32>
    %567 = vector.shape_cast %566 : vector<1x1x4x100xf32> to vector<4x100xf32>
    %c0_813 = arith.constant 0 : index
    %c7_814 = arith.constant 7 : index
    %c0_815 = arith.constant 0 : index
    %c20_816 = arith.constant 20 : index
    %568 = vector.load %arg2[%c0_813, %c7_814, %c0_815, %c20_816] : memref<1x8x4x128xf32, #tpu.memory_space<vmem>>, vector<1x1x4x100xf32>
    %569 = vector.shape_cast %568 : vector<1x1x4x100xf32> to vector<4x100xf32>
    %c0_817 = arith.constant 0 : index
    %c7_818 = arith.constant 7 : index
    %c0_819 = arith.constant 0 : index
    %c21_820 = arith.constant 21 : index
    %570 = vector.load %arg2[%c0_817, %c7_818, %c0_819, %c21_820] : memref<1x8x4x128xf32, #tpu.memory_space<vmem>>, vector<1x1x4x100xf32>
    %571 = vector.shape_cast %570 : vector<1x1x4x100xf32> to vector<4x100xf32>
    %c0_821 = arith.constant 0 : index
    %c7_822 = arith.constant 7 : index
    %c0_823 = arith.constant 0 : index
    %c22_824 = arith.constant 22 : index
    %572 = vector.load %arg2[%c0_821, %c7_822, %c0_823, %c22_824] : memref<1x8x4x128xf32, #tpu.memory_space<vmem>>, vector<1x1x4x100xf32>
    %573 = vector.shape_cast %572 : vector<1x1x4x100xf32> to vector<4x100xf32>
    %574 = tpu.concatenate %521, %523, %525, %527, %529, %531, %533, %535, %537, %539, %541, %543, %545, %547, %549, %551 in 0 : vector<4x100xf32>, vector<4x100xf32>, vector<4x100xf32>, vector<4x100xf32>, vector<4x100xf32>, vector<4x100xf32>, vector<4x100xf32>, vector<4x100xf32>, vector<4x100xf32>, vector<4x100xf32>, vector<4x100xf32>, vector<4x100xf32>, vector<4x100xf32>, vector<4x100xf32>, vector<4x100xf32>, vector<4x100xf32> -> vector<64x100xf32>
    %575 = tpu.concatenate %553, %555, %557, %559, %561, %563, %565, %567, %569, %571, %573 in 0 : vector<4x100xf32>, vector<4x100xf32>, vector<4x100xf32>, vector<4x100xf32>, vector<4x100xf32>, vector<4x100xf32>, vector<4x100xf32>, vector<4x100xf32>, vector<4x100xf32>, vector<4x100xf32>, vector<4x100xf32> -> vector<44x100xf32>
    %576 = tpu.concatenate %574, %575 in 0 : vector<64x100xf32>, vector<44x100xf32> -> vector<108x100xf32>
    %cst_825 = arith.constant dense<0.000000e+00> : vector<8x100xf32>
    %577 = tpu.matmul %2, %576, %cst_825 {dimension_numbers = #tpu.dot_dimension_numbers<[1], [0], [0], [1], [0, 0, 1, 1], [], []>} : vector<8x108xf32>, vector<108x100xf32>, vector<8x100xf32> -> vector<8x100xf32>
    %578 = vector.broadcast %3 : vector<8x1xf32> to vector<8x100xf32>
    %579 = arith.mulf %577, %578 : vector<8x100xf32>
    %580 = vector.broadcast %4 : vector<8x1xf32> to vector<8x100xf32>
    %581 = arith.addf %579, %580 : vector<8x100xf32>
    %cst_826 = arith.constant 0.000000e+00 : f32
    %582 = vector.broadcast %cst_826 : f32 to vector<8x100xf32>
    %583 = arith.maximumf %581, %582 : vector<8x100xf32>
    %c0_827 = arith.constant 0 : index
    %c0_828 = arith.constant 0 : index
    %584 = vector.load %arg8[%c0_827, %c0_828] : memref<1x100xf32, #tpu.memory_space<vmem>>, vector<1x100xf32>
    %585 = vector.broadcast %519 : f32 to vector<1x100xf32>
    %586 = arith.mulf %584, %585 : vector<1x100xf32>
    %587 = vector.broadcast %586 : vector<1x100xf32> to vector<8x100xf32>
    %588 = arith.mulf %583, %587 : vector<8x100xf32>
    %c0_i32_829 = arith.constant 0 : i32
    %589 = arith.sitofp %c0_i32_829 : i32 to f32
    %590 = vector.broadcast %589 : f32 to vector<8x11xf32>
    %591 = tpu.concatenate %590, %588 in 1 : vector<8x11xf32>, vector<8x100xf32> -> vector<8x111xf32>
    %592 = vector.broadcast %589 : f32 to vector<8x17xf32>
    %593 = tpu.concatenate %591, %592 in 1 : vector<8x111xf32>, vector<8x17xf32> -> vector<8x128xf32>
    %c0_830 = arith.constant 0 : index
    %c6_831 = arith.constant 6 : index
    %c0_832 = arith.constant 0 : index
    %c0_833 = arith.constant 0 : index
    %594 = vector.load %arg9[%c0_830, %c6_831, %c0_832, %c0_833] : memref<1x8x8x128xf32, #tpu.memory_space<vmem>>, vector<1x1x8x128xf32>
    %595 = vector.shape_cast %594 : vector<1x1x8x128xf32> to vector<8x128xf32>
    %596 = vector.shape_cast %593 : vector<8x128xf32> to vector<1x1x8x128xf32>
    tpu.vector_store %arg9[%c0_830, %c6_831, %c0_832, %c0_833], %596 {strides = array<i32>} : memref<1x8x8x128xf32, #tpu.memory_space<vmem>>, vector<1x1x8x128xf32>,
    %c8_i32_834 = arith.constant 8 : i32
    %597 = arith.muli %arg1, %c8_i32_834 : i32
    %c7_i32 = arith.constant 7 : i32
    %598 = arith.addi %597, %c7_i32 : i32
    %c8_i32_835 = arith.constant 8 : i32
    %599 = arith.cmpi slt, %598, %c8_i32_835 : i32
    %600 = arith.extui %599 : i1 to i32
    %601 = arith.sitofp %600 : i32 to f32
    %c0_836 = arith.constant 0 : index
    %c6_837 = arith.constant 6 : index
    %c0_838 = arith.constant 0 : index
    %c0_839 = arith.constant 0 : index
    %602 = vector.load %arg2[%c0_836, %c6_837, %c0_838, %c0_839] : memref<1x8x4x128xf32, #tpu.memory_space<vmem>>, vector<1x1x4x100xf32>
    %603 = vector.shape_cast %602 : vector<1x1x4x100xf32> to vector<4x100xf32>
    %c0_840 = arith.constant 0 : index
    %c6_841 = arith.constant 6 : index
    %c0_842 = arith.constant 0 : index
    %c1_843 = arith.constant 1 : index
    %604 = vector.load %arg2[%c0_840, %c6_841, %c0_842, %c1_843] : memref<1x8x4x128xf32, #tpu.memory_space<vmem>>, vector<1x1x4x100xf32>
    %605 = vector.shape_cast %604 : vector<1x1x4x100xf32> to vector<4x100xf32>
    %c0_844 = arith.constant 0 : index
    %c6_845 = arith.constant 6 : index
    %c0_846 = arith.constant 0 : index
    %c2_847 = arith.constant 2 : index
    %606 = vector.load %arg2[%c0_844, %c6_845, %c0_846, %c2_847] : memref<1x8x4x128xf32, #tpu.memory_space<vmem>>, vector<1x1x4x100xf32>
    %607 = vector.shape_cast %606 : vector<1x1x4x100xf32> to vector<4x100xf32>
    %c0_848 = arith.constant 0 : index
    %c6_849 = arith.constant 6 : index
    %c0_850 = arith.constant 0 : index
    %c10_851 = arith.constant 10 : index
    %608 = vector.load %arg2[%c0_848, %c6_849, %c0_850, %c10_851] : memref<1x8x4x128xf32, #tpu.memory_space<vmem>>, vector<1x1x4x100xf32>
    %609 = vector.shape_cast %608 : vector<1x1x4x100xf32> to vector<4x100xf32>
    %c0_852 = arith.constant 0 : index
    %c6_853 = arith.constant 6 : index
    %c0_854 = arith.constant 0 : index
    %c11_855 = arith.constant 11 : index
    %610 = vector.load %arg2[%c0_852, %c6_853, %c0_854, %c11_855] : memref<1x8x4x128xf32, #tpu.memory_space<vmem>>, vector<1x1x4x100xf32>
    %611 = vector.shape_cast %610 : vector<1x1x4x100xf32> to vector<4x100xf32>
    %c0_856 = arith.constant 0 : index
    %c6_857 = arith.constant 6 : index
    %c0_858 = arith.constant 0 : index
    %c12_859 = arith.constant 12 : index
    %612 = vector.load %arg2[%c0_856, %c6_857, %c0_858, %c12_859] : memref<1x8x4x128xf32, #tpu.memory_space<vmem>>, vector<1x1x4x100xf32>
    %613 = vector.shape_cast %612 : vector<1x1x4x100xf32> to vector<4x100xf32>
    %c0_860 = arith.constant 0 : index
    %c6_861 = arith.constant 6 : index
    %c0_862 = arith.constant 0 : index
    %c20_863 = arith.constant 20 : index
    %614 = vector.load %arg2[%c0_860, %c6_861, %c0_862, %c20_863] : memref<1x8x4x128xf32, #tpu.memory_space<vmem>>, vector<1x1x4x100xf32>
    %615 = vector.shape_cast %614 : vector<1x1x4x100xf32> to vector<4x100xf32>
    %c0_864 = arith.constant 0 : index
    %c6_865 = arith.constant 6 : index
    %c0_866 = arith.constant 0 : index
    %c21_867 = arith.constant 21 : index
    %616 = vector.load %arg2[%c0_864, %c6_865, %c0_866, %c21_867] : memref<1x8x4x128xf32, #tpu.memory_space<vmem>>, vector<1x1x4x100xf32>
    %617 = vector.shape_cast %616 : vector<1x1x4x100xf32> to vector<4x100xf32>
    %c0_868 = arith.constant 0 : index
    %c6_869 = arith.constant 6 : index
    %c0_870 = arith.constant 0 : index
    %c22_871 = arith.constant 22 : index
    %618 = vector.load %arg2[%c0_868, %c6_869, %c0_870, %c22_871] : memref<1x8x4x128xf32, #tpu.memory_space<vmem>>, vector<1x1x4x100xf32>
    %619 = vector.shape_cast %618 : vector<1x1x4x100xf32> to vector<4x100xf32>
    %c0_872 = arith.constant 0 : index
    %c7_873 = arith.constant 7 : index
    %c0_874 = arith.constant 0 : index
    %c0_875 = arith.constant 0 : index
    %620 = vector.load %arg2[%c0_872, %c7_873, %c0_874, %c0_875] : memref<1x8x4x128xf32, #tpu.memory_space<vmem>>, vector<1x1x4x100xf32>
    %621 = vector.shape_cast %620 : vector<1x1x4x100xf32> to vector<4x100xf32>
    %c0_876 = arith.constant 0 : index
    %c7_877 = arith.constant 7 : index
    %c0_878 = arith.constant 0 : index
    %c1_879 = arith.constant 1 : index
    %622 = vector.load %arg2[%c0_876, %c7_877, %c0_878, %c1_879] : memref<1x8x4x128xf32, #tpu.memory_space<vmem>>, vector<1x1x4x100xf32>
    %623 = vector.shape_cast %622 : vector<1x1x4x100xf32> to vector<4x100xf32>
    %c0_880 = arith.constant 0 : index
    %c7_881 = arith.constant 7 : index
    %c0_882 = arith.constant 0 : index
    %c2_883 = arith.constant 2 : index
    %624 = vector.load %arg2[%c0_880, %c7_881, %c0_882, %c2_883] : memref<1x8x4x128xf32, #tpu.memory_space<vmem>>, vector<1x1x4x100xf32>
    %625 = vector.shape_cast %624 : vector<1x1x4x100xf32> to vector<4x100xf32>
    %c0_884 = arith.constant 0 : index
    %c7_885 = arith.constant 7 : index
    %c0_886 = arith.constant 0 : index
    %c10_887 = arith.constant 10 : index
    %626 = vector.load %arg2[%c0_884, %c7_885, %c0_886, %c10_887] : memref<1x8x4x128xf32, #tpu.memory_space<vmem>>, vector<1x1x4x100xf32>
    %627 = vector.shape_cast %626 : vector<1x1x4x100xf32> to vector<4x100xf32>
    %c0_888 = arith.constant 0 : index
    %c7_889 = arith.constant 7 : index
    %c0_890 = arith.constant 0 : index
    %c11_891 = arith.constant 11 : index
    %628 = vector.load %arg2[%c0_888, %c7_889, %c0_890, %c11_891] : memref<1x8x4x128xf32, #tpu.memory_space<vmem>>, vector<1x1x4x100xf32>
    %629 = vector.shape_cast %628 : vector<1x1x4x100xf32> to vector<4x100xf32>
    %c0_892 = arith.constant 0 : index
    %c7_893 = arith.constant 7 : index
    %c0_894 = arith.constant 0 : index
    %c12_895 = arith.constant 12 : index
    %630 = vector.load %arg2[%c0_892, %c7_893, %c0_894, %c12_895] : memref<1x8x4x128xf32, #tpu.memory_space<vmem>>, vector<1x1x4x100xf32>
    %631 = vector.shape_cast %630 : vector<1x1x4x100xf32> to vector<4x100xf32>
    %c0_896 = arith.constant 0 : index
    %c7_897 = arith.constant 7 : index
    %c0_898 = arith.constant 0 : index
    %c20_899 = arith.constant 20 : index
    %632 = vector.load %arg2[%c0_896, %c7_897, %c0_898, %c20_899] : memref<1x8x4x128xf32, #tpu.memory_space<vmem>>, vector<1x1x4x100xf32>
    %633 = vector.shape_cast %632 : vector<1x1x4x100xf32> to vector<4x100xf32>
    %c0_900 = arith.constant 0 : index
    %c7_901 = arith.constant 7 : index
    %c0_902 = arith.constant 0 : index
    %c21_903 = arith.constant 21 : index
    %634 = vector.load %arg2[%c0_900, %c7_901, %c0_902, %c21_903] : memref<1x8x4x128xf32, #tpu.memory_space<vmem>>, vector<1x1x4x100xf32>
    %635 = vector.shape_cast %634 : vector<1x1x4x100xf32> to vector<4x100xf32>
    %c0_904 = arith.constant 0 : index
    %c7_905 = arith.constant 7 : index
    %c0_906 = arith.constant 0 : index
    %c22_907 = arith.constant 22 : index
    %636 = vector.load %arg2[%c0_904, %c7_905, %c0_906, %c22_907] : memref<1x8x4x128xf32, #tpu.memory_space<vmem>>, vector<1x1x4x100xf32>
    %637 = vector.shape_cast %636 : vector<1x1x4x100xf32> to vector<4x100xf32>
    %c0_908 = arith.constant 0 : index
    %c0_909 = arith.constant 0 : index
    %c0_910 = arith.constant 0 : index
    %c0_911 = arith.constant 0 : index
    %638 = vector.load %arg4[%c0_908, %c0_909, %c0_910, %c0_911] : memref<1x1x4x128xf32, #tpu.memory_space<vmem>>, vector<1x1x4x100xf32>
    %639 = vector.shape_cast %638 : vector<1x1x4x100xf32> to vector<4x100xf32>
    %cst_912 = arith.constant 0.000000e+00 : f32
    %640 = vector.broadcast %cst_912 : f32 to vector<4x100xf32>
    %641 = arith.select %1, %640, %639 : vector<4x100xf32>
    %c0_913 = arith.constant 0 : index
    %c0_914 = arith.constant 0 : index
    %c0_915 = arith.constant 0 : index
    %c1_916 = arith.constant 1 : index
    %642 = vector.load %arg4[%c0_913, %c0_914, %c0_915, %c1_916] : memref<1x1x4x128xf32, #tpu.memory_space<vmem>>, vector<1x1x4x100xf32>
    %643 = vector.shape_cast %642 : vector<1x1x4x100xf32> to vector<4x100xf32>
    %cst_917 = arith.constant 0.000000e+00 : f32
    %644 = vector.broadcast %cst_917 : f32 to vector<4x100xf32>
    %645 = arith.select %1, %644, %643 : vector<4x100xf32>
    %c0_918 = arith.constant 0 : index
    %c0_919 = arith.constant 0 : index
    %c0_920 = arith.constant 0 : index
    %c2_921 = arith.constant 2 : index
    %646 = vector.load %arg4[%c0_918, %c0_919, %c0_920, %c2_921] : memref<1x1x4x128xf32, #tpu.memory_space<vmem>>, vector<1x1x4x100xf32>
    %647 = vector.shape_cast %646 : vector<1x1x4x100xf32> to vector<4x100xf32>
    %cst_922 = arith.constant 0.000000e+00 : f32
    %648 = vector.broadcast %cst_922 : f32 to vector<4x100xf32>
    %649 = arith.select %1, %648, %647 : vector<4x100xf32>
    %c0_923 = arith.constant 0 : index
    %c0_924 = arith.constant 0 : index
    %c0_925 = arith.constant 0 : index
    %c10_926 = arith.constant 10 : index
    %650 = vector.load %arg4[%c0_923, %c0_924, %c0_925, %c10_926] : memref<1x1x4x128xf32, #tpu.memory_space<vmem>>, vector<1x1x4x100xf32>
    %651 = vector.shape_cast %650 : vector<1x1x4x100xf32> to vector<4x100xf32>
    %cst_927 = arith.constant 0.000000e+00 : f32
    %652 = vector.broadcast %cst_927 : f32 to vector<4x100xf32>
    %653 = arith.select %1, %652, %651 : vector<4x100xf32>
    %c0_928 = arith.constant 0 : index
    %c0_929 = arith.constant 0 : index
    %c0_930 = arith.constant 0 : index
    %c11_931 = arith.constant 11 : index
    %654 = vector.load %arg4[%c0_928, %c0_929, %c0_930, %c11_931] : memref<1x1x4x128xf32, #tpu.memory_space<vmem>>, vector<1x1x4x100xf32>
    %655 = vector.shape_cast %654 : vector<1x1x4x100xf32> to vector<4x100xf32>
    %cst_932 = arith.constant 0.000000e+00 : f32
    %656 = vector.broadcast %cst_932 : f32 to vector<4x100xf32>
    %657 = arith.select %1, %656, %655 : vector<4x100xf32>
    %c0_933 = arith.constant 0 : index
    %c0_934 = arith.constant 0 : index
    %c0_935 = arith.constant 0 : index
    %c12_936 = arith.constant 12 : index
    %658 = vector.load %arg4[%c0_933, %c0_934, %c0_935, %c12_936] : memref<1x1x4x128xf32, #tpu.memory_space<vmem>>, vector<1x1x4x100xf32>
    %659 = vector.shape_cast %658 : vector<1x1x4x100xf32> to vector<4x100xf32>
    %cst_937 = arith.constant 0.000000e+00 : f32
    %660 = vector.broadcast %cst_937 : f32 to vector<4x100xf32>
    %661 = arith.select %1, %660, %659 : vector<4x100xf32>
    %c0_938 = arith.constant 0 : index
    %c0_939 = arith.constant 0 : index
    %c0_940 = arith.constant 0 : index
    %c20_941 = arith.constant 20 : index
    %662 = vector.load %arg4[%c0_938, %c0_939, %c0_940, %c20_941] : memref<1x1x4x128xf32, #tpu.memory_space<vmem>>, vector<1x1x4x100xf32>
    %663 = vector.shape_cast %662 : vector<1x1x4x100xf32> to vector<4x100xf32>
    %cst_942 = arith.constant 0.000000e+00 : f32
    %664 = vector.broadcast %cst_942 : f32 to vector<4x100xf32>
    %665 = arith.select %1, %664, %663 : vector<4x100xf32>
    %c0_943 = arith.constant 0 : index
    %c0_944 = arith.constant 0 : index
    %c0_945 = arith.constant 0 : index
    %c21_946 = arith.constant 21 : index
    %666 = vector.load %arg4[%c0_943, %c0_944, %c0_945, %c21_946] : memref<1x1x4x128xf32, #tpu.memory_space<vmem>>, vector<1x1x4x100xf32>
    %667 = vector.shape_cast %666 : vector<1x1x4x100xf32> to vector<4x100xf32>
    %cst_947 = arith.constant 0.000000e+00 : f32
    %668 = vector.broadcast %cst_947 : f32 to vector<4x100xf32>
    %669 = arith.select %1, %668, %667 : vector<4x100xf32>
    %c0_948 = arith.constant 0 : index
    %c0_949 = arith.constant 0 : index
    %c0_950 = arith.constant 0 : index
    %c22_951 = arith.constant 22 : index
    %670 = vector.load %arg4[%c0_948, %c0_949, %c0_950, %c22_951] : memref<1x1x4x128xf32, #tpu.memory_space<vmem>>, vector<1x1x4x100xf32>
    %671 = vector.shape_cast %670 : vector<1x1x4x100xf32> to vector<4x100xf32>
    %cst_952 = arith.constant 0.000000e+00 : f32
    %672 = vector.broadcast %cst_952 : f32 to vector<4x100xf32>
    %673 = arith.select %1, %672, %671 : vector<4x100xf32>
    %674 = tpu.concatenate %603, %605, %607, %609, %611, %613, %615, %617, %619, %621, %623, %625, %627, %629, %631, %633 in 0 : vector<4x100xf32>, vector<4x100xf32>, vector<4x100xf32>, vector<4x100xf32>, vector<4x100xf32>, vector<4x100xf32>, vector<4x100xf32>, vector<4x100xf32>, vector<4x100xf32>, vector<4x100xf32>, vector<4x100xf32>, vector<4x100xf32>, vector<4x100xf32>, vector<4x100xf32>, vector<4x100xf32>, vector<4x100xf32> -> vector<64x100xf32>
    %675 = tpu.concatenate %635, %637, %641, %645, %649, %653, %657, %661, %665, %669, %673 in 0 : vector<4x100xf32>, vector<4x100xf32>, vector<4x100xf32>, vector<4x100xf32>, vector<4x100xf32>, vector<4x100xf32>, vector<4x100xf32>, vector<4x100xf32>, vector<4x100xf32>, vector<4x100xf32>, vector<4x100xf32> -> vector<44x100xf32>
    %676 = tpu.concatenate %674, %675 in 0 : vector<64x100xf32>, vector<44x100xf32> -> vector<108x100xf32>
    %cst_953 = arith.constant dense<0.000000e+00> : vector<8x100xf32>
    %677 = tpu.matmul %2, %676, %cst_953 {dimension_numbers = #tpu.dot_dimension_numbers<[1], [0], [0], [1], [0, 0, 1, 1], [], []>} : vector<8x108xf32>, vector<108x100xf32>, vector<8x100xf32> -> vector<8x100xf32>
    %678 = vector.broadcast %3 : vector<8x1xf32> to vector<8x100xf32>
    %679 = arith.mulf %677, %678 : vector<8x100xf32>
    %680 = vector.broadcast %4 : vector<8x1xf32> to vector<8x100xf32>
    %681 = arith.addf %679, %680 : vector<8x100xf32>
    %cst_954 = arith.constant 0.000000e+00 : f32
    %682 = vector.broadcast %cst_954 : f32 to vector<8x100xf32>
    %683 = arith.maximumf %681, %682 : vector<8x100xf32>
    %c0_955 = arith.constant 0 : index
    %c0_956 = arith.constant 0 : index
    %684 = vector.load %arg8[%c0_955, %c0_956] : memref<1x100xf32, #tpu.memory_space<vmem>>, vector<1x100xf32>
    %685 = vector.broadcast %601 : f32 to vector<1x100xf32>
    %686 = arith.mulf %684, %685 : vector<1x100xf32>
    %687 = vector.broadcast %686 : vector<1x100xf32> to vector<8x100xf32>
    %688 = arith.mulf %683, %687 : vector<8x100xf32>
    %c0_i32_957 = arith.constant 0 : i32
    %689 = arith.sitofp %c0_i32_957 : i32 to f32
    %690 = vector.broadcast %689 : f32 to vector<8x11xf32>
    %691 = tpu.concatenate %690, %688 in 1 : vector<8x11xf32>, vector<8x100xf32> -> vector<8x111xf32>
    %692 = vector.broadcast %689 : f32 to vector<8x17xf32>
    %693 = tpu.concatenate %691, %692 in 1 : vector<8x111xf32>, vector<8x17xf32> -> vector<8x128xf32>
    %c0_958 = arith.constant 0 : index
    %c7_959 = arith.constant 7 : index
    %c0_960 = arith.constant 0 : index
    %c0_961 = arith.constant 0 : index
    %694 = vector.load %arg9[%c0_958, %c7_959, %c0_960, %c0_961] : memref<1x8x8x128xf32, #tpu.memory_space<vmem>>, vector<1x1x8x128xf32>
    %695 = vector.shape_cast %694 : vector<1x1x8x128xf32> to vector<8x128xf32>
    %696 = vector.shape_cast %693 : vector<8x128xf32> to vector<1x1x8x128xf32>
    tpu.vector_store %arg9[%c0_958, %c7_959, %c0_960, %c0_961], %696 {strides = array<i32>} : memref<1x8x8x128xf32, #tpu.memory_space<vmem>>, vector<1x1x8x128xf32>,
    return
  }
  func.func @transform_0(%arg0: i32, %arg1: i32) -> (i32, i32, i32, i32) {
    %c0_i32 = arith.constant 0 : i32
    %c0_i32_0 = arith.constant 0 : i32
    %c0_i32_1 = arith.constant 0 : i32
    return %arg0, %arg1, %c0_i32, %c0_i32_0 : i32, i32, i32, i32
  }
  func.func @transform_1(%arg0: i32, %arg1: i32) -> (i32, i32, i32, i32) {
    %c8_i32 = arith.constant 8 : i32
    %0 = arith.muli %arg1, %c8_i32 : i32
    %c1_i32 = arith.constant 1 : i32
    %1 = arith.subi %0, %c1_i32 : i32
    %c0_i32 = arith.constant 0 : i32
    %2 = arith.maxsi %1, %c0_i32 : i32
    %c0_i32_0 = arith.constant 0 : i32
    %c0_i32_1 = arith.constant 0 : i32
    %c0_i32_2 = arith.constant 0 : i32
    return %arg0, %2, %c0_i32_0, %c0_i32_1 : i32, i32, i32, i32
  }
  func.func @transform_2(%arg0: i32, %arg1: i32) -> (i32, i32, i32, i32) {
    %c1_i32 = arith.constant 1 : i32
    %0 = arith.addi %arg1, %c1_i32 : i32
    %c8_i32 = arith.constant 8 : i32
    %1 = arith.muli %0, %c8_i32 : i32
    %c7_i32 = arith.constant 7 : i32
    %2 = arith.minsi %1, %c7_i32 : i32
    %c0_i32 = arith.constant 0 : i32
    %c0_i32_0 = arith.constant 0 : i32
    %c0_i32_1 = arith.constant 0 : i32
    return %arg0, %2, %c0_i32, %c0_i32_0 : i32, i32, i32, i32
  }
  func.func @transform_3(%arg0: i32, %arg1: i32) -> (i32, i32) {
    %c0_i32 = arith.constant 0 : i32
    %c0_i32_0 = arith.constant 0 : i32
    %c0_i32_1 = arith.constant 0 : i32
    return %c0_i32, %c0_i32_0 : i32, i32
  }
  func.func @transform_4(%arg0: i32, %arg1: i32) -> (i32, i32) {
    %c0_i32 = arith.constant 0 : i32
    %c0_i32_0 = arith.constant 0 : i32
    %c0_i32_1 = arith.constant 0 : i32
    return %c0_i32, %c0_i32_0 : i32, i32
  }
  func.func @transform_5(%arg0: i32, %arg1: i32) -> (i32, i32) {
    %c0_i32 = arith.constant 0 : i32
    %c0_i32_0 = arith.constant 0 : i32
    %c0_i32_1 = arith.constant 0 : i32
    return %c0_i32, %c0_i32_0 : i32, i32
  }
  func.func @transform_6(%arg0: i32, %arg1: i32) -> (i32, i32) {
    %c0_i32 = arith.constant 0 : i32
    %c0_i32_0 = arith.constant 0 : i32
    %c0_i32_1 = arith.constant 0 : i32
    return %c0_i32, %c0_i32_0 : i32, i32
  }
  func.func @transform_7(%arg0: i32, %arg1: i32) -> (i32, i32, i32, i32) {
    %c0_i32 = arith.constant 0 : i32
    %c0_i32_0 = arith.constant 0 : i32
    %c0_i32_1 = arith.constant 0 : i32
    return %arg0, %arg1, %c0_i32, %c0_i32_0 : i32, i32, i32, i32
  }
}

</mosaic_0001>

<llo_original>
// kernel: tpu_custom_call.1
$region0: #{tpu_custom_call.1}
  #allocation0 [shape = 'u32[]', space=smem, size = 0x4, offset = 0x4, fixed_abs, tag = 'smem constant byte address 0x4 - core index']
  #allocation1 [shape = 'u32[72,128]{1,0:T(1,128)}', space=vmem, size = 0x9000, scoped, tag = 'internal scratch']
  %s0 = inlined_call_operand.hbm [shape: f32[2,8,4,128], index: 0, kind: input, shape index: {}]
  %s1 = inlined_call_operand.hbm [shape: f32[2,8,4,128], index: 1, kind: input, shape index: {}]
  %s2 = inlined_call_operand.hbm [shape: f32[2,8,4,128], index: 2, kind: input, shape index: {}]
  %s3 = inlined_call_operand.vmem [shape: f32[8,108], index: 3, kind: input, shape index: {}]
  %s4 = inlined_call_operand.vmem [shape: f32[8,1], index: 4, kind: input, shape index: {}]
  %s5 = inlined_call_operand.vmem [shape: f32[8,1], index: 5, kind: input, shape index: {}]
  %s6 = inlined_call_operand.vmem [shape: f32[1,100], index: 6, kind: input, shape index: {}]
  %s7 = inlined_call_operand.hbm [shape: f32[2,8,8,128], index: 7, kind: output, shape index: {}]
  %s8 = sld [smem:[#allocation0]]
  $region73: #{tpu_custom_call.1} parent=0
    _
  %s10 = ssub.s32 1, %s8
  %s11 = scalar_select 0, %s10, %s8
  $region1: #{tpu_custom_call.1} parent=0
    #allocation2 [shape = 'u8[32768]{0}', space=vmem, size = 0x8000, scoped, tag = 'input window, operand 0']
    #allocation3 [shape = 's32[2]{0}', space=sflag, size = 0x8, scoped, tag = 'scoped memory for tpu_custom_call.1']
    #allocation4 [shape = 's32[2]{0}', space=sflag, size = 0x8, scoped, tag = 'scoped memory for tpu_custom_call.1']
    #allocation5 [shape = 'u8[4096]{0}', space=vmem, size = 0x1000, scoped, tag = 'input window, operand 1']
    #allocation6 [shape = 's32[2]{0}', space=sflag, size = 0x8, scoped, tag = 'scoped memory for tpu_custom_call.1']
    #allocation7 [shape = 'u8[4096]{0}', space=vmem, size = 0x1000, scoped, tag = 'input window, operand 2']
    #allocation8 [shape = 'u8[65536]{0}', space=vmem, size = 0x10000, scoped, tag = 'output window, operand 0']
    %12 = vsyncpa [#allocation3], 0
    %s13 = scalar_lea.sflag [#allocation3], 1
    %14 = vsyncpa %s13, 0
    %15 = vsyncpa [#allocation6], 0
    %s16 = scalar_lea.sflag [#allocation6], 1
    %17 = vsyncpa %s16, 0
    %18 = vsyncpa [#allocation4], 0
    %s19 = scalar_lea.sflag [#allocation4], 1
    %20 = vsyncpa %s19, 0
    loop: start=0, step=1, limit=4
    $region2: #{tpu_custom_call.1} parent=1 // loop_pre_header
      _
    $region3: #{tpu_custom_call.1} parent=1 // loop_header
      %s22 = sphi 0, %s26
      %p23 = scmp.ge.s32.totalorder %s22, 4
      %s29 = sphi 0, %s41
      %s30 = sphi 0, %s37
      %s31 = sphi 0, %s29
      %s32 = sphi 0, %s30
      %s33 = sphi 0, %s31
      %s34 = sphi 0, %s32
      %s46 = sphi 0, %s48
      %s49 = sphi 0, %s46
      %s50 = sphi 0, %s49
      %s66 = sphi 0, %s50
      %s82 = sphi 0, %s84
      %s85 = sphi 0, %s82
      %s86 = sphi 0, %s85
      %s102 = sphi 0, %s86
      %s118 = sphi 0, %s120
      %s121 = sphi 0, %s118
      %s122 = sphi 0, %s121
      %s138 = sphi 0, %s122
      %s142 = sphi 0, %s142
      %s144 = sphi 0, %s142
      %s145 = sphi 0, %s144
      %s159 = sphi 0, %s145
      %s163 = sphi 0, %s163
      %s165 = sphi 0, %s163
      %s166 = sphi 0, %s165
      %s180 = sphi 0, %s166
      %s184 = sphi 0, %s184
      %s186 = sphi 0, %s184
      %s187 = sphi 0, %s186
      %s201 = sphi 0, %s187
      %s205 = sphi 0, %s205
      %s207 = sphi 0, %s205
      %s208 = sphi 0, %s207
      %s222 = sphi 0, %s208
      %s230 = sphi 0, %s232
      %s233 = sphi 0, %s230
      %s234 = sphi 0, %s233
      %s250 = sphi 0, %s234
    $region4: #{tpu_custom_call.1} parent=1 // loop_header_branch
      %25 = sbr.rel (%p23) target = $region8
    $region5: #{tpu_custom_call.1} parent=1 // loop_body
      %s27 = ssub.s32 %s22, 1
      %s28 = ssub.s32 %s22, 2
      %s35 = sadd.s32 1, %s30
      %p36 = scmp.ge.s32.totalorder %s35, 1
      %s37 = scalar_select %p36, 0, %s35
      %s38 = sadd.s32 1, %s29
      %s39 = scalar_select %p36, %s38, %s29
      %p40 = scmp.ge.s32.totalorder %s39, 2
      %s41 = scalar_select %p40, 0, %s39
      %s42 = ssub.s32 %s29, %s41
      %s43 = ssub.s32 %s30, %s37
      %s44 = sor.u32 %s42, %s43
      %p45 = scmp.eq.s32.totalorder %s44, 0
      %s47 = sadd.s32 %s46, 1
      %s48 = scalar_select %p45, %s46, %s47
      %p51 = pneg %p45
      %p52 = scmp.eq.s32.totalorder %s22, 1
      %p53 = por %p51, %p52
      %p54 = scmp.ne.s32.totalorder %s46, %s49
      %p55 = scmp.eq.s32.totalorder %s22, 0
      %p56 = por %p54, %p55
      %p57 = scmp.ne.s32.totalorder %s46, %s49
      %p58 = scmp.eq.s32.totalorder %s27, 1
      %p59 = por %p57, %p58
      %p60 = scmp.ne.s32.totalorder %s49, %s50
      %p61 = scmp.eq.s32.totalorder %s27, 0
      %p62 = por %p60, %p61
      %p63 = scmp.ne.s32.totalorder %s49, %s50
      %p64 = scmp.eq.s32.totalorder %s28, 1
      %p65 = por %p63, %p64
      %p67 = scmp.ne.s32.totalorder %s50, %s66
      %p68 = scmp.eq.s32.totalorder %s28, 0
      %p69 = por %p67, %p68
      %s70 = smul.u32 %s30, 8
      %s71 = ssub.s32 %s70, 1
      %p72 = scmp.gt.s32.totalorder %s71, 0
      %s73 = scalar_select %p72, %s71, 0
      %s74 = smul.u32 %s37, 8
      %s75 = ssub.s32 %s74, 1
      %p76 = scmp.gt.s32.totalorder %s75, 0
      %s77 = scalar_select %p76, %s75, 0
      %s78 = ssub.s32 %s29, %s41
      %s79 = ssub.s32 %s73, %s77
      %s80 = sor.u32 %s78, %s79
      %p81 = scmp.eq.s32.totalorder %s80, 0
      %s83 = sadd.s32 %s82, 1
      %s84 = scalar_select %p81, %s82, %s83
      %p87 = pneg %p81
      %p88 = scmp.eq.s32.totalorder %s22, 1
      %p89 = por %p87, %p88
      %p90 = scmp.ne.s32.totalorder %s82, %s85
      %p91 = scmp.eq.s32.totalorder %s22, 0
      %p92 = por %p90, %p91
      %p93 = scmp.ne.s32.totalorder %s82, %s85
      %p94 = scmp.eq.s32.totalorder %s27, 1
      %p95 = por %p93, %p94
      %p96 = scmp.ne.s32.totalorder %s85, %s86
      %p97 = scmp.eq.s32.totalorder %s27, 0
      %p98 = por %p96, %p97
      %p99 = scmp.ne.s32.totalorder %s85, %s86
      %p100 = scmp.eq.s32.totalorder %s28, 1
      %p101 = por %p99, %p100
      %p103 = scmp.ne.s32.totalorder %s86, %s102
      %p104 = scmp.eq.s32.totalorder %s28, 0
      %p105 = por %p103, %p104
      %s106 = sadd.s32 %s30, 1
      %s107 = smul.u32 %s106, 8
      %p108 = scmp.lt.s32.totalorder %s107, 7
      %s109 = scalar_select %p108, %s107, 7
      %s110 = sadd.s32 %s37, 1
      %s111 = smul.u32 %s110, 8
      %p112 = scmp.lt.s32.totalorder %s111, 7
      %s113 = scalar_select %p112, %s111, 7
      %s114 = ssub.s32 %s29, %s41
      %s115 = ssub.s32 %s109, %s113
      %s116 = sor.u32 %s114, %s115
      %p117 = scmp.eq.s32.totalorder %s116, 0
      %s119 = sadd.s32 %s118, 1
      %s120 = scalar_select %p117, %s118, %s119
      %p123 = pneg %p117
      %p124 = scmp.eq.s32.totalorder %s22, 1
      %p125 = por %p123, %p124
      %p126 = scmp.ne.s32.totalorder %s118, %s121
      %p127 = scmp.eq.s32.totalorder %s22, 0
      %p128 = por %p126, %p127
      %p129 = scmp.ne.s32.totalorder %s118, %s121
      %p130 = scmp.eq.s32.totalorder %s27, 1
      %p131 = por %p129, %p130
      %p132 = scmp.ne.s32.totalorder %s121, %s122
      %p133 = scmp.eq.s32.totalorder %s27, 0
      %p134 = por %p132, %p133
      %p135 = scmp.ne.s32.totalorder %s121, %s122
      %p136 = scmp.eq.s32.totalorder %s28, 1
      %p137 = por %p135, %p136
      %p139 = scmp.ne.s32.totalorder %s122, %s138
      %p140 = scmp.eq.s32.totalorder %s28, 0
      %p141 = por %p139, %p140
      %s143 = sadd.s32 %s142, 1
      %p146 = scmp.eq.s32.totalorder %s22, 1
      %p147 = scmp.ne.s32.totalorder %s142, %s144
      %p148 = scmp.eq.s32.totalorder %s22, 0
      %p149 = por %p147, %p148
      %p150 = scmp.ne.s32.totalorder %s142, %s144
      %p151 = scmp.eq.s32.totalorder %s27, 1
      %p152 = por %p150, %p151
      %p153 = scmp.ne.s32.totalorder %s144, %s145
      %p154 = scmp.eq.s32.totalorder %s27, 0
      %p155 = por %p153, %p154
      %p156 = scmp.ne.s32.totalorder %s144, %s145
      %p157 = scmp.eq.s32.totalorder %s28, 1
      %p158 = por %p156, %p157
      %p160 = scmp.ne.s32.totalorder %s145, %s159
      %p161 = scmp.eq.s32.totalorder %s28, 0
      %p162 = por %p160, %p161
      %s164 = sadd.s32 %s163, 1
      %p167 = scmp.eq.s32.totalorder %s22, 1
      %p168 = scmp.ne.s32.totalorder %s163, %s165
      %p169 = scmp.eq.s32.totalorder %s22, 0
      %p170 = por %p168, %p169
      %p171 = scmp.ne.s32.totalorder %s163, %s165
      %p172 = scmp.eq.s32.totalorder %s27, 1
      %p173 = por %p171, %p172
      %p174 = scmp.ne.s32.totalorder %s165, %s166
      %p175 = scmp.eq.s32.totalorder %s27, 0
      %p176 = por %p174, %p175
      %p177 = scmp.ne.s32.totalorder %s165, %s166
      %p178 = scmp.eq.s32.totalorder %s28, 1
      %p179 = por %p177, %p178
      %p181 = scmp.ne.s32.totalorder %s166, %s180
      %p182 = scmp.eq.s32.totalorder %s28, 0
      %p183 = por %p181, %p182
      %s185 = sadd.s32 %s184, 1
      %p188 = scmp.eq.s32.totalorder %s22, 1
      %p189 = scmp.ne.s32.totalorder %s184, %s186
      %p190 = scmp.eq.s32.totalorder %s22, 0
      %p191 = por %p189, %p190
      %p192 = scmp.ne.s32.totalorder %s184, %s186
      %p193 = scmp.eq.s32.totalorder %s27, 1
      %p194 = por %p192, %p193
      %p195 = scmp.ne.s32.totalorder %s186, %s187
      %p196 = scmp.eq.s32.totalorder %s27, 0
      %p197 = por %p195, %p196
      %p198 = scmp.ne.s32.totalorder %s186, %s187
      %p199 = scmp.eq.s32.totalorder %s28, 1
      %p200 = por %p198, %p199
      %p202 = scmp.ne.s32.totalorder %s187, %s201
      %p203 = scmp.eq.s32.totalorder %s28, 0
      %p204 = por %p202, %p203
      %s206 = sadd.s32 %s205, 1
      %p209 = scmp.eq.s32.totalorder %s22, 1
      %p210 = scmp.ne.s32.totalorder %s205, %s207
      %p211 = scmp.eq.s32.totalorder %s22, 0
      %p212 = por %p210, %p211
      %p213 = scmp.ne.s32.totalorder %s205, %s207
      %p214 = scmp.eq.s32.totalorder %s27, 1
      %p215 = por %p213, %p214
      %p216 = scmp.ne.s32.totalorder %s207, %s208
      %p217 = scmp.eq.s32.totalorder %s27, 0
      %p218 = por %p216, %p217
      %p219 = scmp.ne.s32.totalorder %s207, %s208
      %p220 = scmp.eq.s32.totalorder %s28, 1
      %p221 = por %p219, %p220
      %p223 = scmp.ne.s32.totalorder %s208, %s222
      %p224 = scmp.eq.s32.totalorder %s28, 0
      %p225 = por %p223, %p224
      %s226 = ssub.s32 %s29, %s41
      %s227 = ssub.s32 %s30, %s37
      %s228 = sor.u32 %s226, %s227
      %p229 = scmp.eq.s32.totalorder %s228, 0
      %s231 = sadd.s32 %s230, 1
      %s232 = scalar_select %p229, %s230, %s231
      %p235 = pneg %p229
      %p236 = scmp.eq.s32.totalorder %s22, 1
      %p237 = por %p235, %p236
      %p238 = scmp.ne.s32.totalorder %s230, %s233
      %p239 = scmp.eq.s32.totalorder %s22, 0
      %p240 = por %p238, %p239
      %p241 = scmp.ne.s32.totalorder %s230, %s233
      %p242 = scmp.eq.s32.totalorder %s27, 1
      %p243 = por %p241, %p242
      %p244 = scmp.ne.s32.totalorder %s233, %s234
      %p245 = scmp.eq.s32.totalorder %s27, 0
      %p246 = por %p244, %p245
      %p247 = scmp.ne.s32.totalorder %s233, %s234
      %p248 = scmp.eq.s32.totalorder %s28, 1
      %p249 = por %p247, %p248
      %p251 = scmp.ne.s32.totalorder %s234, %s250
      %p252 = scmp.eq.s32.totalorder %s28, 0
      %p253 = por %p251, %p252
      %p254 = scmp.le.s32.totalorder 1, %s22
      %p255 = scmp.lt.s32.totalorder %s22, 3
      %p256 = pnand %p254, %p255
      %p257 = pneg %p256
      // Predicated region
      $region9: #{tpu_custom_call.1} parent=5 // pred_check
        _
      $region10: #{tpu_custom_call.1} parent=5 // pred_check_branch
        %259 = sbr.rel (%p256) target = $region12
      $region11: #{tpu_custom_call.1} parent=5 // pred_region
        %s260 = ssub.s32 %s22, 1
        // Predicated region
        $region13: #{tpu_custom_call.1} parent=11 // pred_check
          %p261 = pneg %p155
        $region14: #{tpu_custom_call.1} parent=11 // pred_check_branch
          %263 = sbr.rel (%p261) target = $region16
        $region15: #{tpu_custom_call.1} parent=11 // pred_region
          _
        $region16: #{tpu_custom_call.1} parent=11 // pred_fallthru
          _
        // Predicated region
        $region17: #{tpu_custom_call.1} parent=11 // pred_check
          %p264 = pneg %p176
        $region18: #{tpu_custom_call.1} parent=11 // pred_check_branch
          %266 = sbr.rel (%p264) target = $region20
        $region19: #{tpu_custom_call.1} parent=11 // pred_region
          _
        $region20: #{tpu_custom_call.1} parent=11 // pred_fallthru
          _
        // Predicated region
        $region21: #{tpu_custom_call.1} parent=11 // pred_check
          %p267 = pneg %p197
        $region22: #{tpu_custom_call.1} parent=11 // pred_check_branch
          %269 = sbr.rel (%p267) target = $region24
        $region23: #{tpu_custom_call.1} parent=11 // pred_region
          _
        $region24: #{tpu_custom_call.1} parent=11 // pred_fallthru
          _
        // Predicated region
        $region25: #{tpu_custom_call.1} parent=11 // pred_check
          %p270 = pneg %p218
        $region26: #{tpu_custom_call.1} parent=11 // pred_check_branch
          %272 = sbr.rel (%p270) target = $region28
        $region27: #{tpu_custom_call.1} parent=11 // pred_region
          _
        $region28: #{tpu_custom_call.1} parent=11 // pred_fallthru
          _
      $region12: #{tpu_custom_call.1} parent=5 // pred_fallthru
        _
      %p273 = scmp.lt.s32.totalorder %s22, 2
      // Predicated region
      $region29: #{tpu_custom_call.1} parent=5 // pred_check
        %p274 = pneg %p273
      $region30: #{tpu_custom_call.1} parent=5 // pred_check_branch
        %276 = sbr.rel (%p274) target = $region32
      $region31: #{tpu_custom_call.1} parent=5 // pred_region
        // Predicated region
        $region33: #{tpu_custom_call.1} parent=31 // pred_check
          %p277 = pneg %p56
        $region34: #{tpu_custom_call.1} parent=31 // pred_check_branch
          %279 = sbr.rel (%p277) target = $region36
        $region35: #{tpu_custom_call.1} parent=31 // pred_region
          %s280 = sand.u32 %s46, 1
          %s281 = scalar_lea.sflag [#allocation3], %s280
          %s282 = sand.u32 %s46, 1
          %s283 = smul.addr %s282, 32
          %s284 = scalar_lea.vmem [#allocation2], %s283
          %s285 = smul.u32 8, %s30
          %287 = vsyncadd %s281, 0
          %s288 = smul.addr %s29, 8
          %s289 = sadd.s32 %s285, %s288
          %s290 = smul.addr %s289, 4
          %s291 = scalar_lea.hbm %s0, %s290
          %s292 = sshll.u32 %s291, 4
          %s293 = int_to_ptr.hbm [resolvable:$true] %s292
          %s294 = sshll.u32 %s284, 4
          %s295 = int_to_ptr.vmem [resolvable:$true] %s294
          %300 = dma.hbm_to_vmem [thread:$0]  %s293, 512, %s295, %s281, 64, 64, 4
        $region36: #{tpu_custom_call.1} parent=31 // pred_fallthru
          _
        // Predicated region
        $region37: #{tpu_custom_call.1} parent=31 // pred_check
          %p301 = pneg %p92
        $region38: #{tpu_custom_call.1} parent=31 // pred_check_branch
          %303 = sbr.rel (%p301) target = $region40
        $region39: #{tpu_custom_call.1} parent=31 // pred_region
          %s304 = sand.u32 %s22, 1
          %s305 = scalar_lea.sflag [#allocation6], %s304
          %s306 = sand.u32 %s82, 1
          %s307 = smul.addr %s306, 4
          %s308 = scalar_lea.vmem [#allocation5], %s307
          %s309 = smul.u32 %s30, 8
          %s310 = ssub.s32 %s309, 1
          %p311 = scmp.gt.s32.totalorder %s310, 0
          %s312 = scalar_select %p311, %s310, 0
          %314 = vsyncadd %s305, 0
          %s315 = smul.addr %s29, 8
          %s316 = sadd.s32 %s312, %s315
          %s317 = smul.addr %s316, 4
          %s318 = scalar_lea.hbm %s1, %s317
          %s320 = sshll.u32 %s318, 4
          %s321 = int_to_ptr.hbm [resolvable:$true] %s320
          %s322 = sshll.u32 %s308, 4
          %s323 = int_to_ptr.vmem [resolvable:$true] %s322
          %325 = dma.hbm_to_vmem [thread:$0]  %s321, 64, %s323, %s305
        $region40: #{tpu_custom_call.1} parent=31 // pred_fallthru
          _
        // Predicated region
        $region41: #{tpu_custom_call.1} parent=31 // pred_check
          %p326 = pneg %p128
        $region42: #{tpu_custom_call.1} parent=31 // pred_check_branch
          %328 = sbr.rel (%p326) target = $region44
        $region43: #{tpu_custom_call.1} parent=31 // pred_region
          %s329 = sand.u32 %s22, 1
          %s330 = scalar_lea.sflag [#allocation6], %s329
          %s331 = sand.u32 %s118, 1
          %s332 = smul.addr %s331, 4
          %s333 = scalar_lea.vmem [#allocation7], %s332
          %s334 = sadd.s32 %s30, 1
          %s335 = smul.u32 %s334, 8
          %p336 = scmp.lt.s32.totalorder %s335, 7
          %s337 = scalar_select %p336, %s335, 7
          %339 = vsyncadd %s330, 0
          %s340 = smul.addr %s29, 8
          %s341 = sadd.s32 %s337, %s340
          %s342 = smul.addr %s341, 4
          %s343 = scalar_lea.hbm %s2, %s342
          %s345 = sshll.u32 %s343, 4
          %s346 = int_to_ptr.hbm [resolvable:$true] %s345
          %s347 = sshll.u32 %s333, 4
          %s348 = int_to_ptr.vmem [resolvable:$true] %s347
          %350 = dma.hbm_to_vmem [thread:$0]  %s346, 64, %s348, %s330
        $region44: #{tpu_custom_call.1} parent=31 // pred_fallthru
          _
      $region32: #{tpu_custom_call.1} parent=5 // pred_fallthru
        _
      %p351 = scmp.le.s32.totalorder 1, %s22
      %p352 = scmp.lt.s32.totalorder %s22, 3
      %p353 = pnand %p351, %p352
      %p354 = pneg %p353
      // Predicated region
      $region45: #{tpu_custom_call.1} parent=5 // pred_check
        _
      $region46: #{tpu_custom_call.1} parent=5 // pred_check_branch
        %356 = sbr.rel (%p353) target = $region48
      $region47: #{tpu_custom_call.1} parent=5 // pred_region
        %s357 = ssub.s32 %s22, 1
        %s358 = sand.u32 %s49, 1
        %s359 = scalar_lea.sflag [#allocation3], %s358
        %s360 = sand.u32 %s49, 1
        %s361 = smul.addr %s360, 32
        %s362 = scalar_lea.vmem [#allocation2], %s361
        // Predicated region
        $region49: #{tpu_custom_call.1} parent=47 // pred_check
          %p363 = pneg %p62
        $region50: #{tpu_custom_call.1} parent=47 // pred_check_branch
          %365 = sbr.rel (%p363) target = $region52
        $region51: #{tpu_custom_call.1} parent=47 // pred_region
          %367 = dma.done %s359, 512
        $region52: #{tpu_custom_call.1} parent=47 // pred_fallthru
          _
        %s368 = sand.u32 %s27, 1
        %s369 = scalar_lea.sflag [#allocation6], %s368
        %s370 = sand.u32 %s85, 1
        %s371 = smul.addr %s370, 4
        %s372 = scalar_lea.vmem [#allocation5], %s371
        // Predicated region
        $region53: #{tpu_custom_call.1} parent=47 // pred_check
          %p373 = pneg %p98
        $region54: #{tpu_custom_call.1} parent=47 // pred_check_branch
          %375 = sbr.rel (%p373) target = $region56
        $region55: #{tpu_custom_call.1} parent=47 // pred_region
          %377 = dma.done %s369, 64
        $region56: #{tpu_custom_call.1} parent=47 // pred_fallthru
          _
        %s378 = sand.u32 %s27, 1
        %s379 = scalar_lea.sflag [#allocation6], %s378
        %s380 = sand.u32 %s121, 1
        %s381 = smul.addr %s380, 4
        %s382 = scalar_lea.vmem [#allocation7], %s381
        // Predicated region
        $region57: #{tpu_custom_call.1} parent=47 // pred_check
          %p383 = pneg %p134
        $region58: #{tpu_custom_call.1} parent=47 // pred_check_branch
          %385 = sbr.rel (%p383) target = $region60
        $region59: #{tpu_custom_call.1} parent=47 // pred_region
          %387 = dma.done %s379, 64
        $region60: #{tpu_custom_call.1} parent=47 // pred_fallthru
          _
        %s388 = sand.u32 %s49, 1
        %s389 = scalar_lea.sflag [#allocation3], %s388
        %s390 = sand.u32 %s49, 1
        %s391 = smul.addr %s390, 32
        %s392 = scalar_lea.vmem [#allocation2], %s391
        %p393 = pneg %p62
        %p394 = pneg %p59
        %s395 = sand.u32 %s27, 1
        %s396 = scalar_lea.sflag [#allocation6], %s395
        %s397 = sand.u32 %s85, 1
        %s398 = smul.addr %s397, 4
        %s399 = scalar_lea.vmem [#allocation5], %s398
        %p400 = pneg %p98
        %p401 = pneg %p95
        %s402 = sand.u32 %s27, 1
        %s403 = scalar_lea.sflag [#allocation6], %s402
        %s404 = sand.u32 %s121, 1
        %s405 = smul.addr %s404, 4
        %s406 = scalar_lea.vmem [#allocation7], %s405
        %p407 = pneg %p134
        %p408 = pneg %p131
        %p409 = pneg %p155
        %p410 = pneg %p152
        %p411 = pneg %p176
        %p412 = pneg %p173
        %p413 = pneg %p197
        %p414 = pneg %p194
        %p415 = pneg %p218
        %p416 = pneg %p215
        %p417 = pneg %p246
        %p418 = pneg %p243
        %s419 = sand.u32 %s233, 1
        %s420 = scalar_lea.sflag [#allocation4], %s419
        %s421 = sand.u32 %s233, 1
        %s422 = smul.addr %s421, 64
        %s423 = scalar_lea.vmem [#allocation8], %s422
        %s424 = smul.u32 8, %s32
        %s425 = smul.u32 %s32, 8
        %s426 = ssub.s32 %s425, 1
        %p427 = scmp.gt.s32.totalorder %s426, 0
        %s428 = scalar_select %p427, %s426, 0
        %s429 = sadd.s32 %s32, 1
        %s430 = smul.u32 %s429, 8
        %p431 = scmp.lt.s32.totalorder %s430, 7
        %s432 = scalar_select %p431, %s430, 7
        %s433 = smul.u32 8, %s32
        %p434 = scmp.eq.s32.totalorder %s32, 0
        %v435 = vld [vmem:[%s3] sm:$0xff]
        %v436 = vld [vmem:[%s4] sm:$0xff]
        %v437 = vld [vmem:[%s5] sm:$0xff]
        %s438 = smul.u32 %s32, 8
        %p439 = scmp.lt.s32.totalorder %s438, 8
        %s440 = scalar_select %p439, 1, 0
        %s441 = scvt.s32.f32 %s440
        %v442 = vld [vmem:[%s372] sm:$0xf]
        %s443 = scalar_select %p434, 1, 0
        %v444 = vstv %s443
        %vm445 = vcmp.eq.s32.totalorder %v444, 1
        %v446 = vsel %vm445, 0.0, %v442
        %v447 = vld [vmem:[%s362] sm:$0xf]
        %s448 = scalar_lea.vmem %s362, 4 [#allocation2]
        %v449 = vld [vmem:[%s448] sm:$0xf]
        %v451 = vrot.slane %v446, 4
        %452 = vrot.lane.b32.xlu0 %v451, 127
        %v453 = vpop.permute.xlu0 %452
        %455 = vrot.lane.b32.xlu0 %v446, 126
        %v456 = vpop.permute.xlu0 %455
        %458 = vrot.lane.b32.xlu0 %v451, 118
        %v459 = vpop.permute.xlu0 %458
        %461 = vrot.lane.b32.xlu0 %v446, 117
        %v462 = vpop.permute.xlu0 %461
        %464 = vrot.lane.b32.xlu0 %v451, 116
        %v465 = vpop.permute.xlu0 %464
        %467 = vrot.lane.b32.xlu0 %v446, 108
        %v468 = vpop.permute.xlu0 %467
        %470 = vrot.lane.b32.xlu0 %v451, 107
        %v471 = vpop.permute.xlu0 %470
        %473 = vrot.lane.b32.xlu0 %v446, 106
        %v474 = vpop.permute.xlu0 %473
        %v477 = vrot.slane %v447, 4
        %479 = vrot.lane.b32.xlu0 %v447, 127
        %v480 = vpop.permute.xlu0 %479
        %482 = vrot.lane.b32.xlu0 %v477, 126
        %v483 = vpop.permute.xlu0 %482
        %485 = vrot.lane.b32.xlu0 %v447, 118
        %v486 = vpop.permute.xlu0 %485
        %488 = vrot.lane.b32.xlu0 %v477, 117
        %v489 = vpop.permute.xlu0 %488
        %491 = vrot.lane.b32.xlu0 %v447, 116
        %v492 = vpop.permute.xlu0 %491
        %494 = vrot.lane.b32.xlu0 %v477, 108
        %v495 = vpop.permute.xlu0 %494
        %vm497 = vcmask 1043456
        %v498 = vsel %vm497, %v446, %v453
        %v499 = vsel %vm497, %v456, %v459
        %v500 = vsel %vm497, %v462, %v465
        %v501 = vsel %vm497, %v468, %v471
        %v502 = vsel %vm497, %v474, %v477
        %v503 = vsel %vm497, %v480, %v483
        %v504 = vsel %vm497, %v486, %v489
        %v505 = vsel %vm497, %v492, %v495
        %506 = vrot.lane.b32.xlu0 %v477, 127
        %v507 = vpop.permute.xlu0 %506
        %510 = vrot.lane.b32.xlu0 %v449, 21
        %v511 = vpop.permute.xlu0 %510
        %v513 = vrot.slane %v449, 4
        %514 = vrot.lane.b32.xlu0 %v513, 20
        %v515 = vpop.permute.xlu0 %514
        %517 = vrot.lane.b32.xlu0 %v449, 19
        %v518 = vpop.permute.xlu0 %517
        %520 = vrot.lane.b32.xlu0 %v513, 11
        %v521 = vpop.permute.xlu0 %520
        %523 = vrot.lane.b32.xlu0 %v449, 10
        %v524 = vpop.permute.xlu0 %523
        %526 = vrot.lane.b32.xlu0 %v513, 9
        %v527 = vpop.permute.xlu0 %526
        %529 = vrot.lane.b32.xlu0 %v449, 1
        %v530 = vpop.permute.xlu0 %529
        %533 = vrot.lane.b32.xlu0 %v449, 127
        %v534 = vpop.permute.xlu0 %533
        %v535 = vsel %vm497, %v447, %v507
        %v536 = vsel %vm497, %v511, %v515
        %v537 = vsel %vm497, %v518, %v521
        %v538 = vsel %vm497, %v524, %v527
        %v539 = vsel %vm497, %v530, %v513
        %545 = vrot.lane.b32.xlu0 %v535, 107
        %v546 = vpop.permute.xlu0 %545
        %547 = vrot.lane.b32.xlu0 %v536, 107
        %v548 = vpop.permute.xlu0 %547
        %549 = vrot.lane.b32.xlu0 %v537, 107
        %v550 = vpop.permute.xlu0 %549
        %551 = vrot.lane.b32.xlu0 %v538, 107
        %v552 = vpop.permute.xlu0 %551
        %553 = vrot.lane.b32.xlu0 %v539, 107
        %v554 = vpop.permute.xlu0 %553
        %555 = vrot.lane.b32.xlu0 %v534, 107
        %v556 = vpop.permute.xlu0 %555
        %vm562 = vcmask 883712
        %v564 = vsel %vm562, %v435, 0
        %v566 = vsel %vm497, %v556, 0
        %568 = vmatpush.msra.mxu0 0.0
        %569 = vmatpush.msra.mxu0 0.0
        %570 = vmatpush.msra.mxu0 %v566
        %571 = vmatpush.msra.mxu0 %v554
        %572 = vmatpush.msra.mxu0 %v552
        %573 = vmatpush.msra.mxu0 %v550
        %574 = vmatpush.msra.mxu0 %v548
        %575 = vmatpush.msra.mxu0 %v546
        %576 = vmatpush.msra.mxu0 %v505
        %577 = vmatpush.msra.mxu0 %v504
        %578 = vmatpush.msra.mxu0 %v503
        %579 = vmatpush.msra.mxu0 %v502
        %580 = vmatpush.msra.mxu0 %v501
        %581 = vmatpush.msra.mxu0 %v500
        %582 = vmatpush.msra.mxu0 %v499
        %583 = vmatpush.msra.mxu0 %v498
        %584 = vmatmul.f32.gmra.mxu0 %v564
        %v585 = vpop.f32.mrf.mxu0
        %v586 = vadd.f32 0.0, %v585
        %587 = vdwg.mxu0
        %589 = vset.pattern.permute.xlu0 0
        %590 = vperm.xlu0 %589, %v436
        %v591 = vpop.permute.xlu0 %590
        %v593 = vmul.f32 %v586, %v591
        %595 = vset.pattern.permute.xlu0 0
        %596 = vperm.xlu0 %595, %v437
        %v597 = vpop.permute.xlu0 %596
        %v599 = vadd.f32 %v593, %v597
        %v600 = vmax.f32 %v599, 0.0
        %v601 = vld [vmem:[%s6] sm:$0x1]
        %v602 = vstv %s441
        %v603 = vmul.f32 %v601, %v602
        %v605 = vperm.slane %v603, 0
        %v607 = vmul.f32 %v600, %v605
        %609 = vrot.lane.b32.xlu0 %v607, 11
        %v610 = vpop.permute.xlu0 %609
        %vm612 = vcmask 89088
        %v613 = vsel %vm612, 0.0, %v610
        %vm614 = vcmask 908288
        %v615 = vsel %vm614, %v613, 0.0
        %616 = vst [vmem:[%s423] sm:$0xff] %v615
        %s617 = sadd.s32 %s438, 1
        %p618 = scmp.lt.s32.totalorder %s617, 8
        %s619 = scalar_select %p618, 1, 0
        %s620 = scvt.s32.f32 %s619
        %v621 = vld [vmem:[%s362] sm:$0xf]
        %v622 = vld [vmem:[%s448] sm:$0xf]
        %s623 = scalar_lea.vmem %s362, 8 [#allocation2]
        %v624 = vld [vmem:[%s623] sm:$0xf]
        %v626 = vrot.slane %v621, 4
        %627 = vrot.lane.b32.xlu0 %v626, 127
        %v628 = vpop.permute.xlu0 %627
        %630 = vrot.lane.b32.xlu0 %v621, 126
        %v631 = vpop.permute.xlu0 %630
        %633 = vrot.lane.b32.xlu0 %v626, 118
        %v634 = vpop.permute.xlu0 %633
        %636 = vrot.lane.b32.xlu0 %v621, 117
        %v637 = vpop.permute.xlu0 %636
        %639 = vrot.lane.b32.xlu0 %v626, 116
        %v640 = vpop.permute.xlu0 %639
        %642 = vrot.lane.b32.xlu0 %v621, 108
        %v643 = vpop.permute.xlu0 %642
        %645 = vrot.lane.b32.xlu0 %v626, 107
        %v646 = vpop.permute.xlu0 %645
        %648 = vrot.lane.b32.xlu0 %v621, 106
        %v649 = vpop.permute.xlu0 %648
        %v652 = vrot.slane %v622, 4
        %654 = vrot.lane.b32.xlu0 %v622, 127
        %v655 = vpop.permute.xlu0 %654
        %657 = vrot.lane.b32.xlu0 %v652, 126
        %v658 = vpop.permute.xlu0 %657
        %660 = vrot.lane.b32.xlu0 %v622, 118
        %v661 = vpop.permute.xlu0 %660
        %663 = vrot.lane.b32.xlu0 %v652, 117
        %v664 = vpop.permute.xlu0 %663
        %666 = vrot.lane.b32.xlu0 %v622, 116
        %v667 = vpop.permute.xlu0 %666
        %669 = vrot.lane.b32.xlu0 %v652, 108
        %v670 = vpop.permute.xlu0 %669
        %v672 = vsel %vm497, %v621, %v628
        %v673 = vsel %vm497, %v631, %v634
        %v674 = vsel %vm497, %v637, %v640
        %v675 = vsel %vm497, %v643, %v646
        %v676 = vsel %vm497, %v649, %v652
        %v677 = vsel %vm497, %v655, %v658
        %v678 = vsel %vm497, %v661, %v664
        %v679 = vsel %vm497, %v667, %v670
        %680 = vrot.lane.b32.xlu0 %v652, 127
        %v681 = vpop.permute.xlu0 %680
        %684 = vrot.lane.b32.xlu0 %v624, 21
        %v685 = vpop.permute.xlu0 %684
        %v687 = vrot.slane %v624, 4
        %688 = vrot.lane.b32.xlu0 %v687, 20
        %v689 = vpop.permute.xlu0 %688
        %691 = vrot.lane.b32.xlu0 %v624, 19
        %v692 = vpop.permute.xlu0 %691
        %694 = vrot.lane.b32.xlu0 %v687, 11
        %v695 = vpop.permute.xlu0 %694
        %697 = vrot.lane.b32.xlu0 %v624, 10
        %v698 = vpop.permute.xlu0 %697
        %700 = vrot.lane.b32.xlu0 %v687, 9
        %v701 = vpop.permute.xlu0 %700
        %703 = vrot.lane.b32.xlu0 %v624, 1
        %v704 = vpop.permute.xlu0 %703
        %707 = vrot.lane.b32.xlu0 %v624, 127
        %v708 = vpop.permute.xlu0 %707
        %v709 = vsel %vm497, %v622, %v681
        %v710 = vsel %vm497, %v685, %v689
        %v711 = vsel %vm497, %v692, %v695
        %v712 = vsel %vm497, %v698, %v701
        %v713 = vsel %vm497, %v704, %v687
        %719 = vrot.lane.b32.xlu0 %v709, 107
        %v720 = vpop.permute.xlu0 %719
        %721 = vrot.lane.b32.xlu0 %v710, 107
        %v722 = vpop.permute.xlu0 %721
        %723 = vrot.lane.b32.xlu0 %v711, 107
        %v724 = vpop.permute.xlu0 %723
        %725 = vrot.lane.b32.xlu0 %v712, 107
        %v726 = vpop.permute.xlu0 %725
        %727 = vrot.lane.b32.xlu0 %v713, 107
        %v728 = vpop.permute.xlu0 %727
        %729 = vrot.lane.b32.xlu0 %v708, 107
        %v730 = vpop.permute.xlu0 %729
        %v736 = vsel %vm497, %v730, 0
        %738 = vmatpush.msra.mxu0 0.0
        %739 = vmatpush.msra.mxu0 0.0
        %740 = vmatpush.msra.mxu0 %v736
        %741 = vmatpush.msra.mxu0 %v728
        %742 = vmatpush.msra.mxu0 %v726
        %743 = vmatpush.msra.mxu0 %v724
        %744 = vmatpush.msra.mxu0 %v722
        %745 = vmatpush.msra.mxu0 %v720
        %746 = vmatpush.msra.mxu0 %v679
        %747 = vmatpush.msra.mxu0 %v678
        %748 = vmatpush.msra.mxu0 %v677
        %749 = vmatpush.msra.mxu0 %v676
        %750 = vmatpush.msra.mxu0 %v675
        %751 = vmatpush.msra.mxu0 %v674
        %752 = vmatpush.msra.mxu0 %v673
        %753 = vmatpush.msra.mxu0 %v672
        %754 = vmatmul.f32.gmra.mxu0 %v564
        %v755 = vpop.f32.mrf.mxu0
        %v756 = vadd.f32 0.0, %v755
        %757 = vdwg.mxu0
        %v758 = vmul.f32 %v756, %v591
        %v759 = vadd.f32 %v758, %v597
        %v760 = vmax.f32 %v759, 0.0
        %v761 = vld [vmem:[%s6] sm:$0x1]
        %v762 = vstv %s620
        %v763 = vmul.f32 %v761, %v762
        %v765 = vperm.slane %v763, 0
        %v767 = vmul.f32 %v760, %v765
        %769 = vrot.lane.b32.xlu0 %v767, 11
        %v770 = vpop.permute.xlu0 %769
        %v772 = vsel %vm612, 0.0, %v770
        %v773 = vsel %vm614, %v772, 0.0
        %s774 = scalar_lea.vmem %s423, 8 [#allocation8]
        %775 = vst [vmem:[%s774] sm:$0xff] %v773
        %s776 = sadd.s32 %s438, 2
        %p777 = scmp.lt.s32.totalorder %s776, 8
        %s778 = scalar_select %p777, 1, 0
        %s779 = scvt.s32.f32 %s778
        %v780 = vld [vmem:[%s448] sm:$0xf]
        %v781 = vld [vmem:[%s623] sm:$0xf]
        %s782 = scalar_lea.vmem %s362, 12 [#allocation2]
        %v783 = vld [vmem:[%s782] sm:$0xf]
        %v785 = vrot.slane %v780, 4
        %786 = vrot.lane.b32.xlu0 %v785, 127
        %v787 = vpop.permute.xlu0 %786
        %789 = vrot.lane.b32.xlu0 %v780, 126
        %v790 = vpop.permute.xlu0 %789
        %792 = vrot.lane.b32.xlu0 %v785, 118
        %v793 = vpop.permute.xlu0 %792
        %795 = vrot.lane.b32.xlu0 %v780, 117
        %v796 = vpop.permute.xlu0 %795
        %798 = vrot.lane.b32.xlu0 %v785, 116
        %v799 = vpop.permute.xlu0 %798
        %801 = vrot.lane.b32.xlu0 %v780, 108
        %v802 = vpop.permute.xlu0 %801
        %804 = vrot.lane.b32.xlu0 %v785, 107
        %v805 = vpop.permute.xlu0 %804
        %807 = vrot.lane.b32.xlu0 %v780, 106
        %v808 = vpop.permute.xlu0 %807
        %v811 = vrot.slane %v781, 4
        %813 = vrot.lane.b32.xlu0 %v781, 127
        %v814 = vpop.permute.xlu0 %813
        %816 = vrot.lane.b32.xlu0 %v811, 126
        %v817 = vpop.permute.xlu0 %816
        %819 = vrot.lane.b32.xlu0 %v781, 118
        %v820 = vpop.permute.xlu0 %819
        %822 = vrot.lane.b32.xlu0 %v811, 117
        %v823 = vpop.permute.xlu0 %822
        %825 = vrot.lane.b32.xlu0 %v781, 116
        %v826 = vpop.permute.xlu0 %825
        %828 = vrot.lane.b32.xlu0 %v811, 108
        %v829 = vpop.permute.xlu0 %828
        %v831 = vsel %vm497, %v780, %v787
        %v832 = vsel %vm497, %v790, %v793
        %v833 = vsel %vm497, %v796, %v799
        %v834 = vsel %vm497, %v802, %v805
        %v835 = vsel %vm497, %v808, %v811
        %v836 = vsel %vm497, %v814, %v817
        %v837 = vsel %vm497, %v820, %v823
        %v838 = vsel %vm497, %v826, %v829
        %839 = vrot.lane.b32.xlu0 %v811, 127
        %v840 = vpop.permute.xlu0 %839
        %843 = vrot.lane.b32.xlu0 %v783, 21
        %v844 = vpop.permute.xlu0 %843
        %v846 = vrot.slane %v783, 4
        %847 = vrot.lane.b32.xlu0 %v846, 20
        %v848 = vpop.permute.xlu0 %847
        %850 = vrot.lane.b32.xlu0 %v783, 19
        %v851 = vpop.permute.xlu0 %850
        %853 = vrot.lane.b32.xlu0 %v846, 11
        %v854 = vpop.permute.xlu0 %853
        %856 = vrot.lane.b32.xlu0 %v783, 10
        %v857 = vpop.permute.xlu0 %856
        %859 = vrot.lane.b32.xlu0 %v846, 9
        %v860 = vpop.permute.xlu0 %859
        %862 = vrot.lane.b32.xlu0 %v783, 1
        %v863 = vpop.permute.xlu0 %862
        %866 = vrot.lane.b32.xlu0 %v783, 127
        %v867 = vpop.permute.xlu0 %866
        %v868 = vsel %vm497, %v781, %v840
        %v869 = vsel %vm497, %v844, %v848
        %v870 = vsel %vm497, %v851, %v854
        %v871 = vsel %vm497, %v857, %v860
        %v872 = vsel %vm497, %v863, %v846
        %878 = vrot.lane.b32.xlu0 %v868, 107
        %v879 = vpop.permute.xlu0 %878
        %880 = vrot.lane.b32.xlu0 %v869, 107
        %v881 = vpop.permute.xlu0 %880
        %882 = vrot.lane.b32.xlu0 %v870, 107
        %v883 = vpop.permute.xlu0 %882
        %884 = vrot.lane.b32.xlu0 %v871, 107
        %v885 = vpop.permute.xlu0 %884
        %886 = vrot.lane.b32.xlu0 %v872, 107
        %v887 = vpop.permute.xlu0 %886
        %888 = vrot.lane.b32.xlu0 %v867, 107
        %v889 = vpop.permute.xlu0 %888
        %v895 = vsel %vm497, %v889, 0
        %897 = vmatpush.msra.mxu0 0.0
        %898 = vmatpush.msra.mxu0 0.0
        %899 = vmatpush.msra.mxu0 %v895
        %900 = vmatpush.msra.mxu0 %v887
        %901 = vmatpush.msra.mxu0 %v885
        %902 = vmatpush.msra.mxu0 %v883
        %903 = vmatpush.msra.mxu0 %v881
        %904 = vmatpush.msra.mxu0 %v879
        %905 = vmatpush.msra.mxu0 %v838
        %906 = vmatpush.msra.mxu0 %v837
        %907 = vmatpush.msra.mxu0 %v836
        %908 = vmatpush.msra.mxu0 %v835
        %909 = vmatpush.msra.mxu0 %v834
        %910 = vmatpush.msra.mxu0 %v833
        %911 = vmatpush.msra.mxu0 %v832
        %912 = vmatpush.msra.mxu0 %v831
        %913 = vmatmul.f32.gmra.mxu0 %v564
        %v914 = vpop.f32.mrf.mxu0
        %v915 = vadd.f32 0.0, %v914
        %916 = vdwg.mxu0
        %v917 = vmul.f32 %v915, %v591
        %v918 = vadd.f32 %v917, %v597
        %v919 = vmax.f32 %v918, 0.0
        %v920 = vld [vmem:[%s6] sm:$0x1]
        %v921 = vstv %s779
        %v922 = vmul.f32 %v920, %v921
        %v924 = vperm.slane %v922, 0
        %v926 = vmul.f32 %v919, %v924
        %928 = vrot.lane.b32.xlu0 %v926, 11
        %v929 = vpop.permute.xlu0 %928
        %v931 = vsel %vm612, 0.0, %v929
        %v932 = vsel %vm614, %v931, 0.0
        %s933 = scalar_lea.vmem %s423, 16 [#allocation8]
        %934 = vst [vmem:[%s933] sm:$0xff] %v932
        %s935 = sadd.s32 %s438, 3
        %p936 = scmp.lt.s32.totalorder %s935, 8
        %s937 = scalar_select %p936, 1, 0
        %s938 = scvt.s32.f32 %s937
        %v939 = vld [vmem:[%s623] sm:$0xf]
        %v940 = vld [vmem:[%s782] sm:$0xf]
        %s941 = scalar_lea.vmem %s362, 16 [#allocation2]
        %v942 = vld [vmem:[%s941] sm:$0xf]
        %v944 = vrot.slane %v939, 4
        %945 = vrot.lane.b32.xlu0 %v944, 127
        %v946 = vpop.permute.xlu0 %945
        %948 = vrot.lane.b32.xlu0 %v939, 126
        %v949 = vpop.permute.xlu0 %948
        %951 = vrot.lane.b32.xlu0 %v944, 118
        %v952 = vpop.permute.xlu0 %951
        %954 = vrot.lane.b32.xlu0 %v939, 117
        %v955 = vpop.permute.xlu0 %954
        %957 = vrot.lane.b32.xlu0 %v944, 116
        %v958 = vpop.permute.xlu0 %957
        %960 = vrot.lane.b32.xlu0 %v939, 108
        %v961 = vpop.permute.xlu0 %960
        %963 = vrot.lane.b32.xlu0 %v944, 107
        %v964 = vpop.permute.xlu0 %963
        %966 = vrot.lane.b32.xlu0 %v939, 106
        %v967 = vpop.permute.xlu0 %966
        %v970 = vrot.slane %v940, 4
        %972 = vrot.lane.b32.xlu0 %v940, 127
        %v973 = vpop.permute.xlu0 %972
        %975 = vrot.lane.b32.xlu0 %v970, 126
        %v976 = vpop.permute.xlu0 %975
        %978 = vrot.lane.b32.xlu0 %v940, 118
        %v979 = vpop.permute.xlu0 %978
        %981 = vrot.lane.b32.xlu0 %v970, 117
        %v982 = vpop.permute.xlu0 %981
        %984 = vrot.lane.b32.xlu0 %v940, 116
        %v985 = vpop.permute.xlu0 %984
        %987 = vrot.lane.b32.xlu0 %v970, 108
        %v988 = vpop.permute.xlu0 %987
        %v990 = vsel %vm497, %v939, %v946
        %v991 = vsel %vm497, %v949, %v952
        %v992 = vsel %vm497, %v955, %v958
        %v993 = vsel %vm497, %v961, %v964
        %v994 = vsel %vm497, %v967, %v970
        %v995 = vsel %vm497, %v973, %v976
        %v996 = vsel %vm497, %v979, %v982
        %v997 = vsel %vm497, %v985, %v988
        %998 = vrot.lane.b32.xlu0 %v970, 127
        %v999 = vpop.permute.xlu0 %998
        %1002 = vrot.lane.b32.xlu0 %v942, 21
        %v1003 = vpop.permute.xlu0 %1002
        %v1005 = vrot.slane %v942, 4
        %1006 = vrot.lane.b32.xlu0 %v1005, 20
        %v1007 = vpop.permute.xlu0 %1006
        %1009 = vrot.lane.b32.xlu0 %v942, 19
        %v1010 = vpop.permute.xlu0 %1009
        %1012 = vrot.lane.b32.xlu0 %v1005, 11
        %v1013 = vpop.permute.xlu0 %1012
        %1015 = vrot.lane.b32.xlu0 %v942, 10
        %v1016 = vpop.permute.xlu0 %1015
        %1018 = vrot.lane.b32.xlu0 %v1005, 9
        %v1019 = vpop.permute.xlu0 %1018
        %1021 = vrot.lane.b32.xlu0 %v942, 1
        %v1022 = vpop.permute.xlu0 %1021
        %1025 = vrot.lane.b32.xlu0 %v942, 127
        %v1026 = vpop.permute.xlu0 %1025
        %v1027 = vsel %vm497, %v940, %v999
        %v1028 = vsel %vm497, %v1003, %v1007
        %v1029 = vsel %vm497, %v1010, %v1013
        %v1030 = vsel %vm497, %v1016, %v1019
        %v1031 = vsel %vm497, %v1022, %v1005
        %1037 = vrot.lane.b32.xlu0 %v1027, 107
        %v1038 = vpop.permute.xlu0 %1037
        %1039 = vrot.lane.b32.xlu0 %v1028, 107
        %v1040 = vpop.permute.xlu0 %1039
        %1041 = vrot.lane.b32.xlu0 %v1029, 107
        %v1042 = vpop.permute.xlu0 %1041
        %1043 = vrot.lane.b32.xlu0 %v1030, 107
        %v1044 = vpop.permute.xlu0 %1043
        %1045 = vrot.lane.b32.xlu0 %v1031, 107
        %v1046 = vpop.permute.xlu0 %1045
        %1047 = vrot.lane.b32.xlu0 %v1026, 107
        %v1048 = vpop.permute.xlu0 %1047
        %v1054 = vsel %vm497, %v1048, 0
        %1056 = vmatpush.msra.mxu0 0.0
        %1057 = vmatpush.msra.mxu0 0.0
        %1058 = vmatpush.msra.mxu0 %v1054
        %1059 = vmatpush.msra.mxu0 %v1046
        %1060 = vmatpush.msra.mxu0 %v1044
        %1061 = vmatpush.msra.mxu0 %v1042
        %1062 = vmatpush.msra.mxu0 %v1040
        %1063 = vmatpush.msra.mxu0 %v1038
        %1064 = vmatpush.msra.mxu0 %v997
        %1065 = vmatpush.msra.mxu0 %v996
        %1066 = vmatpush.msra.mxu0 %v995
        %1067 = vmatpush.msra.mxu0 %v994
        %1068 = vmatpush.msra.mxu0 %v993
        %1069 = vmatpush.msra.mxu0 %v992
        %1070 = vmatpush.msra.mxu0 %v991
        %1071 = vmatpush.msra.mxu0 %v990
        %1072 = vmatmul.f32.gmra.mxu0 %v564
        %v1073 = vpop.f32.mrf.mxu0
        %v1074 = vadd.f32 0.0, %v1073
        %1075 = vdwg.mxu0
        %v1076 = vmul.f32 %v1074, %v591
        %v1077 = vadd.f32 %v1076, %v597
        %v1078 = vmax.f32 %v1077, 0.0
        %v1079 = vld [vmem:[%s6] sm:$0x1]
        %v1080 = vstv %s938
        %v1081 = vmul.f32 %v1079, %v1080
        %v1083 = vperm.slane %v1081, 0
        %v1085 = vmul.f32 %v1078, %v1083
        %1087 = vrot.lane.b32.xlu0 %v1085, 11
        %v1088 = vpop.permute.xlu0 %1087
        %v1090 = vsel %vm612, 0.0, %v1088
        %v1091 = vsel %vm614, %v1090, 0.0
        %s1092 = scalar_lea.vmem %s423, 24 [#allocation8]
        %1093 = vst [vmem:[%s1092] sm:$0xff] %v1091
        %s1094 = sadd.s32 %s438, 4
        %p1095 = scmp.lt.s32.totalorder %s1094, 8
        %s1096 = scalar_select %p1095, 1, 0
        %s1097 = scvt.s32.f32 %s1096
        %v1098 = vld [vmem:[%s782] sm:$0xf]
        %v1099 = vld [vmem:[%s941] sm:$0xf]
        %s1100 = scalar_lea.vmem %s362, 20 [#allocation2]
        %v1101 = vld [vmem:[%s1100] sm:$0xf]
        %v1103 = vrot.slane %v1098, 4
        %1104 = vrot.lane.b32.xlu0 %v1103, 127
        %v1105 = vpop.permute.xlu0 %1104
        %1107 = vrot.lane.b32.xlu0 %v1098, 126
        %v1108 = vpop.permute.xlu0 %1107
        %1110 = vrot.lane.b32.xlu0 %v1103, 118
        %v1111 = vpop.permute.xlu0 %1110
        %1113 = vrot.lane.b32.xlu0 %v1098, 117
        %v1114 = vpop.permute.xlu0 %1113
        %1116 = vrot.lane.b32.xlu0 %v1103, 116
        %v1117 = vpop.permute.xlu0 %1116
        %1119 = vrot.lane.b32.xlu0 %v1098, 108
        %v1120 = vpop.permute.xlu0 %1119
        %1122 = vrot.lane.b32.xlu0 %v1103, 107
        %v1123 = vpop.permute.xlu0 %1122
        %1125 = vrot.lane.b32.xlu0 %v1098, 106
        %v1126 = vpop.permute.xlu0 %1125
        %v1129 = vrot.slane %v1099, 4
        %1131 = vrot.lane.b32.xlu0 %v1099, 127
        %v1132 = vpop.permute.xlu0 %1131
        %1134 = vrot.lane.b32.xlu0 %v1129, 126
        %v1135 = vpop.permute.xlu0 %1134
        %1137 = vrot.lane.b32.xlu0 %v1099, 118
        %v1138 = vpop.permute.xlu0 %1137
        %1140 = vrot.lane.b32.xlu0 %v1129, 117
        %v1141 = vpop.permute.xlu0 %1140
        %1143 = vrot.lane.b32.xlu0 %v1099, 116
        %v1144 = vpop.permute.xlu0 %1143
        %1146 = vrot.lane.b32.xlu0 %v1129, 108
        %v1147 = vpop.permute.xlu0 %1146
        %v1149 = vsel %vm497, %v1098, %v1105
        %v1150 = vsel %vm497, %v1108, %v1111
        %v1151 = vsel %vm497, %v1114, %v1117
        %v1152 = vsel %vm497, %v1120, %v1123
        %v1153 = vsel %vm497, %v1126, %v1129
        %v1154 = vsel %vm497, %v1132, %v1135
        %v1155 = vsel %vm497, %v1138, %v1141
        %v1156 = vsel %vm497, %v1144, %v1147
        %1157 = vrot.lane.b32.xlu0 %v1129, 127
        %v1158 = vpop.permute.xlu0 %1157
        %1161 = vrot.lane.b32.xlu0 %v1101, 21
        %v1162 = vpop.permute.xlu0 %1161
        %v1164 = vrot.slane %v1101, 4
        %1165 = vrot.lane.b32.xlu0 %v1164, 20
        %v1166 = vpop.permute.xlu0 %1165
        %1168 = vrot.lane.b32.xlu0 %v1101, 19
        %v1169 = vpop.permute.xlu0 %1168
        %1171 = vrot.lane.b32.xlu0 %v1164, 11
        %v1172 = vpop.permute.xlu0 %1171
        %1174 = vrot.lane.b32.xlu0 %v1101, 10
        %v1175 = vpop.permute.xlu0 %1174
        %1177 = vrot.lane.b32.xlu0 %v1164, 9
        %v1178 = vpop.permute.xlu0 %1177
        %1180 = vrot.lane.b32.xlu0 %v1101, 1
        %v1181 = vpop.permute.xlu0 %1180
        %1184 = vrot.lane.b32.xlu0 %v1101, 127
        %v1185 = vpop.permute.xlu0 %1184
        %v1186 = vsel %vm497, %v1099, %v1158
        %v1187 = vsel %vm497, %v1162, %v1166
        %v1188 = vsel %vm497, %v1169, %v1172
        %v1189 = vsel %vm497, %v1175, %v1178
        %v1190 = vsel %vm497, %v1181, %v1164
        %1196 = vrot.lane.b32.xlu0 %v1186, 107
        %v1197 = vpop.permute.xlu0 %1196
        %1198 = vrot.lane.b32.xlu0 %v1187, 107
        %v1199 = vpop.permute.xlu0 %1198
        %1200 = vrot.lane.b32.xlu0 %v1188, 107
        %v1201 = vpop.permute.xlu0 %1200
        %1202 = vrot.lane.b32.xlu0 %v1189, 107
        %v1203 = vpop.permute.xlu0 %1202
        %1204 = vrot.lane.b32.xlu0 %v1190, 107
        %v1205 = vpop.permute.xlu0 %1204
        %1206 = vrot.lane.b32.xlu0 %v1185, 107
        %v1207 = vpop.permute.xlu0 %1206
        %v1213 = vsel %vm497, %v1207, 0
        %1215 = vmatpush.msra.mxu0 0.0
        %1216 = vmatpush.msra.mxu0 0.0
        %1217 = vmatpush.msra.mxu0 %v1213
        %1218 = vmatpush.msra.mxu0 %v1205
        %1219 = vmatpush.msra.mxu0 %v1203
        %1220 = vmatpush.msra.mxu0 %v1201
        %1221 = vmatpush.msra.mxu0 %v1199
        %1222 = vmatpush.msra.mxu0 %v1197
        %1223 = vmatpush.msra.mxu0 %v1156
        %1224 = vmatpush.msra.mxu0 %v1155
        %1225 = vmatpush.msra.mxu0 %v1154
        %1226 = vmatpush.msra.mxu0 %v1153
        %1227 = vmatpush.msra.mxu0 %v1152
        %1228 = vmatpush.msra.mxu0 %v1151
        %1229 = vmatpush.msra.mxu0 %v1150
        %1230 = vmatpush.msra.mxu0 %v1149
        %1231 = vmatmul.f32.gmra.mxu0 %v564
        %v1232 = vpop.f32.mrf.mxu0
        %v1233 = vadd.f32 0.0, %v1232
        %1234 = vdwg.mxu0
        %v1235 = vmul.f32 %v1233, %v591
        %v1236 = vadd.f32 %v1235, %v597
        %v1237 = vmax.f32 %v1236, 0.0
        %v1238 = vld [vmem:[%s6] sm:$0x1]
        %v1239 = vstv %s1097
        %v1240 = vmul.f32 %v1238, %v1239
        %v1242 = vperm.slane %v1240, 0
        %v1244 = vmul.f32 %v1237, %v1242
        %1246 = vrot.lane.b32.xlu0 %v1244, 11
        %v1247 = vpop.permute.xlu0 %1246
        %v1249 = vsel %vm612, 0.0, %v1247
        %v1250 = vsel %vm614, %v1249, 0.0
        %s1251 = scalar_lea.vmem %s423, 32 [#allocation8]
        %1252 = vst [vmem:[%s1251] sm:$0xff] %v1250
        %s1253 = sadd.s32 %s438, 5
        %p1254 = scmp.lt.s32.totalorder %s1253, 8
        %s1255 = scalar_select %p1254, 1, 0
        %s1256 = scvt.s32.f32 %s1255
        %v1257 = vld [vmem:[%s941] sm:$0xf]
        %v1258 = vld [vmem:[%s1100] sm:$0xf]
        %s1259 = scalar_lea.vmem %s362, 24 [#allocation2]
        %v1260 = vld [vmem:[%s1259] sm:$0xf]
        %v1262 = vrot.slane %v1257, 4
        %1263 = vrot.lane.b32.xlu0 %v1262, 127
        %v1264 = vpop.permute.xlu0 %1263
        %1266 = vrot.lane.b32.xlu0 %v1257, 126
        %v1267 = vpop.permute.xlu0 %1266
        %1269 = vrot.lane.b32.xlu0 %v1262, 118
        %v1270 = vpop.permute.xlu0 %1269
        %1272 = vrot.lane.b32.xlu0 %v1257, 117
        %v1273 = vpop.permute.xlu0 %1272
        %1275 = vrot.lane.b32.xlu0 %v1262, 116
        %v1276 = vpop.permute.xlu0 %1275
        %1278 = vrot.lane.b32.xlu0 %v1257, 108
        %v1279 = vpop.permute.xlu0 %1278
        %1281 = vrot.lane.b32.xlu0 %v1262, 107
        %v1282 = vpop.permute.xlu0 %1281
        %1284 = vrot.lane.b32.xlu0 %v1257, 106
        %v1285 = vpop.permute.xlu0 %1284
        %v1288 = vrot.slane %v1258, 4
        %1290 = vrot.lane.b32.xlu0 %v1258, 127
        %v1291 = vpop.permute.xlu0 %1290
        %1293 = vrot.lane.b32.xlu0 %v1288, 126
        %v1294 = vpop.permute.xlu0 %1293
        %1296 = vrot.lane.b32.xlu0 %v1258, 118
        %v1297 = vpop.permute.xlu0 %1296
        %1299 = vrot.lane.b32.xlu0 %v1288, 117
        %v1300 = vpop.permute.xlu0 %1299
        %1302 = vrot.lane.b32.xlu0 %v1258, 116
        %v1303 = vpop.permute.xlu0 %1302
        %1305 = vrot.lane.b32.xlu0 %v1288, 108
        %v1306 = vpop.permute.xlu0 %1305
        %v1308 = vsel %vm497, %v1257, %v1264
        %v1309 = vsel %vm497, %v1267, %v1270
        %v1310 = vsel %vm497, %v1273, %v1276
        %v1311 = vsel %vm497, %v1279, %v1282
        %v1312 = vsel %vm497, %v1285, %v1288
        %v1313 = vsel %vm497, %v1291, %v1294
        %v1314 = vsel %vm497, %v1297, %v1300
        %v1315 = vsel %vm497, %v1303, %v1306
        %1316 = vrot.lane.b32.xlu0 %v1288, 127
        %v1317 = vpop.permute.xlu0 %1316
        %1320 = vrot.lane.b32.xlu0 %v1260, 21
        %v1321 = vpop.permute.xlu0 %1320
        %v1323 = vrot.slane %v1260, 4
        %1324 = vrot.lane.b32.xlu0 %v1323, 20
        %v1325 = vpop.permute.xlu0 %1324
        %1327 = vrot.lane.b32.xlu0 %v1260, 19
        %v1328 = vpop.permute.xlu0 %1327
        %1330 = vrot.lane.b32.xlu0 %v1323, 11
        %v1331 = vpop.permute.xlu0 %1330
        %1333 = vrot.lane.b32.xlu0 %v1260, 10
        %v1334 = vpop.permute.xlu0 %1333
        %1336 = vrot.lane.b32.xlu0 %v1323, 9
        %v1337 = vpop.permute.xlu0 %1336
        %1339 = vrot.lane.b32.xlu0 %v1260, 1
        %v1340 = vpop.permute.xlu0 %1339
        %1343 = vrot.lane.b32.xlu0 %v1260, 127
        %v1344 = vpop.permute.xlu0 %1343
        %v1345 = vsel %vm497, %v1258, %v1317
        %v1346 = vsel %vm497, %v1321, %v1325
        %v1347 = vsel %vm497, %v1328, %v1331
        %v1348 = vsel %vm497, %v1334, %v1337
        %v1349 = vsel %vm497, %v1340, %v1323
        %1355 = vrot.lane.b32.xlu0 %v1345, 107
        %v1356 = vpop.permute.xlu0 %1355
        %1357 = vrot.lane.b32.xlu0 %v1346, 107
        %v1358 = vpop.permute.xlu0 %1357
        %1359 = vrot.lane.b32.xlu0 %v1347, 107
        %v1360 = vpop.permute.xlu0 %1359
        %1361 = vrot.lane.b32.xlu0 %v1348, 107
        %v1362 = vpop.permute.xlu0 %1361
        %1363 = vrot.lane.b32.xlu0 %v1349, 107
        %v1364 = vpop.permute.xlu0 %1363
        %1365 = vrot.lane.b32.xlu0 %v1344, 107
        %v1366 = vpop.permute.xlu0 %1365
        %v1372 = vsel %vm497, %v1366, 0
        %1374 = vmatpush.msra.mxu0 0.0
        %1375 = vmatpush.msra.mxu0 0.0
        %1376 = vmatpush.msra.mxu0 %v1372
        %1377 = vmatpush.msra.mxu0 %v1364
        %1378 = vmatpush.msra.mxu0 %v1362
        %1379 = vmatpush.msra.mxu0 %v1360
        %1380 = vmatpush.msra.mxu0 %v1358
        %1381 = vmatpush.msra.mxu0 %v1356
        %1382 = vmatpush.msra.mxu0 %v1315
        %1383 = vmatpush.msra.mxu0 %v1314
        %1384 = vmatpush.msra.mxu0 %v1313
        %1385 = vmatpush.msra.mxu0 %v1312
        %1386 = vmatpush.msra.mxu0 %v1311
        %1387 = vmatpush.msra.mxu0 %v1310
        %1388 = vmatpush.msra.mxu0 %v1309
        %1389 = vmatpush.msra.mxu0 %v1308
        %1390 = vmatmul.f32.gmra.mxu0 %v564
        %v1391 = vpop.f32.mrf.mxu0
        %v1392 = vadd.f32 0.0, %v1391
        %1393 = vdwg.mxu0
        %v1394 = vmul.f32 %v1392, %v591
        %v1395 = vadd.f32 %v1394, %v597
        %v1396 = vmax.f32 %v1395, 0.0
        %v1397 = vld [vmem:[%s6] sm:$0x1]
        %v1398 = vstv %s1256
        %v1399 = vmul.f32 %v1397, %v1398
        %v1401 = vperm.slane %v1399, 0
        %v1403 = vmul.f32 %v1396, %v1401
        %1405 = vrot.lane.b32.xlu0 %v1403, 11
        %v1406 = vpop.permute.xlu0 %1405
        %v1408 = vsel %vm612, 0.0, %v1406
        %v1409 = vsel %vm614, %v1408, 0.0
        %s1410 = scalar_lea.vmem %s423, 40 [#allocation8]
        %1411 = vst [vmem:[%s1410] sm:$0xff] %v1409
        %s1412 = sadd.s32 %s438, 6
        %p1413 = scmp.lt.s32.totalorder %s1412, 8
        %s1414 = scalar_select %p1413, 1, 0
        %s1415 = scvt.s32.f32 %s1414
        %v1416 = vld [vmem:[%s1100] sm:$0xf]
        %v1417 = vld [vmem:[%s1259] sm:$0xf]
        %s1418 = scalar_lea.vmem %s362, 28 [#allocation2]
        %v1419 = vld [vmem:[%s1418] sm:$0xf]
        %v1421 = vrot.slane %v1416, 4
        %1422 = vrot.lane.b32.xlu0 %v1421, 127
        %v1423 = vpop.permute.xlu0 %1422
        %1425 = vrot.lane.b32.xlu0 %v1416, 126
        %v1426 = vpop.permute.xlu0 %1425
        %1428 = vrot.lane.b32.xlu0 %v1421, 118
        %v1429 = vpop.permute.xlu0 %1428
        %1431 = vrot.lane.b32.xlu0 %v1416, 117
        %v1432 = vpop.permute.xlu0 %1431
        %1434 = vrot.lane.b32.xlu0 %v1421, 116
        %v1435 = vpop.permute.xlu0 %1434
        %1437 = vrot.lane.b32.xlu0 %v1416, 108
        %v1438 = vpop.permute.xlu0 %1437
        %1440 = vrot.lane.b32.xlu0 %v1421, 107
        %v1441 = vpop.permute.xlu0 %1440
        %1443 = vrot.lane.b32.xlu0 %v1416, 106
        %v1444 = vpop.permute.xlu0 %1443
        %v1447 = vrot.slane %v1417, 4
        %1449 = vrot.lane.b32.xlu0 %v1417, 127
        %v1450 = vpop.permute.xlu0 %1449
        %1452 = vrot.lane.b32.xlu0 %v1447, 126
        %v1453 = vpop.permute.xlu0 %1452
        %1455 = vrot.lane.b32.xlu0 %v1417, 118
        %v1456 = vpop.permute.xlu0 %1455
        %1458 = vrot.lane.b32.xlu0 %v1447, 117
        %v1459 = vpop.permute.xlu0 %1458
        %1461 = vrot.lane.b32.xlu0 %v1417, 116
        %v1462 = vpop.permute.xlu0 %1461
        %1464 = vrot.lane.b32.xlu0 %v1447, 108
        %v1465 = vpop.permute.xlu0 %1464
        %v1467 = vsel %vm497, %v1416, %v1423
        %v1468 = vsel %vm497, %v1426, %v1429
        %v1469 = vsel %vm497, %v1432, %v1435
        %v1470 = vsel %vm497, %v1438, %v1441
        %v1471 = vsel %vm497, %v1444, %v1447
        %v1472 = vsel %vm497, %v1450, %v1453
        %v1473 = vsel %vm497, %v1456, %v1459
        %v1474 = vsel %vm497, %v1462, %v1465
        %1475 = vrot.lane.b32.xlu0 %v1447, 127
        %v1476 = vpop.permute.xlu0 %1475
        %1479 = vrot.lane.b32.xlu0 %v1419, 21
        %v1480 = vpop.permute.xlu0 %1479
        %v1482 = vrot.slane %v1419, 4
        %1483 = vrot.lane.b32.xlu0 %v1482, 20
        %v1484 = vpop.permute.xlu0 %1483
        %1486 = vrot.lane.b32.xlu0 %v1419, 19
        %v1487 = vpop.permute.xlu0 %1486
        %1489 = vrot.lane.b32.xlu0 %v1482, 11
        %v1490 = vpop.permute.xlu0 %1489
        %1492 = vrot.lane.b32.xlu0 %v1419, 10
        %v1493 = vpop.permute.xlu0 %1492
        %1495 = vrot.lane.b32.xlu0 %v1482, 9
        %v1496 = vpop.permute.xlu0 %1495
        %1498 = vrot.lane.b32.xlu0 %v1419, 1
        %v1499 = vpop.permute.xlu0 %1498
        %1502 = vrot.lane.b32.xlu0 %v1419, 127
        %v1503 = vpop.permute.xlu0 %1502
        %v1504 = vsel %vm497, %v1417, %v1476
        %v1505 = vsel %vm497, %v1480, %v1484
        %v1506 = vsel %vm497, %v1487, %v1490
        %v1507 = vsel %vm497, %v1493, %v1496
        %v1508 = vsel %vm497, %v1499, %v1482
        %1514 = vrot.lane.b32.xlu0 %v1504, 107
        %v1515 = vpop.permute.xlu0 %1514
        %1516 = vrot.lane.b32.xlu0 %v1505, 107
        %v1517 = vpop.permute.xlu0 %1516
        %1518 = vrot.lane.b32.xlu0 %v1506, 107
        %v1519 = vpop.permute.xlu0 %1518
        %1520 = vrot.lane.b32.xlu0 %v1507, 107
        %v1521 = vpop.permute.xlu0 %1520
        %1522 = vrot.lane.b32.xlu0 %v1508, 107
        %v1523 = vpop.permute.xlu0 %1522
        %1524 = vrot.lane.b32.xlu0 %v1503, 107
        %v1525 = vpop.permute.xlu0 %1524
        %v1531 = vsel %vm497, %v1525, 0
        %1533 = vmatpush.msra.mxu0 0.0
        %1534 = vmatpush.msra.mxu0 0.0
        %1535 = vmatpush.msra.mxu0 %v1531
        %1536 = vmatpush.msra.mxu0 %v1523
        %1537 = vmatpush.msra.mxu0 %v1521
        %1538 = vmatpush.msra.mxu0 %v1519
        %1539 = vmatpush.msra.mxu0 %v1517
        %1540 = vmatpush.msra.mxu0 %v1515
        %1541 = vmatpush.msra.mxu0 %v1474
        %1542 = vmatpush.msra.mxu0 %v1473
        %1543 = vmatpush.msra.mxu0 %v1472
        %1544 = vmatpush.msra.mxu0 %v1471
        %1545 = vmatpush.msra.mxu0 %v1470
        %1546 = vmatpush.msra.mxu0 %v1469
        %1547 = vmatpush.msra.mxu0 %v1468
        %1548 = vmatpush.msra.mxu0 %v1467
        %1549 = vmatmul.f32.gmra.mxu0 %v564
        %v1550 = vpop.f32.mrf.mxu0
        %v1551 = vadd.f32 0.0, %v1550
        %1552 = vdwg.mxu0
        %v1553 = vmul.f32 %v1551, %v591
        %v1554 = vadd.f32 %v1553, %v597
        %v1555 = vmax.f32 %v1554, 0.0
        %v1556 = vld [vmem:[%s6] sm:$0x1]
        %v1557 = vstv %s1415
        %v1558 = vmul.f32 %v1556, %v1557
        %v1560 = vperm.slane %v1558, 0
        %v1562 = vmul.f32 %v1555, %v1560
        %1564 = vrot.lane.b32.xlu0 %v1562, 11
        %v1565 = vpop.permute.xlu0 %1564
        %v1567 = vsel %vm612, 0.0, %v1565
        %v1568 = vsel %vm614, %v1567, 0.0
        %s1569 = scalar_lea.vmem %s423, 48 [#allocation8]
        %1570 = vst [vmem:[%s1569] sm:$0xff] %v1568
        %s1571 = sadd.s32 %s438, 7
        %p1572 = scmp.lt.s32.totalorder %s1571, 8
        %s1573 = scalar_select %p1572, 1, 0
        %s1574 = scvt.s32.f32 %s1573
        %v1575 = vld [vmem:[%s1259] sm:$0xf]
        %v1576 = vld [vmem:[%s1418] sm:$0xf]
        %v1577 = vld [vmem:[%s382] sm:$0xf]
        %v1578 = vsel %vm445, 0.0, %v1577
        %v1580 = vrot.slane %v1575, 4
        %1581 = vrot.lane.b32.xlu0 %v1580, 127
        %v1582 = vpop.permute.xlu0 %1581
        %1584 = vrot.lane.b32.xlu0 %v1575, 126
        %v1585 = vpop.permute.xlu0 %1584
        %1587 = vrot.lane.b32.xlu0 %v1580, 118
        %v1588 = vpop.permute.xlu0 %1587
        %1590 = vrot.lane.b32.xlu0 %v1575, 117
        %v1591 = vpop.permute.xlu0 %1590
        %1593 = vrot.lane.b32.xlu0 %v1580, 116
        %v1594 = vpop.permute.xlu0 %1593
        %1596 = vrot.lane.b32.xlu0 %v1575, 108
        %v1597 = vpop.permute.xlu0 %1596
        %1599 = vrot.lane.b32.xlu0 %v1580, 107
        %v1600 = vpop.permute.xlu0 %1599
        %1602 = vrot.lane.b32.xlu0 %v1575, 106
        %v1603 = vpop.permute.xlu0 %1602
        %v1606 = vrot.slane %v1576, 4
        %1608 = vrot.lane.b32.xlu0 %v1576, 127
        %v1609 = vpop.permute.xlu0 %1608
        %1611 = vrot.lane.b32.xlu0 %v1606, 126
        %v1612 = vpop.permute.xlu0 %1611
        %1614 = vrot.lane.b32.xlu0 %v1576, 118
        %v1615 = vpop.permute.xlu0 %1614
        %1617 = vrot.lane.b32.xlu0 %v1606, 117
        %v1618 = vpop.permute.xlu0 %1617
        %1620 = vrot.lane.b32.xlu0 %v1576, 116
        %v1621 = vpop.permute.xlu0 %1620
        %1623 = vrot.lane.b32.xlu0 %v1606, 108
        %v1624 = vpop.permute.xlu0 %1623
        %v1626 = vsel %vm497, %v1575, %v1582
        %v1627 = vsel %vm497, %v1585, %v1588
        %v1628 = vsel %vm497, %v1591, %v1594
        %v1629 = vsel %vm497, %v1597, %v1600
        %v1630 = vsel %vm497, %v1603, %v1606
        %v1631 = vsel %vm497, %v1609, %v1612
        %v1632 = vsel %vm497, %v1615, %v1618
        %v1633 = vsel %vm497, %v1621, %v1624
        %1634 = vrot.lane.b32.xlu0 %v1606, 127
        %v1635 = vpop.permute.xlu0 %1634
        %1638 = vrot.lane.b32.xlu0 %v1578, 21
        %v1639 = vpop.permute.xlu0 %1638
        %v1641 = vrot.slane %v1578, 4
        %1642 = vrot.lane.b32.xlu0 %v1641, 20
        %v1643 = vpop.permute.xlu0 %1642
        %1645 = vrot.lane.b32.xlu0 %v1578, 19
        %v1646 = vpop.permute.xlu0 %1645
        %1648 = vrot.lane.b32.xlu0 %v1641, 11
        %v1649 = vpop.permute.xlu0 %1648
        %1651 = vrot.lane.b32.xlu0 %v1578, 10
        %v1652 = vpop.permute.xlu0 %1651
        %1654 = vrot.lane.b32.xlu0 %v1641, 9
        %v1655 = vpop.permute.xlu0 %1654
        %1657 = vrot.lane.b32.xlu0 %v1578, 1
        %v1658 = vpop.permute.xlu0 %1657
        %1661 = vrot.lane.b32.xlu0 %v1578, 127
        %v1662 = vpop.permute.xlu0 %1661
        %v1663 = vsel %vm497, %v1576, %v1635
        %v1664 = vsel %vm497, %v1639, %v1643
        %v1665 = vsel %vm497, %v1646, %v1649
        %v1666 = vsel %vm497, %v1652, %v1655
        %v1667 = vsel %vm497, %v1658, %v1641
        %1673 = vrot.lane.b32.xlu0 %v1663, 107
        %v1674 = vpop.permute.xlu0 %1673
        %1675 = vrot.lane.b32.xlu0 %v1664, 107
        %v1676 = vpop.permute.xlu0 %1675
        %1677 = vrot.lane.b32.xlu0 %v1665, 107
        %v1678 = vpop.permute.xlu0 %1677
        %1679 = vrot.lane.b32.xlu0 %v1666, 107
        %v1680 = vpop.permute.xlu0 %1679
        %1681 = vrot.lane.b32.xlu0 %v1667, 107
        %v1682 = vpop.permute.xlu0 %1681
        %1683 = vrot.lane.b32.xlu0 %v1662, 107
        %v1684 = vpop.permute.xlu0 %1683
        %v1690 = vsel %vm497, %v1684, 0
        %1692 = vmatpush.msra.mxu0 0.0
        %1693 = vmatpush.msra.mxu0 0.0
        %1694 = vmatpush.msra.mxu0 %v1690
        %1695 = vmatpush.msra.mxu0 %v1682
        %1696 = vmatpush.msra.mxu0 %v1680
        %1697 = vmatpush.msra.mxu0 %v1678
        %1698 = vmatpush.msra.mxu0 %v1676
        %1699 = vmatpush.msra.mxu0 %v1674
        %1700 = vmatpush.msra.mxu0 %v1633
        %1701 = vmatpush.msra.mxu0 %v1632
        %1702 = vmatpush.msra.mxu0 %v1631
        %1703 = vmatpush.msra.mxu0 %v1630
        %1704 = vmatpush.msra.mxu0 %v1629
        %1705 = vmatpush.msra.mxu0 %v1628
        %1706 = vmatpush.msra.mxu0 %v1627
        %1707 = vmatpush.msra.mxu0 %v1626
        %1708 = vmatmul.f32.gmra.mxu0 %v564
        %v1709 = vpop.f32.mrf.mxu0
        %v1710 = vadd.f32 0.0, %v1709
        %1711 = vdwg.mxu0
        %v1712 = vmul.f32 %v1710, %v591
        %v1713 = vadd.f32 %v1712, %v597
        %v1714 = vmax.f32 %v1713, 0.0
        %v1715 = vld [vmem:[%s6] sm:$0x1]
        %v1716 = vstv %s1574
        %v1717 = vmul.f32 %v1715, %v1716
        %v1719 = vperm.slane %v1717, 0
        %v1721 = vmul.f32 %v1714, %v1719
        %1723 = vrot.lane.b32.xlu0 %v1721, 11
        %v1724 = vpop.permute.xlu0 %1723
        %v1726 = vsel %vm612, 0.0, %v1724
        %v1727 = vsel %vm614, %v1726, 0.0
        %s1728 = scalar_lea.vmem %s423, 56 [#allocation8]
        %1729 = vst [vmem:[%s1728] sm:$0xff] %v1727
        %s1730 = sand.u32 %s233, 1
        %s1731 = scalar_lea.sflag [#allocation4], %s1730
        %s1732 = sand.u32 %s233, 1
        %s1733 = smul.addr %s1732, 64
        %s1734 = scalar_lea.vmem [#allocation8], %s1733
        // Predicated region
        $region61: #{tpu_custom_call.1} parent=47 // pred_check
          %p1735 = pneg %p243
        $region62: #{tpu_custom_call.1} parent=47 // pred_check_branch
          %1737 = sbr.rel (%p1735) target = $region64
        $region63: #{tpu_custom_call.1} parent=47 // pred_region
          %s1738 = smul.u32 8, %s32
          %1740 = vsyncadd %s1731, 0
          %s1741 = smul.addr %s31, 8
          %s1742 = sadd.s32 %s1738, %s1741
          %s1743 = smul.addr %s1742, 8
          %s1744 = scalar_lea.hbm %s7, %s1743
          %s1745 = sshll.u32 %s1734, 4
          %s1746 = int_to_ptr.vmem [resolvable:$true] %s1745
          %s1747 = sshll.u32 %s1744, 4
          %s1748 = int_to_ptr.hbm [resolvable:$true] %s1747
          %1753 = dma.vmem_to_hbm [thread:$0]  %s1746, 1024, %s1748, %s1731, 128, 128, 8
        $region64: #{tpu_custom_call.1} parent=47 // pred_fallthru
          _
      $region48: #{tpu_custom_call.1} parent=5 // pred_fallthru
        _
      %p1754 = scmp.le.s32.totalorder 2, %s22
      // Predicated region
      $region65: #{tpu_custom_call.1} parent=5 // pred_check
        %p1755 = pneg %p1754
      $region66: #{tpu_custom_call.1} parent=5 // pred_check_branch
        %1757 = sbr.rel (%p1755) target = $region68
      $region67: #{tpu_custom_call.1} parent=5 // pred_region
        %s1758 = ssub.s32 %s22, 2
        // Predicated region
        $region69: #{tpu_custom_call.1} parent=67 // pred_check
          %p1759 = pneg %p249
        $region70: #{tpu_custom_call.1} parent=67 // pred_check_branch
          %1761 = sbr.rel (%p1759) target = $region72
        $region71: #{tpu_custom_call.1} parent=67 // pred_region
          %s1762 = sand.u32 %s234, 1
          %s1763 = scalar_lea.sflag [#allocation4], %s1762
          %s1764 = sand.u32 %s234, 1
          %s1765 = smul.addr %s1764, 64
          %s1766 = scalar_lea.vmem [#allocation8], %s1765
          %1768 = dma.done %s1763, 1024
        $region72: #{tpu_custom_call.1} parent=67 // pred_fallthru
          _
      $region68: #{tpu_custom_call.1} parent=5 // pred_fallthru
        _
    $region6: #{tpu_custom_call.1} parent=1 // loop_footer
      %s26 = sadd.s32 1, %s22
    $region7: #{tpu_custom_call.1} parent=1 // loop_footer_branch
      %21 = sbr.rel target = $region3
    $region8: #{tpu_custom_call.1} parent=1 // loop_exit
      _
    %1769 = vsyncpa [#allocation3], 1
    %s1770 = scalar_lea.sflag [#allocation3], 1
    %1771 = vsyncpa %s1770, 1
    %1772 = vsyncpa [#allocation6], 1
    %s1773 = scalar_lea.sflag [#allocation6], 1
    %1774 = vsyncpa %s1773, 1
    %1775 = vsyncpa [#allocation4], 1
    %s1776 = scalar_lea.sflag [#allocation4], 1
    %1777 = vsyncpa %s1776, 1

</llo_original>
